<compile_context>
chip_gen: v7x
topology: tpu7x:2x2x1
jax: 0.10.0
libtpu: 0.0.40
codegen_flags: <defaults>
</compile_context>

<pallas_src>
from functools import partial

import jax
import jax.numpy as jnp
import numpy as np
from jax import lax
from jax.experimental import pallas as pl
from jax.experimental.pallas import tpu as pltpu

EPS = 1e-5
LANE = 128


def _round_up(x, m):
    return (x + m - 1) // m * m


def _pick_row_tile(h2):
    """Largest divisor of h2 that is <= min(64, h2//2) (>=2 row blocks)."""
    cap = min(64, max(h2 // 2, 1))
    for t in range(cap, 0, -1):
        if h2 % t == 0:
            return t
    return h2


def _pick_ch_tile(l):
    """Output-channel tile: 256 lanes when possible (v6e/v7x MXU), else 128."""
    return 256 if l % 256 == 0 else 128


def _vmem_limit_bytes():
    """~3/4 of physical VMEM, capped at 100 MiB (=> ~48 MiB v7x, ~96 MiB v5e/v6e)."""
    try:
        cap = getattr(pltpu.get_tpu_info(), "vmem_capacity_bytes", None)
        if cap is None:
            return 48 * 1024 * 1024
        return int(min(int(cap) * 3 // 4, 100 * 1024 * 1024))
    except Exception:
        return 48 * 1024 * 1024


def _pack_w(w, li, lo):
    """(3,3,Cin,Cout) HWIO -> (3, 3*li, lo): K index = kx*li + cin (zero padded)."""
    kh, kw, ci, co = w.shape
    wf = jnp.zeros((kh, kw, li, lo), jnp.float32)
    wf = wf.at[:, :, :ci, :co].set(w.astype(jnp.float32))
    return wf.reshape(kh, kw * li, lo)


def _pack_vec(v, l):
    return jnp.pad(v.astype(jnp.float32), (0, l - v.shape[0]))


def _bn_coeffs(st, gamma, beta, count):
    """Finalize global train-mode BN from per-block (sum, sum^2). st: (B,2,L)."""
    tot = jnp.sum(st, axis=0)                              # (2, L)
    mean = tot[0] / count
    var = jnp.maximum(tot[1] / count - mean * mean, 0.0)   # biased, as PyTorch train BN
    scale = gamma * lax.rsqrt(var + EPS)
    shift = beta - mean * scale
    return scale.reshape(1, -1), shift.reshape(1, -1)


def _gather_halos(a, tb, n_rb, affine=None, out_dtype=None):
    """Rows (r*tb-1, r*tb+tb) per row-block, zeroed at the image boundary.

    a: (N, H2, W2, L).  If affine=(scale, shift), apply BN+ReLU to the halo
    rows (boundary rows are zeroed AFTER the affine, matching the conv's
    zero padding which happens after BN/ReLU).  Output: (N*n_rb, 2, W2, L).
    """
    n, h2, w2, l = a.shape
    r = jnp.arange(n_rb)
    ti = jnp.maximum(r * tb - 1, 0)
    bi = jnp.minimum(r * tb + tb, h2 - 1)
    top = a[:, ti].astype(jnp.float32)                     # (N, n_rb, W2, L)
    bot = a[:, bi].astype(jnp.float32)
    if affine is not None:
        sc, sh = affine
        top = jnp.maximum(top * sc[0] + sh[0], 0.0)
        bot = jnp.maximum(bot * sc[0] + sh[0], 0.0)
    top = top * (r > 0).astype(jnp.float32)[None, :, None, None]
    bot = bot * (r < n_rb - 1).astype(jnp.float32)[None, :, None, None]
    h = jnp.stack([top, bot], axis=2).reshape(n * n_rb, 2, w2, l)
    return h.astype(out_dtype if out_dtype is not None else a.dtype)


def _make_conv_kernel(apply_bn, cdt):
    """3x3 conv (+ optional input BN+ReLU) + bias + per-block BN statistics.

    Refs: center (1,TB,W2,Lin), halo (1,2,W2,Lin) [already processed],
    [scale (1,Lin), shift (1,Lin)], weights (3,3*Lin,TLout), bias (1,TLout),
    outputs y (1,TB,W2,TLout), stats (1,2,TLout), scratch slab ((TB+2)*W2,3*Lin).
    Grid = (n, row_block, out_channel_block); the slab is built once per
    (n, row_block) at out-channel block 0 and reused for the rest.
    """

    def kernel(*refs):
        if apply_bn:
            xc_ref, xh_ref, sc_ref, sh_ref, w_ref, b_ref, y_ref, st_ref, slab_ref = refs
        else:
            xc_ref, xh_ref, w_ref, b_ref, y_ref, st_ref, slab_ref = refs
            sc_ref = sh_ref = None
        tb, w2, lin = xc_ref.shape[1], xc_ref.shape[2], xc_ref.shape[3]
        hw = tb * w2

        @pl.when(pl.program_id(2) == 0)
        def _build_slab():
            xc = xc_ref[0]                                           # (TB, W2, Lin)
            if apply_bn:
                xc = jnp.maximum(
                    xc.astype(jnp.float32) * sc_ref[...] + sh_ref[...], 0.0
                ).astype(cdt)
            else:
                xc = xc.astype(cdt)
            halo = xh_ref[0]                                         # (2, W2, Lin)
            p = jnp.concatenate([halo[0:1], xc, halo[1:2]], axis=0)  # (TB+2, W2, Lin)
            z = jnp.zeros((tb + 2, 1, lin), cdt)
            s0 = jnp.concatenate([z, p[:, : w2 - 1, :]], axis=1)     # kx=0 tap (w-1)
            s2 = jnp.concatenate([p[:, 1:, :], z], axis=1)           # kx=2 tap (w+1)
            slab_ref[...] = jnp.concatenate([s0, p, s2], axis=-1).reshape(
                (tb + 2) * w2, 3 * lin)

        # 3 MXU matmuls, K = 3*Lin; ky row shifts are free row-range picks.
        acc = None
        for ky in range(3):
            lhs = slab_ref[ky * w2: ky * w2 + hw, :]
            t = jnp.dot(lhs, w_ref[ky], preferred_element_type=jnp.float32)
            acc = t if acc is None else acc + t
        y = acc + b_ref[...]                                         # f32 (HW, TLout)

        # fused one-pass per-channel statistics for global train-mode BN
        st_ref[0, 0:1, :] = jnp.sum(y, axis=0, keepdims=True)
        st_ref[0, 1:2, :] = jnp.sum(y * y, axis=0, keepdims=True)
        y_ref[0] = y.reshape(tb, w2, y_ref.shape[-1]).astype(y_ref.dtype)

    return kernel


@partial(jax.jit, static_argnames=("compute_dtype",))
def down_pallas(x_nchw, params, compute_dtype=jnp.bfloat16):
    """Forward of Down(in_channels, out_channels). x_nchw: (N, Cin, H, W) f32."""
    w1, b1, g1, be1, w2, b2, g2, be2 = params
    n, cin, h, w = x_nchw.shape
    h2, w2_ = h // 2, w // 2
    cmid, cout = w1.shape[-1], w2.shape[-1]
    li = _round_up(cin, LANE)
    lm = _round_up(cmid, LANE)
    lo = _round_up(cout, LANE)
    tlm, tlo = _pick_ch_tile(lm), _pick_ch_tile(lo)
    tb = _pick_row_tile(h2)
    n_rb = h2 // tb
    cdt = compute_dtype
    cnt = float(n * h2 * w2_)
    itemsize = np.dtype(cdt).itemsize

    cparams = pltpu.CompilerParams(
        dimension_semantics=("parallel", "parallel", "arbitrary"),
        vmem_limit_bytes=_vmem_limit_bytes())

    # ---- XLA prologue: NHWC, single 2x2 max-pool pass, lane pad + cast ----
    x = jnp.transpose(x_nchw, (0, 2, 3, 1)).astype(jnp.float32)
    xp = lax.reduce_window(x, -jnp.inf, lax.max, (1, 2, 2, 1),
                           (1, 2, 2, 1), 'VALID')                  # (N,H2,W2,Cin)
    xp = jnp.pad(xp, ((0, 0), (0, 0), (0, 0), (0, li - cin))).astype(cdt)

    # ---- packed parameters (lane padded, kx folded into the K dim) ----
    w1k = _pack_w(w1, li, lm).astype(cdt)
    w2k = _pack_w(w2, lm, lo).astype(cdt)
    b1r = _pack_vec(b1, lm).reshape(1, lm)
    b2r = _pack_vec(b2, lo).reshape(1, lo)
    g1p, be1p = _pack_vec(g1, lm), _pack_vec(be1, lm)
    g2p, be2p = _pack_vec(g2, lo), _pack_vec(be2, lo)

    def conv_call(src, halos, scale_shift, w_packed, bias, lout, tlout):
        lin = src.shape[-1]
        n_co = lout // tlout
        apply_bn = scale_shift is not None
        kern = _make_conv_kernel(apply_bn, cdt)

        in_specs = [
            pl.BlockSpec((1, tb, w2_, lin), lambda gn, gr, gc: (gn, gr, 0, 0)),
            pl.BlockSpec((1, 2, w2_, lin),
                         lambda gn, gr, gc: (gn * n_rb + gr, 0, 0, 0)),
        ]
        ops = [src, halos]
        if apply_bn:
            in_specs += [pl.BlockSpec((1, lin), lambda gn, gr, gc: (0, 0)),
                         pl.BlockSpec((1, lin), lambda gn, gr, gc: (0, 0))]
            ops += [scale_shift[0], scale_shift[1]]
        in_specs += [pl.BlockSpec((3, 3 * lin, tlout), lambda gn, gr, gc: (0, 0, gc)),
                     pl.BlockSpec((1, tlout), lambda gn, gr, gc: (0, gc))]
        ops += [w_packed, bias]

        flops = 2 * n * h2 * w2_ * 9 * lin * lout
        bytes_acc = int(sum(int(a.size) * a.dtype.itemsize for a in ops)
                        + n * h2 * w2_ * lout * itemsize
                        + n * n_rb * 2 * lout * 4)

        return pl.pallas_call(
            kern,
            out_shape=(jax.ShapeDtypeStruct((n, h2, w2_, lout), cdt),
                       jax.ShapeDtypeStruct((n * n_rb, 2, lout), jnp.float32)),
            grid=(n, n_rb, n_co),
            in_specs=in_specs,
            out_specs=(pl.BlockSpec((1, tb, w2_, tlout),
                                    lambda gn, gr, gc: (gn, gr, 0, gc)),
                       pl.BlockSpec((1, 2, tlout),
                                    lambda gn, gr, gc: (gn * n_rb + gr, 0, gc))),
            scratch_shapes=[pltpu.VMEM(((tb + 2) * w2_, 3 * lin), cdt)],
            compiler_params=cparams,
            cost_estimate=pl.CostEstimate(flops=flops, transcendentals=0,
                                          bytes_accessed=bytes_acc),
        )(*ops)

    # ---- kernel A: conv1 + bias, per-block BN1 partial statistics ----
    halo_a = _gather_halos(xp, tb, n_rb, affine=None, out_dtype=cdt)
    y1, st1 = conv_call(xp, halo_a, None, w1k, b1r, lm, tlm)

    # ---- glue: finalize global BN1; build BN+ReLU'd halo rows for conv2 ----
    sc1, sh1 = _bn_coeffs(st1, g1p, be1p, cnt)
    halo_b = _gather_halos(y1, tb, n_rb, affine=(sc1, sh1), out_dtype=cdt)

    # ---- kernel B: BN1+ReLU + conv2 + bias, per-block BN2 partial stats ----
    y2, st2 = conv_call(y1, halo_b, (sc1, sh1), w2k, b2r, lo, tlo)

    # ---- XLA epilogue (fused): BN2 affine + ReLU + channel crop + NCHW ----
    sc2, sh2 = _bn_coeffs(st2, g2p, be2p, cnt)
    out = jnp.maximum(y2.astype(jnp.float32) * sc2[0] + sh2[0], 0.0)[..., :cout]
    return jnp.transpose(out, (0, 3, 1, 2))


def down_reference(x_nchw, params):
    """Pure-JAX reference matching the PyTorch Down forward (train-mode BN)."""
    w1, b1, g1, be1, w2, b2, g2, be2 = params
    xp = lax.reduce_window(x_nchw, -jnp.inf, lax.max,
                           (1, 1, 2, 2), (1, 1, 2, 2), 'VALID')

    def conv_bn_relu(h, w, b, g, be):
        c = lax.conv_general_dilated(
            h, w, (1, 1), ((1, 1), (1, 1)),
            dimension_numbers=('NCHW', 'HWIO', 'NCHW'),
            precision=lax.Precision.HIGHEST)
        c = c + b[None, :, None, None]
        mean = jnp.mean(c, axis=(0, 2, 3), keepdims=True)
        var = jnp.var(c, axis=(0, 2, 3), keepdims=True)   # biased, PyTorch train BN
        y = (c - mean) * lax.rsqrt(var + EPS)
        y = y * g[None, :, None, None] + be[None, :, None, None]
        return jnp.maximum(y, 0.0)

    h = conv_bn_relu(xp, w1, b1, g1, be1)
    return conv_bn_relu(h, w2, b2, g2, be2)


if __name__ == "__main__":
    key = jax.random.PRNGKey(0)
    N, Cin, H, W = 2, 4, 16, 16
    Cout = 8
    Cmid = Cout   # DoubleConv default: mid_channels = out_channels

    ks = jax.random.split(key, 9)
    x = jax.random.normal(ks[0], (N, Cin, H, W), jnp.float32)
    w1 = 0.3 * jax.random.normal(ks[1], (3, 3, Cin, Cmid), jnp.float32)
    b1 = 0.1 * jax.random.normal(ks[2], (Cmid,), jnp.float32)
    g1 = 1.0 + 0.1 * jax.random.normal(ks[3], (Cmid,), jnp.float32)
    be1 = 0.1 * jax.random.normal(ks[4], (Cmid,), jnp.float32)
    w2 = 0.3 * jax.random.normal(ks[5], (3, 3, Cmid, Cout), jnp.float32)
    b2 = 0.1 * jax.random.normal(ks[6], (Cout,), jnp.float32)
    g2 = 1.0 + 0.1 * jax.random.normal(ks[7], (Cout,), jnp.float32)
    be2 = 0.1 * jax.random.normal(ks[8], (Cout,), jnp.float32)
    params = (w1, b1, g1, be1, w2, b2, g2, be2)

    ref = jax.block_until_ready(down_reference(x, params))

    # bf16 operands / f32 accumulation (production path): loose tolerance.
    out_bf16 = jax.block_until_ready(down_pallas(x, params))
    assert out_bf16.shape == (N, Cout, H // 2, W // 2), out_bf16.shape
    np.testing.assert_allclose(np.asarray(out_bf16), np.asarray(ref),
                               rtol=5e-2, atol=5e-2)

    # f32 path: tight parity with the HIGHEST-precision XLA reference.
    out_f32 = jax.block_until_ready(down_pallas(x, params,
                                                compute_dtype=jnp.float32))
    np.testing.assert_allclose(np.asarray(out_f32), np.asarray(ref),
                               rtol=2e-3, atol=2e-3)

    print("KERNEL_OK")
</pallas_src>

<mosaic_0001>
module attributes {stable_mosaic.version = 11 : i64} {
  func.func @kernel(%arg0: i32, %arg1: i32, %arg2: i32, %arg3: memref<1x4x8x128xbf16, #tpu.memory_space<vmem>>, %arg4: memref<1x2x8x128xbf16, #tpu.memory_space<vmem>>, %arg5: memref<3x384x128xbf16, #tpu.memory_space<vmem>>, %arg6: memref<1x128xf32, #tpu.memory_space<vmem>>, %arg7: memref<1x4x8x128xbf16, #tpu.memory_space<vmem>>, %arg8: memref<1x2x128xf32, #tpu.memory_space<vmem>>, %arg9: memref<48x384xbf16, #tpu.memory_space<vmem>>) attributes {dimension_semantics = [#tpu.dimension_semantics<parallel>, #tpu.dimension_semantics<parallel>, #tpu.dimension_semantics<arbitrary>], iteration_bounds = array<i64: 2, 2, 1>, scalar_prefetch = 0 : i64, scratch_operands = 1 : i64, tpu.core_type = #tpu.core_type<tc>, window_params = [{transform_indices = @transform_0, window_bounds = array<i64: 1, 4, 8, 128>}, {transform_indices = @transform_1, window_bounds = array<i64: 1, 2, 8, 128>}, {transform_indices = @transform_2, window_bounds = array<i64: 3, 384, 128>}, {transform_indices = @transform_3, window_bounds = array<i64: 1, 128>}, {transform_indices = @transform_4, window_bounds = array<i64: 1, 4, 8, 128>}, {transform_indices = @transform_5, window_bounds = array<i64: 1, 2, 128>}]} {
    %c0_i32 = arith.constant 0 : i32
    %0 = arith.cmpi eq, %arg2, %c0_i32 : i32
    %1 = arith.extui %0 : i1 to i32
    %c0_i32_0 = arith.constant 0 : i32
    %2 = arith.cmpi ne, %1, %c0_i32_0 : i32
    scf.if %2 {
      %c0_27 = arith.constant 0 : index
      %c0_28 = arith.constant 0 : index
      %c0_29 = arith.constant 0 : index
      %c0_30 = arith.constant 0 : index
      %36 = vector.load %arg3[%c0_27, %c0_28, %c0_29, %c0_30] : memref<1x4x8x128xbf16, #tpu.memory_space<vmem>>, vector<1x4x8x128xbf16>
      %37 = vector.shape_cast %36 : vector<1x4x8x128xbf16> to vector<4x8x128xbf16>
      %c0_31 = arith.constant 0 : index
      %c0_32 = arith.constant 0 : index
      %c0_33 = arith.constant 0 : index
      %c0_34 = arith.constant 0 : index
      %38 = vector.load %arg4[%c0_31, %c0_32, %c0_33, %c0_34] : memref<1x2x8x128xbf16, #tpu.memory_space<vmem>>, vector<1x2x8x128xbf16>
      %39 = vector.shape_cast %38 : vector<1x2x8x128xbf16> to vector<2x8x128xbf16>
      %40 = vector.extract_strided_slice %39 {offsets = [0, 0, 0], sizes = [1, 8, 128], strides = [1, 1, 1]} : vector<2x8x128xbf16> to vector<1x8x128xbf16>
      %41 = vector.extract_strided_slice %39 {offsets = [1, 0, 0], sizes = [1, 8, 128], strides = [1, 1, 1]} : vector<2x8x128xbf16> to vector<1x8x128xbf16>
      %42 = tpu.concatenate %40, %37, %41 in 0 : vector<1x8x128xbf16>, vector<4x8x128xbf16>, vector<1x8x128xbf16> -> vector<6x8x128xbf16>
      %cst_35 = arith.constant 0.000000e+00 : bf16
      %43 = vector.broadcast %cst_35 : bf16 to vector<6x1x128xbf16>
      %44 = vector.extract_strided_slice %42 {offsets = [0, 0, 0], sizes = [6, 7, 128], strides = [1, 1, 1]} : vector<6x8x128xbf16> to vector<6x7x128xbf16>
      %45 = tpu.concatenate %43, %44 in 1 : vector<6x1x128xbf16>, vector<6x7x128xbf16> -> vector<6x8x128xbf16>
      %46 = vector.extract_strided_slice %42 {offsets = [0, 1, 0], sizes = [6, 7, 128], strides = [1, 1, 1]} : vector<6x8x128xbf16> to vector<6x7x128xbf16>
      %47 = tpu.concatenate %46, %43 in 1 : vector<6x7x128xbf16>, vector<6x1x128xbf16> -> vector<6x8x128xbf16>
      %48 = tpu.concatenate %45, %42, %47 in 2 : vector<6x8x128xbf16>, vector<6x8x128xbf16>, vector<6x8x128xbf16> -> vector<6x8x384xbf16>
      %49 = vector.shape_cast %48 : vector<6x8x384xbf16> to vector<48x384xbf16>
      %c0_36 = arith.constant 0 : index
      %c0_37 = arith.constant 0 : index
      %50 = vector.load %arg9[%c0_36, %c0_37] : memref<48x384xbf16, #tpu.memory_space<vmem>>, vector<48x384xbf16>
      tpu.vector_store %arg9[%c0_36, %c0_37], %49 {strides = array<i32>} : memref<48x384xbf16, #tpu.memory_space<vmem>>, vector<48x384xbf16>,
    } else {
    }
    %c0 = arith.constant 0 : index
    %c0_1 = arith.constant 0 : index
    %3 = vector.load %arg9[%c0, %c0_1] : memref<48x384xbf16, #tpu.memory_space<vmem>>, vector<32x384xbf16>
    %c0_2 = arith.constant 0 : index
    %c0_3 = arith.constant 0 : index
    %c0_4 = arith.constant 0 : index
    %4 = vector.load %arg5[%c0_2, %c0_3, %c0_4] : memref<3x384x128xbf16, #tpu.memory_space<vmem>>, vector<1x384x128xbf16>
    %5 = vector.shape_cast %4 : vector<1x384x128xbf16> to vector<384x128xbf16>
    %cst = arith.constant dense<0.000000e+00> : vector<32x128xf32>
    %6 = tpu.matmul %3, %5, %cst {dimension_numbers = #tpu.dot_dimension_numbers<[1], [0], [0], [1], [0, 0, 1, 1], [], []>} : vector<32x384xbf16>, vector<384x128xbf16>, vector<32x128xf32> -> vector<32x128xf32>
    %c8 = arith.constant 8 : index
    %c0_5 = arith.constant 0 : index
    %7 = vector.load %arg9[%c8, %c0_5] : memref<48x384xbf16, #tpu.memory_space<vmem>>, vector<32x384xbf16>
    %c1 = arith.constant 1 : index
    %c0_6 = arith.constant 0 : index
    %c0_7 = arith.constant 0 : index
    %8 = vector.load %arg5[%c1, %c0_6, %c0_7] : memref<3x384x128xbf16, #tpu.memory_space<vmem>>, vector<1x384x128xbf16>
    %9 = vector.shape_cast %8 : vector<1x384x128xbf16> to vector<384x128xbf16>
    %cst_8 = arith.constant dense<0.000000e+00> : vector<32x128xf32>
    %10 = tpu.matmul %7, %9, %cst_8 {dimension_numbers = #tpu.dot_dimension_numbers<[1], [0], [0], [1], [0, 0, 1, 1], [], []>} : vector<32x384xbf16>, vector<384x128xbf16>, vector<32x128xf32> -> vector<32x128xf32>
    %11 = arith.addf %6, %10 : vector<32x128xf32>
    %c16 = arith.constant 16 : index
    %c0_9 = arith.constant 0 : index
    %12 = vector.load %arg9[%c16, %c0_9] : memref<48x384xbf16, #tpu.memory_space<vmem>>, vector<32x384xbf16>
    %c2 = arith.constant 2 : index
    %c0_10 = arith.constant 0 : index
    %c0_11 = arith.constant 0 : index
    %13 = vector.load %arg5[%c2, %c0_10, %c0_11] : memref<3x384x128xbf16, #tpu.memory_space<vmem>>, vector<1x384x128xbf16>
    %14 = vector.shape_cast %13 : vector<1x384x128xbf16> to vector<384x128xbf16>
    %cst_12 = arith.constant dense<0.000000e+00> : vector<32x128xf32>
    %15 = tpu.matmul %12, %14, %cst_12 {dimension_numbers = #tpu.dot_dimension_numbers<[1], [0], [0], [1], [0, 0, 1, 1], [], []>} : vector<32x384xbf16>, vector<384x128xbf16>, vector<32x128xf32> -> vector<32x128xf32>
    %16 = arith.addf %11, %15 : vector<32x128xf32>
    %c0_13 = arith.constant 0 : index
    %c0_14 = arith.constant 0 : index
    %17 = vector.load %arg6[%c0_13, %c0_14] : memref<1x128xf32, #tpu.memory_space<vmem>>, vector<1x128xf32>
    %18 = vector.broadcast %17 : vector<1x128xf32> to vector<32x128xf32>
    %19 = arith.addf %16, %18 : vector<32x128xf32>
    %cst_15 = arith.constant dense<0.000000e+00> : vector<128xf32>
    %20 = vector.multi_reduction <add>, %19, %cst_15 [0] : vector<32x128xf32> to vector<128xf32>
    %21 = vector.shape_cast %20 : vector<128xf32> to vector<1x128xf32>
    %c0_16 = arith.constant 0 : index
    %c0_17 = arith.constant 0 : index
    %c0_18 = arith.constant 0 : index
    %22 = vector.load %arg8[%c0_16, %c0_17, %c0_18] : memref<1x2x128xf32, #tpu.memory_space<vmem>>, vector<1x1x128xf32>
    %23 = vector.shape_cast %22 : vector<1x1x128xf32> to vector<1x128xf32>
    %24 = vector.shape_cast %21 : vector<1x128xf32> to vector<1x1x128xf32>
    tpu.vector_store %arg8[%c0_16, %c0_17, %c0_18], %24 {strides = array<i32>} : memref<1x2x128xf32, #tpu.memory_space<vmem>>, vector<1x1x128xf32>,
    %25 = arith.mulf %19, %19 : vector<32x128xf32>
    %cst_19 = arith.constant dense<0.000000e+00> : vector<128xf32>
    %26 = vector.multi_reduction <add>, %25, %cst_19 [0] : vector<32x128xf32> to vector<128xf32>
    %27 = vector.shape_cast %26 : vector<128xf32> to vector<1x128xf32>
    %c0_20 = arith.constant 0 : index
    %c1_21 = arith.constant 1 : index
    %c0_22 = arith.constant 0 : index
    %28 = vector.load %arg8[%c0_20, %c1_21, %c0_22] : memref<1x2x128xf32, #tpu.memory_space<vmem>>, vector<1x1x128xf32>
    %29 = vector.shape_cast %28 : vector<1x1x128xf32> to vector<1x128xf32>
    %30 = vector.shape_cast %27 : vector<1x128xf32> to vector<1x1x128xf32>
    tpu.vector_store %arg8[%c0_20, %c1_21, %c0_22], %30 {strides = array<i32>} : memref<1x2x128xf32, #tpu.memory_space<vmem>>, vector<1x1x128xf32>,
    %31 = vector.shape_cast %19 : vector<32x128xf32> to vector<4x8x128xf32>
    %32 = arith.truncf %31 : vector<4x8x128xf32> to vector<4x8x128xbf16>
    %c0_23 = arith.constant 0 : index
    %c0_24 = arith.constant 0 : index
    %c0_25 = arith.constant 0 : index
    %c0_26 = arith.constant 0 : index
    %33 = vector.load %arg7[%c0_23, %c0_24, %c0_25, %c0_26] : memref<1x4x8x128xbf16, #tpu.memory_space<vmem>>, vector<1x4x8x128xbf16>
    %34 = vector.shape_cast %33 : vector<1x4x8x128xbf16> to vector<4x8x128xbf16>
    %35 = vector.shape_cast %32 : vector<4x8x128xbf16> to vector<1x4x8x128xbf16>
    tpu.vector_store %arg7[%c0_23, %c0_24, %c0_25, %c0_26], %35 {strides = array<i32>} : memref<1x4x8x128xbf16, #tpu.memory_space<vmem>>, vector<1x4x8x128xbf16>,
    return
  }
  func.func @transform_0(%arg0: i32, %arg1: i32, %arg2: i32) -> (i32, i32, i32, i32) {
    %c0_i32 = arith.constant 0 : i32
    %c0_i32_0 = arith.constant 0 : i32
    %c0_i32_1 = arith.constant 0 : i32
    return %arg0, %arg1, %c0_i32, %c0_i32_0 : i32, i32, i32, i32
  }
  func.func @transform_1(%arg0: i32, %arg1: i32, %arg2: i32) -> (i32, i32, i32, i32) {
    %c2_i32 = arith.constant 2 : i32
    %0 = arith.muli %arg0, %c2_i32 : i32
    %1 = arith.addi %0, %arg1 : i32
    %c0_i32 = arith.constant 0 : i32
    %c0_i32_0 = arith.constant 0 : i32
    %c0_i32_1 = arith.constant 0 : i32
    %c0_i32_2 = arith.constant 0 : i32
    return %1, %c0_i32, %c0_i32_0, %c0_i32_1 : i32, i32, i32, i32
  }
  func.func @transform_2(%arg0: i32, %arg1: i32, %arg2: i32) -> (i32, i32, i32) {
    %c0_i32 = arith.constant 0 : i32
    %c0_i32_0 = arith.constant 0 : i32
    %c0_i32_1 = arith.constant 0 : i32
    return %c0_i32, %c0_i32_0, %arg2 : i32, i32, i32
  }
  func.func @transform_3(%arg0: i32, %arg1: i32, %arg2: i32) -> (i32, i32) {
    %c0_i32 = arith.constant 0 : i32
    %c0_i32_0 = arith.constant 0 : i32
    return %c0_i32, %arg2 : i32, i32
  }
  func.func @transform_4(%arg0: i32, %arg1: i32, %arg2: i32) -> (i32, i32, i32, i32) {
    %c0_i32 = arith.constant 0 : i32
    %c0_i32_0 = arith.constant 0 : i32
    return %arg0, %arg1, %c0_i32, %arg2 : i32, i32, i32, i32
  }
  func.func @transform_5(%arg0: i32, %arg1: i32, %arg2: i32) -> (i32, i32, i32) {
    %c2_i32 = arith.constant 2 : i32
    %0 = arith.muli %arg0, %c2_i32 : i32
    %1 = arith.addi %0, %arg1 : i32
    %c0_i32 = arith.constant 0 : i32
    %c0_i32_0 = arith.constant 0 : i32
    return %1, %c0_i32, %arg2 : i32, i32, i32
  }
}

module attributes {stable_mosaic.version = 11 : i64} {
  func.func @kernel(%arg0: i32, %arg1: i32, %arg2: i32, %arg3: memref<1x4x8x128xbf16, #tpu.memory_space<vmem>>, %arg4: memref<1x2x8x128xbf16, #tpu.memory_space<vmem>>, %arg5: memref<1x128xf32, #tpu.memory_space<vmem>>, %arg6: memref<1x128xf32, #tpu.memory_space<vmem>>, %arg7: memref<3x384x128xbf16, #tpu.memory_space<vmem>>, %arg8: memref<1x128xf32, #tpu.memory_space<vmem>>, %arg9: memref<1x4x8x128xbf16, #tpu.memory_space<vmem>>, %arg10: memref<1x2x128xf32, #tpu.memory_space<vmem>>, %arg11: memref<48x384xbf16, #tpu.memory_space<vmem>>) attributes {dimension_semantics = [#tpu.dimension_semantics<parallel>, #tpu.dimension_semantics<parallel>, #tpu.dimension_semantics<arbitrary>], iteration_bounds = array<i64: 2, 2, 1>, scalar_prefetch = 0 : i64, scratch_operands = 1 : i64, tpu.core_type = #tpu.core_type<tc>, window_params = [{transform_indices = @transform_0, window_bounds = array<i64: 1, 4, 8, 128>}, {transform_indices = @transform_1, window_bounds = array<i64: 1, 2, 8, 128>}, {pipeline_mode = #tpu.pipeline_mode<synchronous>, transform_indices = @transform_2, window_bounds = array<i64: 1, 128>}, {pipeline_mode = #tpu.pipeline_mode<synchronous>, transform_indices = @transform_3, window_bounds = array<i64: 1, 128>}, {transform_indices = @transform_4, window_bounds = array<i64: 3, 384, 128>}, {transform_indices = @transform_5, window_bounds = array<i64: 1, 128>}, {transform_indices = @transform_6, window_bounds = array<i64: 1, 4, 8, 128>}, {transform_indices = @transform_7, window_bounds = array<i64: 1, 2, 128>}]} {
    %c0_i32 = arith.constant 0 : i32
    %0 = arith.cmpi eq, %arg2, %c0_i32 : i32
    %1 = arith.extui %0 : i1 to i32
    %c0_i32_0 = arith.constant 0 : i32
    %2 = arith.cmpi ne, %1, %c0_i32_0 : i32
    scf.if %2 {
      %c0_27 = arith.constant 0 : index
      %c0_28 = arith.constant 0 : index
      %c0_29 = arith.constant 0 : index
      %c0_30 = arith.constant 0 : index
      %36 = vector.load %arg3[%c0_27, %c0_28, %c0_29, %c0_30] : memref<1x4x8x128xbf16, #tpu.memory_space<vmem>>, vector<1x4x8x128xbf16>
      %37 = vector.shape_cast %36 : vector<1x4x8x128xbf16> to vector<4x8x128xbf16>
      %38 = arith.extf %37 : vector<4x8x128xbf16> to vector<4x8x128xf32>
      %c0_31 = arith.constant 0 : index
      %c0_32 = arith.constant 0 : index
      %39 = vector.load %arg5[%c0_31, %c0_32] : memref<1x128xf32, #tpu.memory_space<vmem>>, vector<1x128xf32>
      %40 = vector.shape_cast %39 : vector<1x128xf32> to vector<1x1x128xf32>
      %41 = vector.broadcast %40 : vector<1x1x128xf32> to vector<4x8x128xf32>
      %42 = arith.mulf %38, %41 : vector<4x8x128xf32>
      %c0_33 = arith.constant 0 : index
      %c0_34 = arith.constant 0 : index
      %43 = vector.load %arg6[%c0_33, %c0_34] : memref<1x128xf32, #tpu.memory_space<vmem>>, vector<1x128xf32>
      %44 = vector.shape_cast %43 : vector<1x128xf32> to vector<1x1x128xf32>
      %45 = vector.broadcast %44 : vector<1x1x128xf32> to vector<4x8x128xf32>
      %46 = arith.addf %42, %45 : vector<4x8x128xf32>
      %cst_35 = arith.constant 0.000000e+00 : f32
      %47 = vector.broadcast %cst_35 : f32 to vector<4x8x128xf32>
      %48 = arith.maximumf %46, %47 : vector<4x8x128xf32>
      %49 = arith.truncf %48 : vector<4x8x128xf32> to vector<4x8x128xbf16>
      %c0_36 = arith.constant 0 : index
      %c0_37 = arith.constant 0 : index
      %c0_38 = arith.constant 0 : index
      %c0_39 = arith.constant 0 : index
      %50 = vector.load %arg4[%c0_36, %c0_37, %c0_38, %c0_39] : memref<1x2x8x128xbf16, #tpu.memory_space<vmem>>, vector<1x2x8x128xbf16>
      %51 = vector.shape_cast %50 : vector<1x2x8x128xbf16> to vector<2x8x128xbf16>
      %52 = vector.extract_strided_slice %51 {offsets = [0, 0, 0], sizes = [1, 8, 128], strides = [1, 1, 1]} : vector<2x8x128xbf16> to vector<1x8x128xbf16>
      %53 = vector.extract_strided_slice %51 {offsets = [1, 0, 0], sizes = [1, 8, 128], strides = [1, 1, 1]} : vector<2x8x128xbf16> to vector<1x8x128xbf16>
      %54 = tpu.concatenate %52, %49, %53 in 0 : vector<1x8x128xbf16>, vector<4x8x128xbf16>, vector<1x8x128xbf16> -> vector<6x8x128xbf16>
      %cst_40 = arith.constant 0.000000e+00 : bf16
      %55 = vector.broadcast %cst_40 : bf16 to vector<6x1x128xbf16>
      %56 = vector.extract_strided_slice %54 {offsets = [0, 0, 0], sizes = [6, 7, 128], strides = [1, 1, 1]} : vector<6x8x128xbf16> to vector<6x7x128xbf16>
      %57 = tpu.concatenate %55, %56 in 1 : vector<6x1x128xbf16>, vector<6x7x128xbf16> -> vector<6x8x128xbf16>
      %58 = vector.extract_strided_slice %54 {offsets = [0, 1, 0], sizes = [6, 7, 128], strides = [1, 1, 1]} : vector<6x8x128xbf16> to vector<6x7x128xbf16>
      %59 = tpu.concatenate %58, %55 in 1 : vector<6x7x128xbf16>, vector<6x1x128xbf16> -> vector<6x8x128xbf16>
      %60 = tpu.concatenate %57, %54, %59 in 2 : vector<6x8x128xbf16>, vector<6x8x128xbf16>, vector<6x8x128xbf16> -> vector<6x8x384xbf16>
      %61 = vector.shape_cast %60 : vector<6x8x384xbf16> to vector<48x384xbf16>
      %c0_41 = arith.constant 0 : index
      %c0_42 = arith.constant 0 : index
      %62 = vector.load %arg11[%c0_41, %c0_42] : memref<48x384xbf16, #tpu.memory_space<vmem>>, vector<48x384xbf16>
      tpu.vector_store %arg11[%c0_41, %c0_42], %61 {strides = array<i32>} : memref<48x384xbf16, #tpu.memory_space<vmem>>, vector<48x384xbf16>,
    } else {
    }
    %c0 = arith.constant 0 : index
    %c0_1 = arith.constant 0 : index
    %3 = vector.load %arg11[%c0, %c0_1] : memref<48x384xbf16, #tpu.memory_space<vmem>>, vector<32x384xbf16>
    %c0_2 = arith.constant 0 : index
    %c0_3 = arith.constant 0 : index
    %c0_4 = arith.constant 0 : index
    %4 = vector.load %arg7[%c0_2, %c0_3, %c0_4] : memref<3x384x128xbf16, #tpu.memory_space<vmem>>, vector<1x384x128xbf16>
    %5 = vector.shape_cast %4 : vector<1x384x128xbf16> to vector<384x128xbf16>
    %cst = arith.constant dense<0.000000e+00> : vector<32x128xf32>
    %6 = tpu.matmul %3, %5, %cst {dimension_numbers = #tpu.dot_dimension_numbers<[1], [0], [0], [1], [0, 0, 1, 1], [], []>} : vector<32x384xbf16>, vector<384x128xbf16>, vector<32x128xf32> -> vector<32x128xf32>
    %c8 = arith.constant 8 : index
    %c0_5 = arith.constant 0 : index
    %7 = vector.load %arg11[%c8, %c0_5] : memref<48x384xbf16, #tpu.memory_space<vmem>>, vector<32x384xbf16>
    %c1 = arith.constant 1 : index
    %c0_6 = arith.constant 0 : index
    %c0_7 = arith.constant 0 : index
    %8 = vector.load %arg7[%c1, %c0_6, %c0_7] : memref<3x384x128xbf16, #tpu.memory_space<vmem>>, vector<1x384x128xbf16>
    %9 = vector.shape_cast %8 : vector<1x384x128xbf16> to vector<384x128xbf16>
    %cst_8 = arith.constant dense<0.000000e+00> : vector<32x128xf32>
    %10 = tpu.matmul %7, %9, %cst_8 {dimension_numbers = #tpu.dot_dimension_numbers<[1], [0], [0], [1], [0, 0, 1, 1], [], []>} : vector<32x384xbf16>, vector<384x128xbf16>, vector<32x128xf32> -> vector<32x128xf32>
    %11 = arith.addf %6, %10 : vector<32x128xf32>
    %c16 = arith.constant 16 : index
    %c0_9 = arith.constant 0 : index
    %12 = vector.load %arg11[%c16, %c0_9] : memref<48x384xbf16, #tpu.memory_space<vmem>>, vector<32x384xbf16>
    %c2 = arith.constant 2 : index
    %c0_10 = arith.constant 0 : index
    %c0_11 = arith.constant 0 : index
    %13 = vector.load %arg7[%c2, %c0_10, %c0_11] : memref<3x384x128xbf16, #tpu.memory_space<vmem>>, vector<1x384x128xbf16>
    %14 = vector.shape_cast %13 : vector<1x384x128xbf16> to vector<384x128xbf16>
    %cst_12 = arith.constant dense<0.000000e+00> : vector<32x128xf32>
    %15 = tpu.matmul %12, %14, %cst_12 {dimension_numbers = #tpu.dot_dimension_numbers<[1], [0], [0], [1], [0, 0, 1, 1], [], []>} : vector<32x384xbf16>, vector<384x128xbf16>, vector<32x128xf32> -> vector<32x128xf32>
    %16 = arith.addf %11, %15 : vector<32x128xf32>
    %c0_13 = arith.constant 0 : index
    %c0_14 = arith.constant 0 : index
    %17 = vector.load %arg8[%c0_13, %c0_14] : memref<1x128xf32, #tpu.memory_space<vmem>>, vector<1x128xf32>
    %18 = vector.broadcast %17 : vector<1x128xf32> to vector<32x128xf32>
    %19 = arith.addf %16, %18 : vector<32x128xf32>
    %cst_15 = arith.constant dense<0.000000e+00> : vector<128xf32>
    %20 = vector.multi_reduction <add>, %19, %cst_15 [0] : vector<32x128xf32> to vector<128xf32>
    %21 = vector.shape_cast %20 : vector<128xf32> to vector<1x128xf32>
    %c0_16 = arith.constant 0 : index
    %c0_17 = arith.constant 0 : index
    %c0_18 = arith.constant 0 : index
    %22 = vector.load %arg10[%c0_16, %c0_17, %c0_18] : memref<1x2x128xf32, #tpu.memory_space<vmem>>, vector<1x1x128xf32>
    %23 = vector.shape_cast %22 : vector<1x1x128xf32> to vector<1x128xf32>
    %24 = vector.shape_cast %21 : vector<1x128xf32> to vector<1x1x128xf32>
    tpu.vector_store %arg10[%c0_16, %c0_17, %c0_18], %24 {strides = array<i32>} : memref<1x2x128xf32, #tpu.memory_space<vmem>>, vector<1x1x128xf32>,
    %25 = arith.mulf %19, %19 : vector<32x128xf32>
    %cst_19 = arith.constant dense<0.000000e+00> : vector<128xf32>
    %26 = vector.multi_reduction <add>, %25, %cst_19 [0] : vector<32x128xf32> to vector<128xf32>
    %27 = vector.shape_cast %26 : vector<128xf32> to vector<1x128xf32>
    %c0_20 = arith.constant 0 : index
    %c1_21 = arith.constant 1 : index
    %c0_22 = arith.constant 0 : index
    %28 = vector.load %arg10[%c0_20, %c1_21, %c0_22] : memref<1x2x128xf32, #tpu.memory_space<vmem>>, vector<1x1x128xf32>
    %29 = vector.shape_cast %28 : vector<1x1x128xf32> to vector<1x128xf32>
    %30 = vector.shape_cast %27 : vector<1x128xf32> to vector<1x1x128xf32>
    tpu.vector_store %arg10[%c0_20, %c1_21, %c0_22], %30 {strides = array<i32>} : memref<1x2x128xf32, #tpu.memory_space<vmem>>, vector<1x1x128xf32>,
    %31 = vector.shape_cast %19 : vector<32x128xf32> to vector<4x8x128xf32>
    %32 = arith.truncf %31 : vector<4x8x128xf32> to vector<4x8x128xbf16>
    %c0_23 = arith.constant 0 : index
    %c0_24 = arith.constant 0 : index
    %c0_25 = arith.constant 0 : index
    %c0_26 = arith.constant 0 : index
    %33 = vector.load %arg9[%c0_23, %c0_24, %c0_25, %c0_26] : memref<1x4x8x128xbf16, #tpu.memory_space<vmem>>, vector<1x4x8x128xbf16>
    %34 = vector.shape_cast %33 : vector<1x4x8x128xbf16> to vector<4x8x128xbf16>
    %35 = vector.shape_cast %32 : vector<4x8x128xbf16> to vector<1x4x8x128xbf16>
    tpu.vector_store %arg9[%c0_23, %c0_24, %c0_25, %c0_26], %35 {strides = array<i32>} : memref<1x4x8x128xbf16, #tpu.memory_space<vmem>>, vector<1x4x8x128xbf16>,
    return
  }
  func.func @transform_0(%arg0: i32, %arg1: i32, %arg2: i32) -> (i32, i32, i32, i32) {
    %c0_i32 = arith.constant 0 : i32
    %c0_i32_0 = arith.constant 0 : i32
    %c0_i32_1 = arith.constant 0 : i32
    return %arg0, %arg1, %c0_i32, %c0_i32_0 : i32, i32, i32, i32
  }
  func.func @transform_1(%arg0: i32, %arg1: i32, %arg2: i32) -> (i32, i32, i32, i32) {
    %c2_i32 = arith.constant 2 : i32
    %0 = arith.muli %arg0, %c2_i32 : i32
    %1 = arith.addi %0, %arg1 : i32
    %c0_i32 = arith.constant 0 : i32
    %c0_i32_0 = arith.constant 0 : i32
    %c0_i32_1 = arith.constant 0 : i32
    %c0_i32_2 = arith.constant 0 : i32
    return %1, %c0_i32, %c0_i32_0, %c0_i32_1 : i32, i32, i32, i32
  }
  func.func @transform_2(%arg0: i32, %arg1: i32, %arg2: i32) -> (i32, i32) {
    %c0_i32 = arith.constant 0 : i32
    %c0_i32_0 = arith.constant 0 : i32
    %c0_i32_1 = arith.constant 0 : i32
    return %c0_i32, %c0_i32_0 : i32, i32
  }
  func.func @transform_3(%arg0: i32, %arg1: i32, %arg2: i32) -> (i32, i32) {
    %c0_i32 = arith.constant 0 : i32
    %c0_i32_0 = arith.constant 0 : i32
    %c0_i32_1 = arith.constant 0 : i32
    return %c0_i32, %c0_i32_0 : i32, i32
  }
  func.func @transform_4(%arg0: i32, %arg1: i32, %arg2: i32) -> (i32, i32, i32) {
    %c0_i32 = arith.constant 0 : i32
    %c0_i32_0 = arith.constant 0 : i32
    %c0_i32_1 = arith.constant 0 : i32
    return %c0_i32, %c0_i32_0, %arg2 : i32, i32, i32
  }
  func.func @transform_5(%arg0: i32, %arg1: i32, %arg2: i32) -> (i32, i32) {
    %c0_i32 = arith.constant 0 : i32
    %c0_i32_0 = arith.constant 0 : i32
    return %c0_i32, %arg2 : i32, i32
  }
  func.func @transform_6(%arg0: i32, %arg1: i32, %arg2: i32) -> (i32, i32, i32, i32) {
    %c0_i32 = arith.constant 0 : i32
    %c0_i32_0 = arith.constant 0 : i32
    return %arg0, %arg1, %c0_i32, %arg2 : i32, i32, i32, i32
  }
  func.func @transform_7(%arg0: i32, %arg1: i32, %arg2: i32) -> (i32, i32, i32) {
    %c2_i32 = arith.constant 2 : i32
    %0 = arith.muli %arg0, %c2_i32 : i32
    %1 = arith.addi %0, %arg1 : i32
    %c0_i32 = arith.constant 0 : i32
    %c0_i32_0 = arith.constant 0 : i32
    return %1, %c0_i32, %arg2 : i32, i32, i32
  }
}

</mosaic_0001>

<llo_original>
// kernel: down_pallas.2
$region0: #{down_pallas.2}
  #allocation0 [shape = 'u32[]', space=smem, size = 0x4, offset = 0x4, fixed_abs, tag = 'smem constant byte address 0x4 - core index']
  #allocation1 [shape = 'u32[144,128]{1,0:T(1,128)}', space=vmem, size = 0x12000, scoped, tag = 'internal scratch']
  #allocation2 [shape = 'bf16[48,384]{1,0:T(16,128)(2,1)}', space=vmem, size = 0x9000, scoped, tag = 'scratch operand']
  %s0 = inlined_call_operand.vmem [shape: bf16[2,8,8,128], index: 0, kind: input, shape index: {}]
  %s1 = inlined_call_operand.vmem [shape: bf16[4,2,8,128], index: 1, kind: input, shape index: {}]
  %s2 = inlined_call_operand.vmem [shape: bf16[3,384,128], index: 2, kind: input, shape index: {}]
  %s3 = inlined_call_operand.vmem [shape: f32[1,128], index: 3, kind: input, shape index: {}]
  %s4 = inlined_call_operand.vmem [shape: bf16[2,8,8,128], index: 4, kind: output, shape index: {0}]
  %s5 = inlined_call_operand.vmem [shape: f32[4,2,128], index: 5, kind: output, shape index: {1}]
  %6 = xla_tuple %s4, %s5
  %s7 = sld [smem:[#allocation0]]
  $region61: #{down_pallas.2} parent=0
    _
  %s9 = ssub.s32 1, %s7
  %s10 = scalar_select 0, %s9, %s7
  loop: start=0, step=1, limit=6
  $region2: #{down_pallas.2} parent=0 // loop_pre_header
    _
  $region3: #{down_pallas.2} parent=0 // loop_header
    %s12 = sphi 0, %s16
    %p13 = scmp.ge.s32.totalorder %s12, 6
    %s19 = sphi 0, %s38
    %s20 = sphi 0, %s34
    %s21 = sphi 0, %s30
    %s22 = sphi 0, %s19
    %s23 = sphi 0, %s20
    %s24 = sphi 0, %s21
    %s25 = sphi 0, %s22
    %s26 = sphi 0, %s23
    %s27 = sphi 0, %s24
    %s43 = sphi 0, %s45
    %s46 = sphi 0, %s43
    %s47 = sphi 0, %s46
    %s63 = sphi 0, %s47
    %s73 = sphi 0, %s75
    %s76 = sphi 0, %s73
    %s77 = sphi 0, %s76
    %s93 = sphi 0, %s77
    %s99 = sphi 0, %s101
    %s102 = sphi 0, %s99
    %s103 = sphi 0, %s102
    %s119 = sphi 0, %s103
    %s125 = sphi 0, %s127
    %s128 = sphi 0, %s125
    %s129 = sphi 0, %s128
    %s145 = sphi 0, %s129
    %s155 = sphi 0, %s157
    %s158 = sphi 0, %s155
    %s159 = sphi 0, %s158
    %s175 = sphi 0, %s159
    %s187 = sphi 0, %s189
    %s190 = sphi 0, %s187
    %s191 = sphi 0, %s190
    %s207 = sphi 0, %s191
  $region4: #{down_pallas.2} parent=0 // loop_header_branch
    %15 = sbr.rel (%p13) target = $region8
  $region5: #{down_pallas.2} parent=0 // loop_body
    %s17 = ssub.s32 %s12, 1
    %s18 = ssub.s32 %s12, 2
    %s28 = sadd.s32 1, %s21
    %p29 = scmp.ge.s32.totalorder %s28, 1
    %s30 = scalar_select %p29, 0, %s28
    %s31 = sadd.s32 1, %s20
    %s32 = scalar_select %p29, %s31, %s20
    %p33 = scmp.ge.s32.totalorder %s32, 2
    %s34 = scalar_select %p33, 0, %s32
    %s35 = sadd.s32 1, %s19
    %s36 = scalar_select %p33, %s35, %s19
    %p37 = scmp.ge.s32.totalorder %s36, 2
    %s38 = scalar_select %p37, 0, %s36
    %s39 = ssub.s32 %s19, %s38
    %s40 = ssub.s32 %s20, %s34
    %s41 = sor.u32 %s39, %s40
    %p42 = scmp.eq.s32.totalorder %s41, 0
    %s44 = sadd.s32 %s43, 1
    %s45 = scalar_select %p42, %s43, %s44
    %p48 = pneg %p42
    %p49 = scmp.eq.s32.totalorder %s12, 3
    %p50 = por %p48, %p49
    %p51 = scmp.ne.s32.totalorder %s43, %s46
    %p52 = scmp.eq.s32.totalorder %s12, 0
    %p53 = por %p51, %p52
    %p54 = scmp.ne.s32.totalorder %s43, %s46
    %p55 = scmp.eq.s32.totalorder %s17, 3
    %p56 = por %p54, %p55
    %p57 = scmp.ne.s32.totalorder %s46, %s47
    %p58 = scmp.eq.s32.totalorder %s17, 0
    %p59 = por %p57, %p58
    %p60 = scmp.ne.s32.totalorder %s46, %s47
    %p61 = scmp.eq.s32.totalorder %s18, 3
    %p62 = por %p60, %p61
    %p64 = scmp.ne.s32.totalorder %s47, %s63
    %p65 = scmp.eq.s32.totalorder %s18, 0
    %p66 = por %p64, %p65
    %s67 = smul.u32 %s19, 2
    %s68 = sadd.s32 %s67, %s20
    %s69 = smul.u32 %s38, 2
    %s70 = sadd.s32 %s69, %s34
    %s71 = ssub.s32 %s68, %s70
    %p72 = scmp.eq.s32.totalorder %s71, 0
    %s74 = sadd.s32 %s73, 1
    %s75 = scalar_select %p72, %s73, %s74
    %p78 = pneg %p72
    %p79 = scmp.eq.s32.totalorder %s12, 3
    %p80 = por %p78, %p79
    %p81 = scmp.ne.s32.totalorder %s73, %s76
    %p82 = scmp.eq.s32.totalorder %s12, 0
    %p83 = por %p81, %p82
    %p84 = scmp.ne.s32.totalorder %s73, %s76
    %p85 = scmp.eq.s32.totalorder %s17, 3
    %p86 = por %p84, %p85
    %p87 = scmp.ne.s32.totalorder %s76, %s77
    %p88 = scmp.eq.s32.totalorder %s17, 0
    %p89 = por %p87, %p88
    %p90 = scmp.ne.s32.totalorder %s76, %s77
    %p91 = scmp.eq.s32.totalorder %s18, 3
    %p92 = por %p90, %p91
    %p94 = scmp.ne.s32.totalorder %s77, %s93
    %p95 = scmp.eq.s32.totalorder %s18, 0
    %p96 = por %p94, %p95
    %s97 = ssub.s32 %s21, %s30
    %p98 = scmp.eq.s32.totalorder %s97, 0
    %s100 = sadd.s32 %s99, 1
    %s101 = scalar_select %p98, %s99, %s100
    %p104 = pneg %p98
    %p105 = scmp.eq.s32.totalorder %s12, 3
    %p106 = por %p104, %p105
    %p107 = scmp.ne.s32.totalorder %s99, %s102
    %p108 = scmp.eq.s32.totalorder %s12, 0
    %p109 = por %p107, %p108
    %p110 = scmp.ne.s32.totalorder %s99, %s102
    %p111 = scmp.eq.s32.totalorder %s17, 3
    %p112 = por %p110, %p111
    %p113 = scmp.ne.s32.totalorder %s102, %s103
    %p114 = scmp.eq.s32.totalorder %s17, 0
    %p115 = por %p113, %p114
    %p116 = scmp.ne.s32.totalorder %s102, %s103
    %p117 = scmp.eq.s32.totalorder %s18, 3
    %p118 = por %p116, %p117
    %p120 = scmp.ne.s32.totalorder %s103, %s119
    %p121 = scmp.eq.s32.totalorder %s18, 0
    %p122 = por %p120, %p121
    %s123 = ssub.s32 %s21, %s30
    %p124 = scmp.eq.s32.totalorder %s123, 0
    %s126 = sadd.s32 %s125, 1
    %s127 = scalar_select %p124, %s125, %s126
    %p130 = pneg %p124
    %p131 = scmp.eq.s32.totalorder %s12, 3
    %p132 = por %p130, %p131
    %p133 = scmp.ne.s32.totalorder %s125, %s128
    %p134 = scmp.eq.s32.totalorder %s12, 0
    %p135 = por %p133, %p134
    %p136 = scmp.ne.s32.totalorder %s125, %s128
    %p137 = scmp.eq.s32.totalorder %s17, 3
    %p138 = por %p136, %p137
    %p139 = scmp.ne.s32.totalorder %s128, %s129
    %p140 = scmp.eq.s32.totalorder %s17, 0
    %p141 = por %p139, %p140
    %p142 = scmp.ne.s32.totalorder %s128, %s129
    %p143 = scmp.eq.s32.totalorder %s18, 3
    %p144 = por %p142, %p143
    %p146 = scmp.ne.s32.totalorder %s129, %s145
    %p147 = scmp.eq.s32.totalorder %s18, 0
    %p148 = por %p146, %p147
    %s149 = ssub.s32 %s19, %s38
    %s150 = ssub.s32 %s20, %s34
    %s151 = sor.u32 %s149, %s150
    %s152 = ssub.s32 %s21, %s30
    %s153 = sor.u32 %s151, %s152
    %p154 = scmp.eq.s32.totalorder %s153, 0
    %s156 = sadd.s32 %s155, 1
    %s157 = scalar_select %p154, %s155, %s156
    %p160 = pneg %p154
    %p161 = scmp.eq.s32.totalorder %s12, 3
    %p162 = por %p160, %p161
    %p163 = scmp.ne.s32.totalorder %s155, %s158
    %p164 = scmp.eq.s32.totalorder %s12, 0
    %p165 = por %p163, %p164
    %p166 = scmp.ne.s32.totalorder %s155, %s158
    %p167 = scmp.eq.s32.totalorder %s17, 3
    %p168 = por %p166, %p167
    %p169 = scmp.ne.s32.totalorder %s158, %s159
    %p170 = scmp.eq.s32.totalorder %s17, 0
    %p171 = por %p169, %p170
    %p172 = scmp.ne.s32.totalorder %s158, %s159
    %p173 = scmp.eq.s32.totalorder %s18, 3
    %p174 = por %p172, %p173
    %p176 = scmp.ne.s32.totalorder %s159, %s175
    %p177 = scmp.eq.s32.totalorder %s18, 0
    %p178 = por %p176, %p177
    %s179 = smul.u32 %s19, 2
    %s180 = sadd.s32 %s179, %s20
    %s181 = smul.u32 %s38, 2
    %s182 = sadd.s32 %s181, %s34
    %s183 = ssub.s32 %s180, %s182
    %s184 = ssub.s32 %s21, %s30
    %s185 = sor.u32 %s183, %s184
    %p186 = scmp.eq.s32.totalorder %s185, 0
    %s188 = sadd.s32 %s187, 1
    %s189 = scalar_select %p186, %s187, %s188
    %p192 = pneg %p186
    %p193 = scmp.eq.s32.totalorder %s12, 3
    %p194 = por %p192, %p193
    %p195 = scmp.ne.s32.totalorder %s187, %s190
    %p196 = scmp.eq.s32.totalorder %s12, 0
    %p197 = por %p195, %p196
    %p198 = scmp.ne.s32.totalorder %s187, %s190
    %p199 = scmp.eq.s32.totalorder %s17, 3
    %p200 = por %p198, %p199
    %p201 = scmp.ne.s32.totalorder %s190, %s191
    %p202 = scmp.eq.s32.totalorder %s17, 0
    %p203 = por %p201, %p202
    %p204 = scmp.ne.s32.totalorder %s190, %s191
    %p205 = scmp.eq.s32.totalorder %s18, 3
    %p206 = por %p204, %p205
    %p208 = scmp.ne.s32.totalorder %s191, %s207
    %p209 = scmp.eq.s32.totalorder %s18, 0
    %p210 = por %p208, %p209
    %p211 = scmp.le.s32.totalorder 1, %s12
    %p212 = scmp.lt.s32.totalorder %s12, 5
    %p213 = pnand %p211, %p212
    %p214 = pneg %p213
    // Predicated region
    $region9: #{down_pallas.2} parent=5 // pred_check
      _
    $region10: #{down_pallas.2} parent=5 // pred_check_branch
      %216 = sbr.rel (%p213) target = $region12
    $region11: #{down_pallas.2} parent=5 // pred_region
      %s217 = ssub.s32 %s12, 1
      // Predicated region
      $region13: #{down_pallas.2} parent=11 // pred_check
        %p218 = pneg %p115
      $region14: #{down_pallas.2} parent=11 // pred_check_branch
        %220 = sbr.rel (%p218) target = $region16
      $region15: #{down_pallas.2} parent=11 // pred_region
        %p221 = scmp.lt.s32.totalorder %s24, 0
        %s222 = scalar_select %p221, %s24, 0
        %s223 = smul.addr %s222, 4
        %s224 = scalar_lea.vmem %s2, %s223
      $region16: #{down_pallas.2} parent=11 // pred_fallthru
        _
      // Predicated region
      $region17: #{down_pallas.2} parent=11 // pred_check
        %p225 = pneg %p141
      $region18: #{down_pallas.2} parent=11 // pred_check_branch
        %227 = sbr.rel (%p225) target = $region20
      $region19: #{down_pallas.2} parent=11 // pred_region
        %p228 = scmp.lt.s32.totalorder %s24, 0
        %s229 = scalar_select %p228, %s24, 0
        %s230 = scalar_lea.vmem %s3, %s229
      $region20: #{down_pallas.2} parent=11 // pred_fallthru
        _
    $region12: #{down_pallas.2} parent=5 // pred_fallthru
      _
    %p231 = scmp.lt.s32.totalorder %s12, 4
    // Predicated region
    $region21: #{down_pallas.2} parent=5 // pred_check
      %p232 = pneg %p231
    $region22: #{down_pallas.2} parent=5 // pred_check_branch
      %234 = sbr.rel (%p232) target = $region24
    $region23: #{down_pallas.2} parent=5 // pred_region
      // Predicated region
      $region25: #{down_pallas.2} parent=23 // pred_check
        %p235 = pneg %p53
      $region26: #{down_pallas.2} parent=23 // pred_check_branch
        %237 = sbr.rel (%p235) target = $region28
      $region27: #{down_pallas.2} parent=23 // pred_region
        %s238 = smul.u32 4, %s20
        %p239 = scmp.lt.s32.totalorder %s19, 1
        %s240 = scalar_select %p239, %s19, 1
        %p241 = scmp.lt.s32.totalorder %s238, 7
        %s242 = scalar_select %p241, %s238, 7
        %s243 = smul.addr %s240, 8
        %s244 = sadd.s32 %s242, %s243
        %s245 = smul.addr %s244, 4
        %s246 = scalar_lea.vmem %s0, %s245
        %s247 = smul.u32 4, %s20
      $region28: #{down_pallas.2} parent=23 // pred_fallthru
        _
      // Predicated region
      $region29: #{down_pallas.2} parent=23 // pred_check
        %p248 = pneg %p83
      $region30: #{down_pallas.2} parent=23 // pred_check_branch
        %250 = sbr.rel (%p248) target = $region32
      $region31: #{down_pallas.2} parent=23 // pred_region
        %s251 = smul.u32 %s19, 2
        %s252 = sadd.s32 %s251, %s20
        %p253 = scmp.lt.s32.totalorder %s252, 3
        %s254 = scalar_select %p253, %s252, 3
        %s255 = smul.addr %s254, 2
        %s256 = smul.addr %s255, 4
        %s257 = scalar_lea.vmem %s1, %s256
        %s258 = smul.u32 %s19, 2
        %s259 = sadd.s32 %s258, %s20
      $region32: #{down_pallas.2} parent=23 // pred_fallthru
        _
    $region24: #{down_pallas.2} parent=5 // pred_fallthru
      _
    %p260 = scmp.le.s32.totalorder 1, %s12
    %p261 = scmp.lt.s32.totalorder %s12, 5
    %p262 = pnand %p260, %p261
    %p263 = pneg %p262
    // Predicated region
    $region33: #{down_pallas.2} parent=5 // pred_check
      _
    $region34: #{down_pallas.2} parent=5 // pred_check_branch
      %265 = sbr.rel (%p262) target = $region36
    $region35: #{down_pallas.2} parent=5 // pred_region
      %s266 = ssub.s32 %s12, 1
      %s267 = smul.u32 4, %s23
      %p268 = scmp.lt.s32.totalorder %s22, 1
      %s269 = scalar_select %p268, %s22, 1
      %p270 = scmp.lt.s32.totalorder %s267, 7
      %s271 = scalar_select %p270, %s267, 7
      %s272 = smul.addr %s269, 8
      %s273 = sadd.s32 %s271, %s272
      %s274 = smul.addr %s273, 4
      %s275 = scalar_lea.vmem %s0, %s274
      %p276 = pneg %p59
      %p277 = pneg %p56
      %s278 = smul.u32 %s22, 2
      %s279 = sadd.s32 %s278, %s23
      %p280 = scmp.lt.s32.totalorder %s279, 3
      %s281 = scalar_select %p280, %s279, 3
      %s282 = smul.addr %s281, 2
      %s283 = smul.addr %s282, 4
      %s284 = scalar_lea.vmem %s1, %s283
      %p285 = pneg %p89
      %p286 = pneg %p86
      %p287 = scmp.lt.s32.totalorder %s24, 0
      %s288 = scalar_select %p287, %s24, 0
      %s289 = smul.addr %s288, 4
      %s290 = scalar_lea.vmem %s2, %s289
      %p291 = pneg %p115
      %p292 = pneg %p112
      %p293 = scmp.lt.s32.totalorder %s24, 0
      %s294 = scalar_select %p293, %s24, 0
      %s295 = scalar_lea.vmem %s3, %s294
      %p296 = pneg %p141
      %p297 = pneg %p138
      %p298 = pneg %p171
      %p299 = pneg %p168
      %s300 = smul.u32 4, %s23
      %p301 = scmp.lt.s32.totalorder %s22, 1
      %s302 = scalar_select %p301, %s22, 1
      %p303 = scmp.lt.s32.totalorder %s300, 7
      %s304 = scalar_select %p303, %s300, 7
      %p305 = scmp.lt.s32.totalorder %s24, 0
      %s306 = scalar_select %p305, %s24, 0
      %s307 = sadd.s32 %s306, %s304
      %s308 = smul.addr %s302, 8
      %s309 = sadd.s32 %s307, %s308
      %s310 = smul.addr %s309, 4
      %s311 = scalar_lea.vmem %s4, %s310
      %p312 = pneg %p203
      %p313 = pneg %p200
      %s314 = smul.u32 %s22, 2
      %s315 = sadd.s32 %s314, %s23
      %p316 = scmp.lt.s32.totalorder %s315, 3
      %s317 = scalar_select %p316, %s315, 3
      %p318 = scmp.lt.s32.totalorder %s24, 0
      %s319 = scalar_select %p318, %s24, 0
      %s320 = sadd.s32 %s319, %s317
      %s321 = smul.addr %s320, 2
      %s322 = scalar_lea.vmem %s5, %s321
      %s323 = smul.u32 4, %s23
      %p324 = scmp.lt.s32.totalorder %s22, 1
      %s325 = scalar_select %p324, %s22, 1
      %p326 = scmp.lt.s32.totalorder %s323, 7
      %s327 = scalar_select %p326, %s323, 7
      %s328 = smul.addr %s325, 8
      %s329 = sadd.s32 %s327, %s328
      %s330 = smul.addr %s329, 4
      %s331 = scalar_lea.vmem %s0, %s330
      %s332 = smul.u32 4, %s23
      %s333 = smul.u32 %s22, 2
      %s334 = sadd.s32 %s333, %s23
      %p335 = scmp.lt.s32.totalorder %s334, 3
      %s336 = scalar_select %p335, %s334, 3
      %s337 = smul.addr %s336, 2
      %s338 = smul.addr %s337, 4
      %s339 = scalar_lea.vmem %s1, %s338
      %s340 = smul.u32 %s22, 2
      %s341 = sadd.s32 %s340, %s23
      %p342 = scmp.lt.s32.totalorder %s24, 0
      %s343 = scalar_select %p342, %s24, 0
      %s344 = smul.addr %s343, 4
      %s345 = scalar_lea.vmem %s2, %s344
      %p346 = scmp.lt.s32.totalorder %s24, 0
      %s347 = scalar_select %p346, %s24, 0
      %s348 = scalar_lea.vmem %s3, %s347
      %s349 = smul.u32 4, %s23
      %p350 = scmp.lt.s32.totalorder %s22, 1
      %s351 = scalar_select %p350, %s22, 1
      %p352 = scmp.lt.s32.totalorder %s349, 7
      %s353 = scalar_select %p352, %s349, 7
      %p354 = scmp.lt.s32.totalorder %s24, 0
      %s355 = scalar_select %p354, %s24, 0
      %s356 = sadd.s32 %s355, %s353
      %s357 = smul.addr %s351, 8
      %s358 = sadd.s32 %s356, %s357
      %s359 = smul.addr %s358, 4
      %s360 = scalar_lea.vmem %s4, %s359
      %s361 = smul.u32 4, %s23
      %s362 = smul.u32 %s22, 2
      %s363 = sadd.s32 %s362, %s23
      %p364 = scmp.lt.s32.totalorder %s363, 3
      %s365 = scalar_select %p364, %s363, 3
      %p366 = scmp.lt.s32.totalorder %s24, 0
      %s367 = scalar_select %p366, %s24, 0
      %s368 = sadd.s32 %s367, %s365
      %s369 = smul.addr %s368, 2
      %s370 = scalar_lea.vmem %s5, %s369
      %s371 = smul.u32 %s22, 2
      %s372 = sadd.s32 %s371, %s23
      %p374 = scmp.eq.s32.totalorder %s24, 0
      // Predicated region
      $region37: #{down_pallas.2} parent=35 // pred_check
        %p375 = pneg %p374
      $region38: #{down_pallas.2} parent=35 // pred_check_branch
        %377 = sbr.rel (%p375) target = $region40
      $region39: #{down_pallas.2} parent=35 // pred_region
        %v378 = vld [vmem:[%s331] sm:$0xf]
        %v379 = vld [vmem:[%s331 + $0x4] sm:$0xf]
        %v380 = vld [vmem:[%s331 + $0x8] sm:$0xf]
        %v381 = vld [vmem:[%s331 + $0xc] sm:$0xf]
        %v382 = vld [vmem:[%s339] sm:$0xf]
        %v383 = vld [vmem:[%s339 + $0x4] sm:$0xf]
        %v390 = vunpack.c.l.b16 %v382
        %v391 = vunpack.c.l.b16 %v378
        %v392 = vunpack.c.l.b16 %v379
        %v393 = vunpack.c.l.b16 %v380
        %v394 = vunpack.c.l.b16 %v381
        %v395 = vunpack.c.l.b16 %v383
        %v396 = vpack.c.b16 %v390, %v390
        %v397 = vpack.c.b16 %v391, %v391
        %v398 = vpack.c.b16 %v392, %v392
        %v399 = vpack.c.b16 %v393, %v393
        %v400 = vpack.c.b16 %v394, %v394
        %v401 = vpack.c.b16 %v395, %v395
        %v403 = vshrl.u32 %v396, 16
        %v405 = vrot.slane %v403, 7
        %v406 = vshll.u32 %v396, 16
        %v408 = vor.u32 %v405, %v406
        %v410 = vshrl.u32 %v397, 16
        %v412 = vrot.slane %v410, 7
        %v413 = vshll.u32 %v397, 16
        %v415 = vor.u32 %v412, %v413
        %v417 = vshrl.u32 %v398, 16
        %v419 = vrot.slane %v417, 7
        %v420 = vshll.u32 %v398, 16
        %v422 = vor.u32 %v419, %v420
        %v424 = vshrl.u32 %v399, 16
        %v426 = vrot.slane %v424, 7
        %v427 = vshll.u32 %v399, 16
        %v429 = vor.u32 %v426, %v427
        %v431 = vshrl.u32 %v400, 16
        %v433 = vrot.slane %v431, 7
        %v434 = vshll.u32 %v400, 16
        %v436 = vor.u32 %v433, %v434
        %v438 = vshrl.u32 %v401, 16
        %v440 = vrot.slane %v438, 7
        %v441 = vshll.u32 %v401, 16
        %v443 = vor.u32 %v440, %v441
        %vm450 = vcmask 1040384
        %vm451 = vsmask.f32 256
        %vm452 = vmand %vm450, %vm451
        %v453 = vsel %vm452, 0, %v408
        %v454 = vsel %vm452, 0, %v415
        %v455 = vsel %vm452, 0, %v422
        %v456 = vsel %vm452, 0, %v429
        %v457 = vsel %vm452, 0, %v436
        %v458 = vsel %vm452, 0, %v443
        %v459 = vrot.slane %v406, 1
        %v460 = vor.u32 %v403, %v459
        %v461 = vrot.slane %v413, 1
        %v462 = vor.u32 %v410, %v461
        %v463 = vrot.slane %v420, 1
        %v464 = vor.u32 %v417, %v463
        %v465 = vrot.slane %v427, 1
        %v466 = vor.u32 %v424, %v465
        %v467 = vrot.slane %v434, 1
        %v468 = vor.u32 %v431, %v467
        %v469 = vrot.slane %v441, 1
        %v470 = vor.u32 %v438, %v469
        %vm477 = vcmask 1043456
        %vm478 = vsmask.f32 3328
        %vm479 = vmand %vm477, %vm478
        %v480 = vsel %vm479, %v460, 0
        %v481 = vsel %vm479, %v462, 0
        %v482 = vsel %vm479, %v464, 0
        %v483 = vsel %vm479, %v466, 0
        %v484 = vsel %vm479, %v468, 0
        %v485 = vsel %vm479, %v470, 0
        %v498 = vunpack.c.l.b16 %v453
        %v499 = vunpack.c.l.b16 %v480
        %v500 = vunpack.c.l.b16 %v454
        %v501 = vunpack.c.l.b16 %v481
        %v502 = vunpack.c.l.b16 %v455
        %v503 = vunpack.c.l.b16 %v482
        %v504 = vunpack.c.l.b16 %v456
        %v505 = vunpack.c.l.b16 %v483
        %v506 = vunpack.c.l.b16 %v457
        %v507 = vunpack.c.l.b16 %v484
        %v508 = vunpack.c.l.b16 %v458
        %v509 = vunpack.c.l.b16 %v485
        %v510 = vpack.c.b16 %v500, %v498
        %v511 = vpack.c.b16 %v391, %v390
        %v512 = vpack.c.b16 %v501, %v499
        %v513 = vpack.c.b16 %v504, %v502
        %v514 = vpack.c.b16 %v393, %v392
        %v515 = vpack.c.b16 %v505, %v503
        %v516 = vpack.c.b16 %v508, %v506
        %v517 = vpack.c.b16 %v395, %v394
        %v518 = vpack.c.b16 %v509, %v507
        %528 = vst [vmem:[#allocation2] sm:$0xff] %v510
        %529 = vst [vmem:[#allocation2 + $0x8] sm:$0xff] %v511
        %530 = vst [vmem:[#allocation2 + $0x10] sm:$0xff] %v512
        %531 = vst [vmem:[#allocation2 + $0x18] sm:$0xff] %v513
        %532 = vst [vmem:[#allocation2 + $0x20] sm:$0xff] %v514
        %533 = vst [vmem:[#allocation2 + $0x28] sm:$0xff] %v515
        %534 = vst [vmem:[#allocation2 + $0x30] sm:$0xff] %v516
        %535 = vst [vmem:[#allocation2 + $0x38] sm:$0xff] %v517
        %536 = vst [vmem:[#allocation2 + $0x40] sm:$0xff] %v518
      $region40: #{down_pallas.2} parent=35 // pred_fallthru
        _
      %v537 = vld [vmem:[#allocation2] sm:$0xff]
      %v538 = vld [vmem:[#allocation2 + $0x8] sm:$0xff]
      %v539 = vld [vmem:[#allocation2 + $0x10] sm:$0xff]
      %v540 = vld [vmem:[#allocation2 + $0x18] sm:$0xff]
      %v541 = vld [vmem:[#allocation2 + $0x20] sm:$0xff]
      %v542 = vld [vmem:[#allocation2 + $0x28] sm:$0xff]
      %v543 = vld [vmem:[%s345] sm:$0xf]
      %v544 = vld [vmem:[%s345 + $0x4] sm:$0xf]
      %v545 = vld [vmem:[%s345 + $0x8] sm:$0xf]
      %v546 = vld [vmem:[%s345 + $0xc] sm:$0xf]
      %v547 = vld [vmem:[%s345 + $0x10] sm:$0xf]
      %v548 = vld [vmem:[%s345 + $0x14] sm:$0xf]
      %v549 = vld [vmem:[%s345 + $0x18] sm:$0xf]
      %v550 = vld [vmem:[%s345 + $0x1c] sm:$0xf]
      %v551 = vld [vmem:[%s345 + $0x20] sm:$0xf]
      %v552 = vld [vmem:[%s345 + $0x24] sm:$0xf]
      %v553 = vld [vmem:[%s345 + $0x28] sm:$0xf]
      %v554 = vld [vmem:[%s345 + $0x2c] sm:$0xf]
      %v555 = vld [vmem:[%s345 + $0x30] sm:$0xf]
      %v556 = vld [vmem:[%s345 + $0x34] sm:$0xf]
      %v557 = vld [vmem:[%s345 + $0x38] sm:$0xf]
      %v558 = vld [vmem:[%s345 + $0x3c] sm:$0xf]
      %v559 = vld [vmem:[%s345 + $0x40] sm:$0xf]
      %v560 = vld [vmem:[%s345 + $0x44] sm:$0xf]
      %v561 = vld [vmem:[%s345 + $0x48] sm:$0xf]
      %v562 = vld [vmem:[%s345 + $0x4c] sm:$0xf]
      %v563 = vld [vmem:[%s345 + $0x50] sm:$0xf]
      %v564 = vld [vmem:[%s345 + $0x54] sm:$0xf]
      %v565 = vld [vmem:[%s345 + $0x58] sm:$0xf]
      %v566 = vld [vmem:[%s345 + $0x5c] sm:$0xf]
      %v567 = vld [vmem:[%s345 + $0x60] sm:$0xf]
      %v568 = vld [vmem:[%s345 + $0x64] sm:$0xf]
      %v569 = vld [vmem:[%s345 + $0x68] sm:$0xf]
      %v570 = vld [vmem:[%s345 + $0x6c] sm:$0xf]
      %v571 = vld [vmem:[%s345 + $0x70] sm:$0xf]
      %v572 = vld [vmem:[%s345 + $0x74] sm:$0xf]
      %v573 = vld [vmem:[%s345 + $0x78] sm:$0xf]
      %v574 = vld [vmem:[%s345 + $0x7c] sm:$0xf]
      %v575 = vld [vmem:[%s345 + $0x80] sm:$0xf]
      %v576 = vld [vmem:[%s345 + $0x84] sm:$0xf]
      %v577 = vld [vmem:[%s345 + $0x88] sm:$0xf]
      %v578 = vld [vmem:[%s345 + $0x8c] sm:$0xf]
      %v579 = vld [vmem:[%s345 + $0x90] sm:$0xf]
      %v580 = vld [vmem:[%s345 + $0x94] sm:$0xf]
      %v581 = vld [vmem:[%s345 + $0x98] sm:$0xf]
      %v582 = vld [vmem:[%s345 + $0x9c] sm:$0xf]
      %v583 = vld [vmem:[%s345 + $0xa0] sm:$0xf]
      %v584 = vld [vmem:[%s345 + $0xa4] sm:$0xf]
      %v585 = vld [vmem:[%s345 + $0xa8] sm:$0xf]
      %v586 = vld [vmem:[%s345 + $0xac] sm:$0xf]
      %v587 = vld [vmem:[%s345 + $0xb0] sm:$0xf]
      %v588 = vld [vmem:[%s345 + $0xb4] sm:$0xf]
      %v589 = vld [vmem:[%s345 + $0xb8] sm:$0xf]
      %v590 = vld [vmem:[%s345 + $0xbc] sm:$0xf]
      %v591 = vld [vmem:[#allocation2] sm:$0xf0]
      %v592 = vld [vmem:[#allocation2 + $0x8] sm:$0xf0]
      %v593 = vld [vmem:[#allocation2 + $0x10] sm:$0xf0]
      %v594 = vld [vmem:[#allocation2 + $0x18] sm:$0xff]
      %v595 = vld [vmem:[#allocation2 + $0x20] sm:$0xff]
      %v596 = vld [vmem:[#allocation2 + $0x28] sm:$0xff]
      %v597 = vld [vmem:[#allocation2 + $0x30] sm:$0xf]
      %v598 = vld [vmem:[#allocation2 + $0x38] sm:$0xf]
      %v599 = vld [vmem:[#allocation2 + $0x40] sm:$0xf]
      %s600 = scalar_lea.vmem %s345, 192
      %v601 = vld [vmem:[%s600] sm:$0xf]
      %v602 = vld [vmem:[%s600 + $0x4] sm:$0xf]
      %v603 = vld [vmem:[%s600 + $0x8] sm:$0xf]
      %v604 = vld [vmem:[%s600 + $0xc] sm:$0xf]
      %v605 = vld [vmem:[%s600 + $0x10] sm:$0xf]
      %v606 = vld [vmem:[%s600 + $0x14] sm:$0xf]
      %v607 = vld [vmem:[%s600 + $0x18] sm:$0xf]
      %v608 = vld [vmem:[%s600 + $0x1c] sm:$0xf]
      %v609 = vld [vmem:[%s600 + $0x20] sm:$0xf]
      %v610 = vld [vmem:[%s600 + $0x24] sm:$0xf]
      %v611 = vld [vmem:[%s600 + $0x28] sm:$0xf]
      %v612 = vld [vmem:[%s600 + $0x2c] sm:$0xf]
      %v613 = vld [vmem:[%s600 + $0x30] sm:$0xf]
      %v614 = vld [vmem:[%s600 + $0x34] sm:$0xf]
      %v615 = vld [vmem:[%s600 + $0x38] sm:$0xf]
      %v616 = vld [vmem:[%s600 + $0x3c] sm:$0xf]
      %v617 = vld [vmem:[%s600 + $0x40] sm:$0xf]
      %v618 = vld [vmem:[%s600 + $0x44] sm:$0xf]
      %v619 = vld [vmem:[%s600 + $0x48] sm:$0xf]
      %v620 = vld [vmem:[%s600 + $0x4c] sm:$0xf]
      %v621 = vld [vmem:[%s600 + $0x50] sm:$0xf]
      %v622 = vld [vmem:[%s600 + $0x54] sm:$0xf]
      %v623 = vld [vmem:[%s600 + $0x58] sm:$0xf]
      %v624 = vld [vmem:[%s600 + $0x5c] sm:$0xf]
      %v625 = vld [vmem:[%s600 + $0x60] sm:$0xf]
      %v626 = vld [vmem:[%s600 + $0x64] sm:$0xf]
      %v627 = vld [vmem:[%s600 + $0x68] sm:$0xf]
      %v628 = vld [vmem:[%s600 + $0x6c] sm:$0xf]
      %v629 = vld [vmem:[%s600 + $0x70] sm:$0xf]
      %v630 = vld [vmem:[%s600 + $0x74] sm:$0xf]
      %v631 = vld [vmem:[%s600 + $0x78] sm:$0xf]
      %v632 = vld [vmem:[%s600 + $0x7c] sm:$0xf]
      %v633 = vld [vmem:[%s600 + $0x80] sm:$0xf]
      %v634 = vld [vmem:[%s600 + $0x84] sm:$0xf]
      %v635 = vld [vmem:[%s600 + $0x88] sm:$0xf]
      %v636 = vld [vmem:[%s600 + $0x8c] sm:$0xf]
      %v637 = vld [vmem:[%s600 + $0x90] sm:$0xf]
      %v638 = vld [vmem:[%s600 + $0x94] sm:$0xf]
      %v639 = vld [vmem:[%s600 + $0x98] sm:$0xf]
      %v640 = vld [vmem:[%s600 + $0x9c] sm:$0xf]
      %v641 = vld [vmem:[%s600 + $0xa0] sm:$0xf]
      %v642 = vld [vmem:[%s600 + $0xa4] sm:$0xf]
      %v643 = vld [vmem:[%s600 + $0xa8] sm:$0xf]
      %v644 = vld [vmem:[%s600 + $0xac] sm:$0xf]
      %v645 = vld [vmem:[%s600 + $0xb0] sm:$0xf]
      %v646 = vld [vmem:[%s600 + $0xb4] sm:$0xf]
      %v647 = vld [vmem:[%s600 + $0xb8] sm:$0xf]
      %v648 = vld [vmem:[%s600 + $0xbc] sm:$0xf]
      %vm658 = vcmask 1043456
      %v659 = vrot.slane %v591, 4
      %v660 = vrot.slane %v594, 4
      %v661 = vsel %vm658, %v659, %v660
      %v662 = vrot.slane %v592, 4
      %v663 = vrot.slane %v595, 4
      %v664 = vsel %vm658, %v662, %v663
      %v665 = vrot.slane %v593, 4
      %v666 = vrot.slane %v596, 4
      %v667 = vsel %vm658, %v665, %v666
      %v668 = vrot.slane %v597, 4
      %v669 = vsel %vm658, %v660, %v668
      %v670 = vrot.slane %v598, 4
      %v671 = vsel %vm658, %v663, %v670
      %v672 = vrot.slane %v599, 4
      %v673 = vsel %vm658, %v666, %v672
      %v728 = vunpack.c.l.b16 %v601
      %v729 = vunpack.c.l.b16 %v602
      %v730 = vunpack.c.l.b16 %v603
      %v731 = vunpack.c.l.b16 %v604
      %v732 = vunpack.c.l.b16 %v605
      %v733 = vunpack.c.l.b16 %v606
      %v734 = vunpack.c.l.b16 %v607
      %v735 = vunpack.c.l.b16 %v608
      %v736 = vunpack.c.l.b16 %v609
      %v737 = vunpack.c.l.b16 %v610
      %v738 = vunpack.c.l.b16 %v611
      %v739 = vunpack.c.l.b16 %v612
      %v740 = vunpack.c.l.b16 %v613
      %v741 = vunpack.c.l.b16 %v614
      %v742 = vunpack.c.l.b16 %v615
      %v743 = vunpack.c.l.b16 %v616
      %v744 = vunpack.c.l.b16 %v617
      %v745 = vunpack.c.l.b16 %v618
      %v746 = vunpack.c.l.b16 %v619
      %v747 = vunpack.c.l.b16 %v620
      %v748 = vunpack.c.l.b16 %v621
      %v749 = vunpack.c.l.b16 %v622
      %v750 = vunpack.c.l.b16 %v623
      %v751 = vunpack.c.l.b16 %v624
      %v752 = vunpack.c.l.b16 %v625
      %v753 = vunpack.c.l.b16 %v626
      %v754 = vunpack.c.l.b16 %v627
      %v755 = vunpack.c.l.b16 %v628
      %v756 = vunpack.c.l.b16 %v629
      %v757 = vunpack.c.l.b16 %v630
      %v758 = vunpack.c.l.b16 %v631
      %v759 = vunpack.c.l.b16 %v632
      %v760 = vunpack.c.l.b16 %v633
      %v761 = vunpack.c.l.b16 %v634
      %v762 = vunpack.c.l.b16 %v635
      %v763 = vunpack.c.l.b16 %v636
      %v764 = vunpack.c.l.b16 %v637
      %v765 = vunpack.c.l.b16 %v638
      %v766 = vunpack.c.l.b16 %v639
      %v767 = vunpack.c.l.b16 %v640
      %v768 = vunpack.c.l.b16 %v641
      %v769 = vunpack.c.l.b16 %v642
      %v770 = vunpack.c.l.b16 %v643
      %v771 = vunpack.c.l.b16 %v644
      %v772 = vunpack.c.l.b16 %v645
      %v773 = vunpack.c.l.b16 %v646
      %v774 = vunpack.c.l.b16 %v647
      %v775 = vunpack.c.l.b16 %v648
      %v776 = vpack.c.b16 %v729, %v728
      %v777 = vpack.c.b16 %v731, %v730
      %v778 = vpack.c.b16 %v733, %v732
      %v779 = vpack.c.b16 %v735, %v734
      %v780 = vpack.c.b16 %v737, %v736
      %v781 = vpack.c.b16 %v739, %v738
      %v782 = vpack.c.b16 %v741, %v740
      %v783 = vpack.c.b16 %v743, %v742
      %v784 = vpack.c.b16 %v745, %v744
      %v785 = vpack.c.b16 %v747, %v746
      %v786 = vpack.c.b16 %v749, %v748
      %v787 = vpack.c.b16 %v751, %v750
      %v788 = vpack.c.b16 %v753, %v752
      %v789 = vpack.c.b16 %v755, %v754
      %v790 = vpack.c.b16 %v757, %v756
      %v791 = vpack.c.b16 %v759, %v758
      %v792 = vpack.c.b16 %v761, %v760
      %v793 = vpack.c.b16 %v763, %v762
      %v794 = vpack.c.b16 %v765, %v764
      %v795 = vpack.c.b16 %v767, %v766
      %v796 = vpack.c.b16 %v769, %v768
      %v797 = vpack.c.b16 %v771, %v770
      %v798 = vpack.c.b16 %v773, %v772
      %v799 = vpack.c.b16 %v775, %v774
      %824 = vmatprep.subr.bf16.mxu0 0
      %825 = vmatpush1.bf16.msra.mxu0 %v776
      %826 = vmatprep.subr.bf16.mxu0 0
      %827 = vmatpush1.bf16.msra.mxu0 %v777
      %828 = vmatprep.subr.bf16.mxu0 0
      %829 = vmatpush1.bf16.msra.mxu0 %v778
      %830 = vmatprep.subr.bf16.mxu0 0
      %831 = vmatpush1.bf16.msra.mxu0 %v779
      %832 = vmatprep.subr.bf16.mxu0 0
      %833 = vmatpush1.bf16.msra.mxu0 %v780
      %834 = vmatprep.subr.bf16.mxu0 0
      %835 = vmatpush1.bf16.msra.mxu0 %v781
      %836 = vmatprep.subr.bf16.mxu0 0
      %837 = vmatpush1.bf16.msra.mxu0 %v782
      %838 = vmatprep.subr.bf16.mxu0 0
      %839 = vmatpush1.bf16.msra.mxu0 %v783
      %840 = vmatprep.subr.bf16.mxu0 0
      %841 = vmatpush1.bf16.msra.mxu0 %v784
      %842 = vmatprep.subr.bf16.mxu0 0
      %843 = vmatpush1.bf16.msra.mxu0 %v785
      %844 = vmatprep.subr.bf16.mxu0 0
      %845 = vmatpush1.bf16.msra.mxu0 %v786
      %846 = vmatprep.subr.bf16.mxu0 0
      %847 = vmatpush1.bf16.msra.mxu0 %v787
      %848 = vmatprep.subr.bf16.mxu0 0
      %849 = vmatpush1.bf16.msra.mxu0 %v788
      %850 = vmatprep.subr.bf16.mxu0 0
      %851 = vmatpush1.bf16.msra.mxu0 %v789
      %852 = vmatprep.subr.bf16.mxu0 0
      %853 = vmatpush1.bf16.msra.mxu0 %v790
      %854 = vmatprep.subr.bf16.mxu0 0
      %855 = vmatpush1.bf16.msra.mxu0 %v791
      %856 = vmatprep.mubr.bf16.mxu0 %v664
      %857 = vmatmul.mubr.bf16.gmra.mrb[0].mxu0 %v661
      %v858 = vpop.f32.mrb[0].mxu0
      %v859 = vadd.f32 0.0, %v858
      %v860 = vpop.f32.mrb[0].mxu0
      %v861 = vpop.f32.mrb[0].mxu0
      %v862 = vadd.f32 0.0, %v861
      %v863 = vpop.f32.mrb[0].mxu0
      %864 = vmatprep.mubr.bf16.mxu0 %v671
      %865 = vmatmul.mubr.bf16.gmra.mrb[0].mxu0 %v669
      %v866 = vpop.f32.mrb[0].mxu0
      %v867 = vadd.f32 0.0, %v866
      %v868 = vpop.f32.mrb[0].mxu0
      %v869 = vpop.f32.mrb[0].mxu0
      %v870 = vadd.f32 0.0, %v869
      %v871 = vpop.f32.mrb[0].mxu0
      %872 = vdwg.mxu0
      %873 = vmatprep.subr.bf16.mxu0 0
      %874 = vmatpush1.bf16.msra.mxu0 %v792
      %875 = vmatprep.subr.bf16.mxu0 0
      %876 = vmatpush1.bf16.msra.mxu0 %v793
      %877 = vmatprep.subr.bf16.mxu0 0
      %878 = vmatpush1.bf16.msra.mxu0 %v794
      %879 = vmatprep.subr.bf16.mxu0 0
      %880 = vmatpush1.bf16.msra.mxu0 %v795
      %881 = vmatprep.subr.bf16.mxu0 0
      %882 = vmatpush1.bf16.msra.mxu0 %v796
      %883 = vmatprep.subr.bf16.mxu0 0
      %884 = vmatpush1.bf16.msra.mxu0 %v797
      %885 = vmatprep.subr.bf16.mxu0 0
      %886 = vmatpush1.bf16.msra.mxu0 %v798
      %887 = vmatprep.subr.bf16.mxu0 0
      %888 = vmatpush1.bf16.msra.mxu0 %v799
      %889 = vmatprep.subr.bf16.mxu0 0
      %890 = vmatpush1.bf16.msra.mxu0 0
      %891 = vmatprep.subr.bf16.mxu0 0
      %892 = vmatpush1.bf16.msra.mxu0 0
      %893 = vmatprep.subr.bf16.mxu0 0
      %894 = vmatpush1.bf16.msra.mxu0 0
      %895 = vmatprep.subr.bf16.mxu0 0
      %896 = vmatpush1.bf16.msra.mxu0 0
      %897 = vmatprep.subr.bf16.mxu0 0
      %898 = vmatpush1.bf16.msra.mxu0 0
      %899 = vmatprep.subr.bf16.mxu0 0
      %900 = vmatpush1.bf16.msra.mxu0 0
      %901 = vmatprep.subr.bf16.mxu0 0
      %902 = vmatpush1.bf16.msra.mxu0 0
      %903 = vmatprep.subr.bf16.mxu0 0
      %904 = vmatpush1.bf16.msra.mxu0 0
      %905 = vmatprep.mubr.bf16.mxu0 0
      %906 = vmatmul.mubr.bf16.gmra.mrb[0].mxu0 %v667
      %v907 = vpop.f32.mrb[0].mxu0
      %v908 = vadd.f32 %v859, %v907
      %v909 = vpop.f32.mrb[0].mxu0
      %v910 = vpop.f32.mrb[0].mxu0
      %v911 = vadd.f32 %v862, %v910
      %v912 = vpop.f32.mrb[0].mxu0
      %913 = vmatprep.mubr.bf16.mxu0 0
      %914 = vmatmul.mubr.bf16.gmra.mrb[0].mxu0 %v673
      %v915 = vpop.f32.mrb[0].mxu0
      %v916 = vadd.f32 %v867, %v915
      %v917 = vpop.f32.mrb[0].mxu0
      %v918 = vpop.f32.mrb[0].mxu0
      %v919 = vadd.f32 %v870, %v918
      %v920 = vpop.f32.mrb[0].mxu0
      %921 = vdwg.mxu0
      %v970 = vunpack.c.l.b16 %v543
      %v971 = vunpack.c.l.b16 %v544
      %v972 = vunpack.c.l.b16 %v545
      %v973 = vunpack.c.l.b16 %v546
      %v974 = vunpack.c.l.b16 %v547
      %v975 = vunpack.c.l.b16 %v548
      %v976 = vunpack.c.l.b16 %v549
      %v977 = vunpack.c.l.b16 %v550
      %v978 = vunpack.c.l.b16 %v551
      %v979 = vunpack.c.l.b16 %v552
      %v980 = vunpack.c.l.b16 %v553
      %v981 = vunpack.c.l.b16 %v554
      %v982 = vunpack.c.l.b16 %v555
      %v983 = vunpack.c.l.b16 %v556
      %v984 = vunpack.c.l.b16 %v557
      %v985 = vunpack.c.l.b16 %v558
      %v986 = vunpack.c.l.b16 %v559
      %v987 = vunpack.c.l.b16 %v560
      %v988 = vunpack.c.l.b16 %v561
      %v989 = vunpack.c.l.b16 %v562
      %v990 = vunpack.c.l.b16 %v563
      %v991 = vunpack.c.l.b16 %v564
      %v992 = vunpack.c.l.b16 %v565
      %v993 = vunpack.c.l.b16 %v566
      %v994 = vunpack.c.l.b16 %v567
      %v995 = vunpack.c.l.b16 %v568
      %v996 = vunpack.c.l.b16 %v569
      %v997 = vunpack.c.l.b16 %v570
      %v998 = vunpack.c.l.b16 %v571
      %v999 = vunpack.c.l.b16 %v572
      %v1000 = vunpack.c.l.b16 %v573
      %v1001 = vunpack.c.l.b16 %v574
      %v1002 = vunpack.c.l.b16 %v575
      %v1003 = vunpack.c.l.b16 %v576
      %v1004 = vunpack.c.l.b16 %v577
      %v1005 = vunpack.c.l.b16 %v578
      %v1006 = vunpack.c.l.b16 %v579
      %v1007 = vunpack.c.l.b16 %v580
      %v1008 = vunpack.c.l.b16 %v581
      %v1009 = vunpack.c.l.b16 %v582
      %v1010 = vunpack.c.l.b16 %v583
      %v1011 = vunpack.c.l.b16 %v584
      %v1012 = vunpack.c.l.b16 %v585
      %v1013 = vunpack.c.l.b16 %v586
      %v1014 = vunpack.c.l.b16 %v587
      %v1015 = vunpack.c.l.b16 %v588
      %v1016 = vunpack.c.l.b16 %v589
      %v1017 = vunpack.c.l.b16 %v590
      %v1018 = vpack.c.b16 %v971, %v970
      %v1019 = vpack.c.b16 %v973, %v972
      %v1020 = vpack.c.b16 %v975, %v974
      %v1021 = vpack.c.b16 %v977, %v976
      %v1022 = vpack.c.b16 %v979, %v978
      %v1023 = vpack.c.b16 %v981, %v980
      %v1024 = vpack.c.b16 %v983, %v982
      %v1025 = vpack.c.b16 %v985, %v984
      %v1026 = vpack.c.b16 %v987, %v986
      %v1027 = vpack.c.b16 %v989, %v988
      %v1028 = vpack.c.b16 %v991, %v990
      %v1029 = vpack.c.b16 %v993, %v992
      %v1030 = vpack.c.b16 %v995, %v994
      %v1031 = vpack.c.b16 %v997, %v996
      %v1032 = vpack.c.b16 %v999, %v998
      %v1033 = vpack.c.b16 %v1001, %v1000
      %v1034 = vpack.c.b16 %v1003, %v1002
      %v1035 = vpack.c.b16 %v1005, %v1004
      %v1036 = vpack.c.b16 %v1007, %v1006
      %v1037 = vpack.c.b16 %v1009, %v1008
      %v1038 = vpack.c.b16 %v1011, %v1010
      %v1039 = vpack.c.b16 %v1013, %v1012
      %v1040 = vpack.c.b16 %v1015, %v1014
      %v1041 = vpack.c.b16 %v1017, %v1016
      %1066 = vmatprep.subr.bf16.mxu0 0
      %1067 = vmatpush1.bf16.msra.mxu0 %v1018
      %1068 = vmatprep.subr.bf16.mxu0 0
      %1069 = vmatpush1.bf16.msra.mxu0 %v1019
      %1070 = vmatprep.subr.bf16.mxu0 0
      %1071 = vmatpush1.bf16.msra.mxu0 %v1020
      %1072 = vmatprep.subr.bf16.mxu0 0
      %1073 = vmatpush1.bf16.msra.mxu0 %v1021
      %1074 = vmatprep.subr.bf16.mxu0 0
      %1075 = vmatpush1.bf16.msra.mxu0 %v1022
      %1076 = vmatprep.subr.bf16.mxu0 0
      %1077 = vmatpush1.bf16.msra.mxu0 %v1023
      %1078 = vmatprep.subr.bf16.mxu0 0
      %1079 = vmatpush1.bf16.msra.mxu0 %v1024
      %1080 = vmatprep.subr.bf16.mxu0 0
      %1081 = vmatpush1.bf16.msra.mxu0 %v1025
      %1082 = vmatprep.subr.bf16.mxu0 0
      %1083 = vmatpush1.bf16.msra.mxu0 %v1026
      %1084 = vmatprep.subr.bf16.mxu0 0
      %1085 = vmatpush1.bf16.msra.mxu0 %v1027
      %1086 = vmatprep.subr.bf16.mxu0 0
      %1087 = vmatpush1.bf16.msra.mxu0 %v1028
      %1088 = vmatprep.subr.bf16.mxu0 0
      %1089 = vmatpush1.bf16.msra.mxu0 %v1029
      %1090 = vmatprep.subr.bf16.mxu0 0
      %1091 = vmatpush1.bf16.msra.mxu0 %v1030
      %1092 = vmatprep.subr.bf16.mxu0 0
      %1093 = vmatpush1.bf16.msra.mxu0 %v1031
      %1094 = vmatprep.subr.bf16.mxu0 0
      %1095 = vmatpush1.bf16.msra.mxu0 %v1032
      %1096 = vmatprep.subr.bf16.mxu0 0
      %1097 = vmatpush1.bf16.msra.mxu0 %v1033
      %1098 = vmatprep.mubr.bf16.mxu0 %v538
      %1099 = vmatmul.mubr.bf16.gmra.mrb[0].mxu0 %v537
      %v1100 = vpop.f32.mrb[0].mxu0
      %v1101 = vadd.f32 %v908, %v1100
      %v1102 = vpop.f32.mrb[0].mxu0
      %v1103 = vpop.f32.mrb[0].mxu0
      %v1104 = vadd.f32 %v911, %v1103
      %v1105 = vpop.f32.mrb[0].mxu0
      %1106 = vmatprep.mubr.bf16.mxu0 %v541
      %1107 = vmatmul.mubr.bf16.gmra.mrb[0].mxu0 %v540
      %v1108 = vpop.f32.mrb[0].mxu0
      %v1109 = vadd.f32 %v916, %v1108
      %v1110 = vpop.f32.mrb[0].mxu0
      %v1111 = vpop.f32.mrb[0].mxu0
      %v1112 = vadd.f32 %v919, %v1111
      %v1113 = vpop.f32.mrb[0].mxu0
      %1114 = vdwg.mxu0
      %1115 = vmatprep.subr.bf16.mxu0 0
      %1116 = vmatpush1.bf16.msra.mxu0 %v1034
      %1117 = vmatprep.subr.bf16.mxu0 0
      %1118 = vmatpush1.bf16.msra.mxu0 %v1035
      %1119 = vmatprep.subr.bf16.mxu0 0
      %1120 = vmatpush1.bf16.msra.mxu0 %v1036
      %1121 = vmatprep.subr.bf16.mxu0 0
      %1122 = vmatpush1.bf16.msra.mxu0 %v1037
      %1123 = vmatprep.subr.bf16.mxu0 0
      %1124 = vmatpush1.bf16.msra.mxu0 %v1038
      %1125 = vmatprep.subr.bf16.mxu0 0
      %1126 = vmatpush1.bf16.msra.mxu0 %v1039
      %1127 = vmatprep.subr.bf16.mxu0 0
      %1128 = vmatpush1.bf16.msra.mxu0 %v1040
      %1129 = vmatprep.subr.bf16.mxu0 0
      %1130 = vmatpush1.bf16.msra.mxu0 %v1041
      %1131 = vmatprep.subr.bf16.mxu0 0
      %1132 = vmatpush1.bf16.msra.mxu0 0
      %1133 = vmatprep.subr.bf16.mxu0 0
      %1134 = vmatpush1.bf16.msra.mxu0 0
      %1135 = vmatprep.subr.bf16.mxu0 0
      %1136 = vmatpush1.bf16.msra.mxu0 0
      %1137 = vmatprep.subr.bf16.mxu0 0
      %1138 = vmatpush1.bf16.msra.mxu0 0
      %1139 = vmatprep.subr.bf16.mxu0 0
      %1140 = vmatpush1.bf16.msra.mxu0 0
      %1141 = vmatprep.subr.bf16.mxu0 0
      %1142 = vmatpush1.bf16.msra.mxu0 0
      %1143 = vmatprep.subr.bf16.mxu0 0
      %1144 = vmatpush1.bf16.msra.mxu0 0
      %1145 = vmatprep.subr.bf16.mxu0 0
      %1146 = vmatpush1.bf16.msra.mxu0 0
      %1147 = vmatprep.mubr.bf16.mxu0 0
      %1148 = vmatmul.mubr.bf16.gmra.mrb[0].mxu0 %v539
      %v1149 = vpop.f32.mrb[0].mxu0
      %v1150 = vadd.f32 %v1101, %v1149
      %v1151 = vpop.f32.mrb[0].mxu0
      %v1152 = vpop.f32.mrb[0].mxu0
      %v1153 = vadd.f32 %v1104, %v1152
      %v1154 = vpop.f32.mrb[0].mxu0
      %1155 = vmatprep.mubr.bf16.mxu0 0
      %1156 = vmatmul.mubr.bf16.gmra.mrb[0].mxu0 %v542
      %v1157 = vpop.f32.mrb[0].mxu0
      %v1158 = vadd.f32 %v1109, %v1157
      %v1159 = vpop.f32.mrb[0].mxu0
      %v1160 = vpop.f32.mrb[0].mxu0
      %v1161 = vadd.f32 %v1112, %v1160
      %v1162 = vpop.f32.mrb[0].mxu0
      %1163 = vdwg.mxu0
      %v1164 = vld [vmem:[#allocation2 + $0x30] sm:$0xff]
      %v1165 = vld [vmem:[#allocation2 + $0x38] sm:$0xff]
      %v1166 = vld [vmem:[#allocation2 + $0x40] sm:$0xff]
      %s1167 = scalar_lea.vmem %s345, 384
      %v1168 = vld [vmem:[%s1167] sm:$0xf]
      %v1169 = vld [vmem:[%s1167 + $0x4] sm:$0xf]
      %v1170 = vld [vmem:[%s1167 + $0x8] sm:$0xf]
      %v1171 = vld [vmem:[%s1167 + $0xc] sm:$0xf]
      %v1172 = vld [vmem:[%s1167 + $0x10] sm:$0xf]
      %v1173 = vld [vmem:[%s1167 + $0x14] sm:$0xf]
      %v1174 = vld [vmem:[%s1167 + $0x18] sm:$0xf]
      %v1175 = vld [vmem:[%s1167 + $0x1c] sm:$0xf]
      %v1176 = vld [vmem:[%s1167 + $0x20] sm:$0xf]
      %v1177 = vld [vmem:[%s1167 + $0x24] sm:$0xf]
      %v1178 = vld [vmem:[%s1167 + $0x28] sm:$0xf]
      %v1179 = vld [vmem:[%s1167 + $0x2c] sm:$0xf]
      %v1180 = vld [vmem:[%s1167 + $0x30] sm:$0xf]
      %v1181 = vld [vmem:[%s1167 + $0x34] sm:$0xf]
      %v1182 = vld [vmem:[%s1167 + $0x38] sm:$0xf]
      %v1183 = vld [vmem:[%s1167 + $0x3c] sm:$0xf]
      %v1184 = vld [vmem:[%s1167 + $0x40] sm:$0xf]
      %v1185 = vld [vmem:[%s1167 + $0x44] sm:$0xf]
      %v1186 = vld [vmem:[%s1167 + $0x48] sm:$0xf]
      %v1187 = vld [vmem:[%s1167 + $0x4c] sm:$0xf]
      %v1188 = vld [vmem:[%s1167 + $0x50] sm:$0xf]
      %v1189 = vld [vmem:[%s1167 + $0x54] sm:$0xf]
      %v1190 = vld [vmem:[%s1167 + $0x58] sm:$0xf]
      %v1191 = vld [vmem:[%s1167 + $0x5c] sm:$0xf]
      %v1192 = vld [vmem:[%s1167 + $0x60] sm:$0xf]
      %v1193 = vld [vmem:[%s1167 + $0x64] sm:$0xf]
      %v1194 = vld [vmem:[%s1167 + $0x68] sm:$0xf]
      %v1195 = vld [vmem:[%s1167 + $0x6c] sm:$0xf]
      %v1196 = vld [vmem:[%s1167 + $0x70] sm:$0xf]
      %v1197 = vld [vmem:[%s1167 + $0x74] sm:$0xf]
      %v1198 = vld [vmem:[%s1167 + $0x78] sm:$0xf]
      %v1199 = vld [vmem:[%s1167 + $0x7c] sm:$0xf]
      %v1200 = vld [vmem:[%s1167 + $0x80] sm:$0xf]
      %v1201 = vld [vmem:[%s1167 + $0x84] sm:$0xf]
      %v1202 = vld [vmem:[%s1167 + $0x88] sm:$0xf]
      %v1203 = vld [vmem:[%s1167 + $0x8c] sm:$0xf]
      %v1204 = vld [vmem:[%s1167 + $0x90] sm:$0xf]
      %v1205 = vld [vmem:[%s1167 + $0x94] sm:$0xf]
      %v1206 = vld [vmem:[%s1167 + $0x98] sm:$0xf]
      %v1207 = vld [vmem:[%s1167 + $0x9c] sm:$0xf]
      %v1208 = vld [vmem:[%s1167 + $0xa0] sm:$0xf]
      %v1209 = vld [vmem:[%s1167 + $0xa4] sm:$0xf]
      %v1210 = vld [vmem:[%s1167 + $0xa8] sm:$0xf]
      %v1211 = vld [vmem:[%s1167 + $0xac] sm:$0xf]
      %v1212 = vld [vmem:[%s1167 + $0xb0] sm:$0xf]
      %v1213 = vld [vmem:[%s1167 + $0xb4] sm:$0xf]
      %v1214 = vld [vmem:[%s1167 + $0xb8] sm:$0xf]
      %v1215 = vld [vmem:[%s1167 + $0xbc] sm:$0xf]
      %v1264 = vunpack.c.l.b16 %v1168
      %v1265 = vunpack.c.l.b16 %v1169
      %v1266 = vunpack.c.l.b16 %v1170
      %v1267 = vunpack.c.l.b16 %v1171
      %v1268 = vunpack.c.l.b16 %v1172
      %v1269 = vunpack.c.l.b16 %v1173
      %v1270 = vunpack.c.l.b16 %v1174
      %v1271 = vunpack.c.l.b16 %v1175
      %v1272 = vunpack.c.l.b16 %v1176
      %v1273 = vunpack.c.l.b16 %v1177
      %v1274 = vunpack.c.l.b16 %v1178
      %v1275 = vunpack.c.l.b16 %v1179
      %v1276 = vunpack.c.l.b16 %v1180
      %v1277 = vunpack.c.l.b16 %v1181
      %v1278 = vunpack.c.l.b16 %v1182
      %v1279 = vunpack.c.l.b16 %v1183
      %v1280 = vunpack.c.l.b16 %v1184
      %v1281 = vunpack.c.l.b16 %v1185
      %v1282 = vunpack.c.l.b16 %v1186
      %v1283 = vunpack.c.l.b16 %v1187
      %v1284 = vunpack.c.l.b16 %v1188
      %v1285 = vunpack.c.l.b16 %v1189
      %v1286 = vunpack.c.l.b16 %v1190
      %v1287 = vunpack.c.l.b16 %v1191
      %v1288 = vunpack.c.l.b16 %v1192
      %v1289 = vunpack.c.l.b16 %v1193
      %v1290 = vunpack.c.l.b16 %v1194
      %v1291 = vunpack.c.l.b16 %v1195
      %v1292 = vunpack.c.l.b16 %v1196
      %v1293 = vunpack.c.l.b16 %v1197
      %v1294 = vunpack.c.l.b16 %v1198
      %v1295 = vunpack.c.l.b16 %v1199
      %v1296 = vunpack.c.l.b16 %v1200
      %v1297 = vunpack.c.l.b16 %v1201
      %v1298 = vunpack.c.l.b16 %v1202
      %v1299 = vunpack.c.l.b16 %v1203
      %v1300 = vunpack.c.l.b16 %v1204
      %v1301 = vunpack.c.l.b16 %v1205
      %v1302 = vunpack.c.l.b16 %v1206
      %v1303 = vunpack.c.l.b16 %v1207
      %v1304 = vunpack.c.l.b16 %v1208
      %v1305 = vunpack.c.l.b16 %v1209
      %v1306 = vunpack.c.l.b16 %v1210
      %v1307 = vunpack.c.l.b16 %v1211
      %v1308 = vunpack.c.l.b16 %v1212
      %v1309 = vunpack.c.l.b16 %v1213
      %v1310 = vunpack.c.l.b16 %v1214
      %v1311 = vunpack.c.l.b16 %v1215
      %v1312 = vpack.c.b16 %v1265, %v1264
      %v1313 = vpack.c.b16 %v1267, %v1266
      %v1314 = vpack.c.b16 %v1269, %v1268
      %v1315 = vpack.c.b16 %v1271, %v1270
      %v1316 = vpack.c.b16 %v1273, %v1272
      %v1317 = vpack.c.b16 %v1275, %v1274
      %v1318 = vpack.c.b16 %v1277, %v1276
      %v1319 = vpack.c.b16 %v1279, %v1278
      %v1320 = vpack.c.b16 %v1281, %v1280
      %v1321 = vpack.c.b16 %v1283, %v1282
      %v1322 = vpack.c.b16 %v1285, %v1284
      %v1323 = vpack.c.b16 %v1287, %v1286
      %v1324 = vpack.c.b16 %v1289, %v1288
      %v1325 = vpack.c.b16 %v1291, %v1290
      %v1326 = vpack.c.b16 %v1293, %v1292
      %v1327 = vpack.c.b16 %v1295, %v1294
      %v1328 = vpack.c.b16 %v1297, %v1296
      %v1329 = vpack.c.b16 %v1299, %v1298
      %v1330 = vpack.c.b16 %v1301, %v1300
      %v1331 = vpack.c.b16 %v1303, %v1302
      %v1332 = vpack.c.b16 %v1305, %v1304
      %v1333 = vpack.c.b16 %v1307, %v1306
      %v1334 = vpack.c.b16 %v1309, %v1308
      %v1335 = vpack.c.b16 %v1311, %v1310
      %1360 = vmatprep.subr.bf16.mxu0 0
      %1361 = vmatpush1.bf16.msra.mxu0 %v1312
      %1362 = vmatprep.subr.bf16.mxu0 0
      %1363 = vmatpush1.bf16.msra.mxu0 %v1313
      %1364 = vmatprep.subr.bf16.mxu0 0
      %1365 = vmatpush1.bf16.msra.mxu0 %v1314
      %1366 = vmatprep.subr.bf16.mxu0 0
      %1367 = vmatpush1.bf16.msra.mxu0 %v1315
      %1368 = vmatprep.subr.bf16.mxu0 0
      %1369 = vmatpush1.bf16.msra.mxu0 %v1316
      %1370 = vmatprep.subr.bf16.mxu0 0
      %1371 = vmatpush1.bf16.msra.mxu0 %v1317
      %1372 = vmatprep.subr.bf16.mxu0 0
      %1373 = vmatpush1.bf16.msra.mxu0 %v1318
      %1374 = vmatprep.subr.bf16.mxu0 0
      %1375 = vmatpush1.bf16.msra.mxu0 %v1319
      %1376 = vmatprep.subr.bf16.mxu0 0
      %1377 = vmatpush1.bf16.msra.mxu0 %v1320
      %1378 = vmatprep.subr.bf16.mxu0 0
      %1379 = vmatpush1.bf16.msra.mxu0 %v1321
      %1380 = vmatprep.subr.bf16.mxu0 0
      %1381 = vmatpush1.bf16.msra.mxu0 %v1322
      %1382 = vmatprep.subr.bf16.mxu0 0
      %1383 = vmatpush1.bf16.msra.mxu0 %v1323
      %1384 = vmatprep.subr.bf16.mxu0 0
      %1385 = vmatpush1.bf16.msra.mxu0 %v1324
      %1386 = vmatprep.subr.bf16.mxu0 0
      %1387 = vmatpush1.bf16.msra.mxu0 %v1325
      %1388 = vmatprep.subr.bf16.mxu0 0
      %1389 = vmatpush1.bf16.msra.mxu0 %v1326
      %1390 = vmatprep.subr.bf16.mxu0 0
      %1391 = vmatpush1.bf16.msra.mxu0 %v1327
      %1392 = vmatprep.mubr.bf16.mxu0 %v595
      %1393 = vmatmul.mubr.bf16.gmra.mrb[0].mxu0 %v594
      %v1394 = vpop.f32.mrb[0].mxu0
      %v1395 = vadd.f32 0.0, %v1394
      %v1396 = vpop.f32.mrb[0].mxu0
      %v1397 = vpop.f32.mrb[0].mxu0
      %v1398 = vadd.f32 0.0, %v1397
      %v1399 = vpop.f32.mrb[0].mxu0
      %1400 = vmatprep.mubr.bf16.mxu0 %v1165
      %1401 = vmatmul.mubr.bf16.gmra.mrb[0].mxu0 %v1164
      %v1402 = vpop.f32.mrb[0].mxu0
      %v1403 = vadd.f32 0.0, %v1402
      %v1404 = vpop.f32.mrb[0].mxu0
      %v1405 = vpop.f32.mrb[0].mxu0
      %v1406 = vadd.f32 0.0, %v1405
      %v1407 = vpop.f32.mrb[0].mxu0
      %1408 = vdwg.mxu0
      %1409 = vmatprep.subr.bf16.mxu0 0
      %1410 = vmatpush1.bf16.msra.mxu0 %v1328
      %1411 = vmatprep.subr.bf16.mxu0 0
      %1412 = vmatpush1.bf16.msra.mxu0 %v1329
      %1413 = vmatprep.subr.bf16.mxu0 0
      %1414 = vmatpush1.bf16.msra.mxu0 %v1330
      %1415 = vmatprep.subr.bf16.mxu0 0
      %1416 = vmatpush1.bf16.msra.mxu0 %v1331
      %1417 = vmatprep.subr.bf16.mxu0 0
      %1418 = vmatpush1.bf16.msra.mxu0 %v1332
      %1419 = vmatprep.subr.bf16.mxu0 0
      %1420 = vmatpush1.bf16.msra.mxu0 %v1333
      %1421 = vmatprep.subr.bf16.mxu0 0
      %1422 = vmatpush1.bf16.msra.mxu0 %v1334
      %1423 = vmatprep.subr.bf16.mxu0 0
      %1424 = vmatpush1.bf16.msra.mxu0 %v1335
      %1425 = vmatprep.subr.bf16.mxu0 0
      %1426 = vmatpush1.bf16.msra.mxu0 0
      %1427 = vmatprep.subr.bf16.mxu0 0
      %1428 = vmatpush1.bf16.msra.mxu0 0
      %1429 = vmatprep.subr.bf16.mxu0 0
      %1430 = vmatpush1.bf16.msra.mxu0 0
      %1431 = vmatprep.subr.bf16.mxu0 0
      %1432 = vmatpush1.bf16.msra.mxu0 0
      %1433 = vmatprep.subr.bf16.mxu0 0
      %1434 = vmatpush1.bf16.msra.mxu0 0
      %1435 = vmatprep.subr.bf16.mxu0 0
      %1436 = vmatpush1.bf16.msra.mxu0 0
      %1437 = vmatprep.subr.bf16.mxu0 0
      %1438 = vmatpush1.bf16.msra.mxu0 0
      %1439 = vmatprep.subr.bf16.mxu0 0
      %1440 = vmatpush1.bf16.msra.mxu0 0
      %1441 = vmatprep.mubr.bf16.mxu0 0
      %1442 = vmatmul.mubr.bf16.gmra.mrb[0].mxu0 %v596
      %v1443 = vpop.f32.mrb[0].mxu0
      %v1444 = vadd.f32 %v1395, %v1443
      %v1445 = vpop.f32.mrb[0].mxu0
      %v1446 = vpop.f32.mrb[0].mxu0
      %v1447 = vadd.f32 %v1398, %v1446
      %v1448 = vpop.f32.mrb[0].mxu0
      %1449 = vmatprep.mubr.bf16.mxu0 0
      %1450 = vmatmul.mubr.bf16.gmra.mrb[0].mxu0 %v1166
      %v1451 = vpop.f32.mrb[0].mxu0
      %v1452 = vadd.f32 %v1403, %v1451
      %v1453 = vpop.f32.mrb[0].mxu0
      %v1454 = vpop.f32.mrb[0].mxu0
      %v1455 = vadd.f32 %v1406, %v1454
      %v1456 = vpop.f32.mrb[0].mxu0
      %1457 = vdwg.mxu0
      %v1458 = vadd.f32 %v1150, %v1444
      %v1459 = vadd.f32 %v1153, %v1447
      %v1460 = vadd.f32 %v1158, %v1452
      %v1461 = vadd.f32 %v1161, %v1455
      %v1462 = vld [vmem:[%s348] sm:$0x1]
      %v1464 = vlaneseq
      %v1465 = vshrl.u32 %v1464, 7
      %v1466 = vsub.s32 0, %v1465
      %v1467 = vrot.slane %v1462, %v1466
      %v1469 = vadd.f32 %v1458, %v1467
      %v1470 = vadd.f32 %v1459, %v1467
      %v1471 = vadd.f32 %v1460, %v1467
      %v1472 = vadd.f32 %v1461, %v1467
      %v1473 = vadd.f32 %v1469, %v1470
      %v1474 = vadd.f32 %v1473, %v1471
      %v1475 = vadd.f32 %v1474, %v1472
      %v1476 = vrot.slane %v1475, 4
      %v1477 = vadd.f32 %v1475, %v1476
      %v1478 = vrot.slane %v1477, 2
      %v1479 = vadd.f32 %v1477, %v1478
      %v1480 = vrot.slane %v1479, 1
      %v1481 = vadd.f32 %v1479, %v1480
      %1482 = vst [vmem:[%s370] sm:$0x1] %v1481
      %v1483 = vmul.f32 %v1469, %v1469
      %v1484 = vmul.f32 %v1470, %v1470
      %v1485 = vmul.f32 %v1471, %v1471
      %v1486 = vmul.f32 %v1472, %v1472
      %v1487 = vadd.f32 %v1483, %v1484
      %v1488 = vadd.f32 %v1487, %v1485
      %v1489 = vadd.f32 %v1488, %v1486
      %v1490 = vrot.slane %v1489, 4
      %v1491 = vadd.f32 %v1489, %v1490
      %v1492 = vrot.slane %v1491, 2
      %v1493 = vadd.f32 %v1491, %v1492
      %v1494 = vrot.slane %v1493, 1
      %v1495 = vadd.f32 %v1493, %v1494
      %1496 = vst [vmem:[%s370 + $0x1] sm:$0x1] %v1495
      %v1497 = vpack.c.bf16 %v1469, %v1469
      %v1498 = vpack.c.bf16 %v1470, %v1470
      %v1499 = vpack.c.bf16 %v1471, %v1471
      %v1500 = vpack.c.bf16 %v1472, %v1472
      %1501 = vst [vmem:[%s360] sm:$0xf] %v1497
      %1502 = vst [vmem:[%s360 + $0x4] sm:$0xf] %v1498
      %1503 = vst [vmem:[%s360 + $0x8] sm:$0xf] %v1499
      %1504 = vst [vmem:[%s360 + $0xc] sm:$0xf] %v1500
      %s1505 = smul.u32 4, %s23
      %p1506 = scmp.lt.s32.totalorder %s22, 1
      %s1507 = scalar_select %p1506, %s22, 1
      %p1508 = scmp.lt.s32.totalorder %s1505, 7
      %s1509 = scalar_select %p1508, %s1505, 7
      %p1510 = scmp.lt.s32.totalorder %s24, 0
      %s1511 = scalar_select %p1510, %s24, 0
      %s1512 = sadd.s32 %s1511, %s1509
      %s1513 = smul.addr %s1507, 8
      %s1514 = sadd.s32 %s1512, %s1513
      %s1515 = smul.addr %s1514, 4
      %s1516 = scalar_lea.vmem %s4, %s1515
      %s1517 = smul.u32 %s22, 2
      %s1518 = sadd.s32 %s1517, %s23
      %p1519 = scmp.lt.s32.totalorder %s1518, 3
      %s1520 = scalar_select %p1519, %s1518, 3
      %p1521 = scmp.lt.s32.totalorder %s24, 0
      %s1522 = scalar_select %p1521, %s24, 0
      %s1523 = sadd.s32 %s1522, %s1520
      %s1524 = smul.addr %s1523, 2
      %s1525 = scalar_lea.vmem %s5, %s1524
      // Predicated region
      $region41: #{down_pallas.2} parent=35 // pred_check
        %p1526 = pneg %p168
      $region42: #{down_pallas.2} parent=35 // pred_check_branch
        %1528 = sbr.rel (%p1526) target = $region44
      $region43: #{down_pallas.2} parent=35 // pred_region
        %s1529 = smul.u32 4, %s23
      $region44: #{down_pallas.2} parent=35 // pred_fallthru
        _
      // Predicated region
      $region45: #{down_pallas.2} parent=35 // pred_check
        %p1530 = pneg %p200
      $region46: #{down_pallas.2} parent=35 // pred_check_branch
        %1532 = sbr.rel (%p1530) target = $region48
      $region47: #{down_pallas.2} parent=35 // pred_region
        %s1533 = smul.u32 %s22, 2
        %s1534 = sadd.s32 %s1533, %s23
      $region48: #{down_pallas.2} parent=35 // pred_fallthru
        _
    $region36: #{down_pallas.2} parent=5 // pred_fallthru
      _
    %p1535 = scmp.le.s32.totalorder 2, %s12
    // Predicated region
    $region49: #{down_pallas.2} parent=5 // pred_check
      %p1536 = pneg %p1535
    $region50: #{down_pallas.2} parent=5 // pred_check_branch
      %1538 = sbr.rel (%p1536) target = $region52
    $region51: #{down_pallas.2} parent=5 // pred_region
      %s1539 = ssub.s32 %s12, 2
      // Predicated region
      $region53: #{down_pallas.2} parent=51 // pred_check
        %p1540 = pneg %p174
      $region54: #{down_pallas.2} parent=51 // pred_check_branch
        %1542 = sbr.rel (%p1540) target = $region56
      $region55: #{down_pallas.2} parent=51 // pred_region
        %s1543 = smul.u32 4, %s26
        %p1544 = scmp.lt.s32.totalorder %s25, 1
        %s1545 = scalar_select %p1544, %s25, 1
        %p1546 = scmp.lt.s32.totalorder %s1543, 7
        %s1547 = scalar_select %p1546, %s1543, 7
        %p1548 = scmp.lt.s32.totalorder %s27, 0
        %s1549 = scalar_select %p1548, %s27, 0
        %s1550 = sadd.s32 %s1549, %s1547
        %s1551 = smul.addr %s1545, 8
        %s1552 = sadd.s32 %s1550, %s1551
        %s1553 = smul.addr %s1552, 4
        %s1554 = scalar_lea.vmem %s4, %s1553
      $region56: #{down_pallas.2} parent=51 // pred_fallthru
        _
      // Predicated region
      $region57: #{down_pallas.2} parent=51 // pred_check
        %p1555 = pneg %p206
      $region58: #{down_pallas.2} parent=51 // pred_check_branch
        %1557 = sbr.rel (%p1555) target = $region60
      $region59: #{down_pallas.2} parent=51 // pred_region
        %s1558 = smul.u32 %s25, 2
        %s1559 = sadd.s32 %s1558, %s26
        %p1560 = scmp.lt.s32.totalorder %s1559, 3
        %s1561 = scalar_select %p1560, %s1559, 3
        %p1562 = scmp.lt.s32.totalorder %s27, 0
        %s1563 = scalar_select %p1562, %s27, 0
        %s1564 = sadd.s32 %s1563, %s1561
        %s1565 = smul.addr %s1564, 2
        %s1566 = scalar_lea.vmem %s5, %s1565
      $region60: #{down_pallas.2} parent=51 // pred_fallthru
        _
    $region52: #{down_pallas.2} parent=5 // pred_fallthru
      _
  $region6: #{down_pallas.2} parent=0 // loop_footer
    %s16 = sadd.s32 1, %s12
  $region7: #{down_pallas.2} parent=0 // loop_footer_branch
    %11 = sbr.rel target = $region3
  $region8: #{down_pallas.2} parent=0 // loop_exit
    _

// kernel: down_pallas.3
$region0: #{down_pallas.3}
  #allocation0 [shape = 'u32[]', space=smem, size = 0x4, offset = 0x4, fixed_abs, tag = 'smem constant byte address 0x4 - core index']
  #allocation1 [shape = 'u32[144,128]{1,0:T(1,128)}', space=vmem, size = 0x12000, scoped, tag = 'internal scratch']
  #allocation2 [shape = 'bf16[48,384]{1,0:T(16,128)(2,1)}', space=vmem, size = 0x9000, scoped, tag = 'scratch operand']
  %s0 = inlined_call_operand.vmem [shape: bf16[2,8,8,128], index: 0, kind: input, shape index: {}]
  %s1 = inlined_call_operand.vmem [shape: bf16[4,2,8,128], index: 1, kind: input, shape index: {}]
  %s2 = inlined_call_operand.vmem [shape: f32[1,128], index: 2, kind: input, shape index: {}]
  %s3 = inlined_call_operand.vmem [shape: f32[1,128], index: 3, kind: input, shape index: {}]
  %s4 = inlined_call_operand.vmem [shape: bf16[3,384,128], index: 4, kind: input, shape index: {}]
  %s5 = inlined_call_operand.vmem [shape: f32[1,128], index: 5, kind: input, shape index: {}]
  %s6 = inlined_call_operand.vmem [shape: bf16[2,8,8,128], index: 6, kind: output, shape index: {0}]
  %s7 = inlined_call_operand.vmem [shape: f32[4,2,128], index: 7, kind: output, shape index: {1}]
  %8 = xla_tuple %s6, %s7
  %s9 = sld [smem:[#allocation0]]
  $region69: #{down_pallas.3} parent=0
    _
  %s11 = ssub.s32 1, %s9
  %s12 = scalar_select 0, %s11, %s9
  loop: start=0, step=1, limit=6
  $region2: #{down_pallas.3} parent=0 // loop_pre_header
    _
  $region3: #{down_pallas.3} parent=0 // loop_header
    %s14 = sphi 0, %s18
    %p15 = scmp.ge.s32.totalorder %s14, 6
    %s21 = sphi 0, %s40
    %s22 = sphi 0, %s36
    %s23 = sphi 0, %s32
    %s24 = sphi 0, %s21
    %s25 = sphi 0, %s22
    %s26 = sphi 0, %s23
    %s27 = sphi 0, %s24
    %s28 = sphi 0, %s25
    %s29 = sphi 0, %s26
    %s45 = sphi 0, %s47
    %s48 = sphi 0, %s45
    %s49 = sphi 0, %s48
    %s65 = sphi 0, %s49
    %s75 = sphi 0, %s77
    %s78 = sphi 0, %s75
    %s79 = sphi 0, %s78
    %s95 = sphi 0, %s79
    %s99 = sphi 0, %s99
    %s101 = sphi 0, %s99
    %s102 = sphi 0, %s101
    %s116 = sphi 0, %s102
    %s120 = sphi 0, %s120
    %s122 = sphi 0, %s120
    %s123 = sphi 0, %s122
    %s137 = sphi 0, %s123
    %s143 = sphi 0, %s145
    %s146 = sphi 0, %s143
    %s147 = sphi 0, %s146
    %s163 = sphi 0, %s147
    %s169 = sphi 0, %s171
    %s172 = sphi 0, %s169
    %s173 = sphi 0, %s172
    %s189 = sphi 0, %s173
    %s199 = sphi 0, %s201
    %s202 = sphi 0, %s199
    %s203 = sphi 0, %s202
    %s219 = sphi 0, %s203
    %s231 = sphi 0, %s233
    %s234 = sphi 0, %s231
    %s235 = sphi 0, %s234
    %s251 = sphi 0, %s235
  $region4: #{down_pallas.3} parent=0 // loop_header_branch
    %17 = sbr.rel (%p15) target = $region8
  $region5: #{down_pallas.3} parent=0 // loop_body
    %s19 = ssub.s32 %s14, 1
    %s20 = ssub.s32 %s14, 2
    %s30 = sadd.s32 1, %s23
    %p31 = scmp.ge.s32.totalorder %s30, 1
    %s32 = scalar_select %p31, 0, %s30
    %s33 = sadd.s32 1, %s22
    %s34 = scalar_select %p31, %s33, %s22
    %p35 = scmp.ge.s32.totalorder %s34, 2
    %s36 = scalar_select %p35, 0, %s34
    %s37 = sadd.s32 1, %s21
    %s38 = scalar_select %p35, %s37, %s21
    %p39 = scmp.ge.s32.totalorder %s38, 2
    %s40 = scalar_select %p39, 0, %s38
    %s41 = ssub.s32 %s21, %s40
    %s42 = ssub.s32 %s22, %s36
    %s43 = sor.u32 %s41, %s42
    %p44 = scmp.eq.s32.totalorder %s43, 0
    %s46 = sadd.s32 %s45, 1
    %s47 = scalar_select %p44, %s45, %s46
    %p50 = pneg %p44
    %p51 = scmp.eq.s32.totalorder %s14, 3
    %p52 = por %p50, %p51
    %p53 = scmp.ne.s32.totalorder %s45, %s48
    %p54 = scmp.eq.s32.totalorder %s14, 0
    %p55 = por %p53, %p54
    %p56 = scmp.ne.s32.totalorder %s45, %s48
    %p57 = scmp.eq.s32.totalorder %s19, 3
    %p58 = por %p56, %p57
    %p59 = scmp.ne.s32.totalorder %s48, %s49
    %p60 = scmp.eq.s32.totalorder %s19, 0
    %p61 = por %p59, %p60
    %p62 = scmp.ne.s32.totalorder %s48, %s49
    %p63 = scmp.eq.s32.totalorder %s20, 3
    %p64 = por %p62, %p63
    %p66 = scmp.ne.s32.totalorder %s49, %s65
    %p67 = scmp.eq.s32.totalorder %s20, 0
    %p68 = por %p66, %p67
    %s69 = smul.u32 %s21, 2
    %s70 = sadd.s32 %s69, %s22
    %s71 = smul.u32 %s40, 2
    %s72 = sadd.s32 %s71, %s36
    %s73 = ssub.s32 %s70, %s72
    %p74 = scmp.eq.s32.totalorder %s73, 0
    %s76 = sadd.s32 %s75, 1
    %s77 = scalar_select %p74, %s75, %s76
    %p80 = pneg %p74
    %p81 = scmp.eq.s32.totalorder %s14, 3
    %p82 = por %p80, %p81
    %p83 = scmp.ne.s32.totalorder %s75, %s78
    %p84 = scmp.eq.s32.totalorder %s14, 0
    %p85 = por %p83, %p84
    %p86 = scmp.ne.s32.totalorder %s75, %s78
    %p87 = scmp.eq.s32.totalorder %s19, 3
    %p88 = por %p86, %p87
    %p89 = scmp.ne.s32.totalorder %s78, %s79
    %p90 = scmp.eq.s32.totalorder %s19, 0
    %p91 = por %p89, %p90
    %p92 = scmp.ne.s32.totalorder %s78, %s79
    %p93 = scmp.eq.s32.totalorder %s20, 3
    %p94 = por %p92, %p93
    %p96 = scmp.ne.s32.totalorder %s79, %s95
    %p97 = scmp.eq.s32.totalorder %s20, 0
    %p98 = por %p96, %p97
    %s100 = sadd.s32 %s99, 1
    %p103 = scmp.eq.s32.totalorder %s14, 3
    %p104 = scmp.ne.s32.totalorder %s99, %s101
    %p105 = scmp.eq.s32.totalorder %s14, 0
    %p106 = por %p104, %p105
    %p107 = scmp.ne.s32.totalorder %s99, %s101
    %p108 = scmp.eq.s32.totalorder %s19, 3
    %p109 = por %p107, %p108
    %p110 = scmp.ne.s32.totalorder %s101, %s102
    %p111 = scmp.eq.s32.totalorder %s19, 0
    %p112 = por %p110, %p111
    %p113 = scmp.ne.s32.totalorder %s101, %s102
    %p114 = scmp.eq.s32.totalorder %s20, 3
    %p115 = por %p113, %p114
    %p117 = scmp.ne.s32.totalorder %s102, %s116
    %p118 = scmp.eq.s32.totalorder %s20, 0
    %p119 = por %p117, %p118
    %s121 = sadd.s32 %s120, 1
    %p124 = scmp.eq.s32.totalorder %s14, 3
    %p125 = scmp.ne.s32.totalorder %s120, %s122
    %p126 = scmp.eq.s32.totalorder %s14, 0
    %p127 = por %p125, %p126
    %p128 = scmp.ne.s32.totalorder %s120, %s122
    %p129 = scmp.eq.s32.totalorder %s19, 3
    %p130 = por %p128, %p129
    %p131 = scmp.ne.s32.totalorder %s122, %s123
    %p132 = scmp.eq.s32.totalorder %s19, 0
    %p133 = por %p131, %p132
    %p134 = scmp.ne.s32.totalorder %s122, %s123
    %p135 = scmp.eq.s32.totalorder %s20, 3
    %p136 = por %p134, %p135
    %p138 = scmp.ne.s32.totalorder %s123, %s137
    %p139 = scmp.eq.s32.totalorder %s20, 0
    %p140 = por %p138, %p139
    %s141 = ssub.s32 %s23, %s32
    %p142 = scmp.eq.s32.totalorder %s141, 0
    %s144 = sadd.s32 %s143, 1
    %s145 = scalar_select %p142, %s143, %s144
    %p148 = pneg %p142
    %p149 = scmp.eq.s32.totalorder %s14, 3
    %p150 = por %p148, %p149
    %p151 = scmp.ne.s32.totalorder %s143, %s146
    %p152 = scmp.eq.s32.totalorder %s14, 0
    %p153 = por %p151, %p152
    %p154 = scmp.ne.s32.totalorder %s143, %s146
    %p155 = scmp.eq.s32.totalorder %s19, 3
    %p156 = por %p154, %p155
    %p157 = scmp.ne.s32.totalorder %s146, %s147
    %p158 = scmp.eq.s32.totalorder %s19, 0
    %p159 = por %p157, %p158
    %p160 = scmp.ne.s32.totalorder %s146, %s147
    %p161 = scmp.eq.s32.totalorder %s20, 3
    %p162 = por %p160, %p161
    %p164 = scmp.ne.s32.totalorder %s147, %s163
    %p165 = scmp.eq.s32.totalorder %s20, 0
    %p166 = por %p164, %p165
    %s167 = ssub.s32 %s23, %s32
    %p168 = scmp.eq.s32.totalorder %s167, 0
    %s170 = sadd.s32 %s169, 1
    %s171 = scalar_select %p168, %s169, %s170
    %p174 = pneg %p168
    %p175 = scmp.eq.s32.totalorder %s14, 3
    %p176 = por %p174, %p175
    %p177 = scmp.ne.s32.totalorder %s169, %s172
    %p178 = scmp.eq.s32.totalorder %s14, 0
    %p179 = por %p177, %p178
    %p180 = scmp.ne.s32.totalorder %s169, %s172
    %p181 = scmp.eq.s32.totalorder %s19, 3
    %p182 = por %p180, %p181
    %p183 = scmp.ne.s32.totalorder %s172, %s173
    %p184 = scmp.eq.s32.totalorder %s19, 0
    %p185 = por %p183, %p184
    %p186 = scmp.ne.s32.totalorder %s172, %s173
    %p187 = scmp.eq.s32.totalorder %s20, 3
    %p188 = por %p186, %p187
    %p190 = scmp.ne.s32.totalorder %s173, %s189
    %p191 = scmp.eq.s32.totalorder %s20, 0
    %p192 = por %p190, %p191
    %s193 = ssub.s32 %s21, %s40
    %s194 = ssub.s32 %s22, %s36
    %s195 = sor.u32 %s193, %s194
    %s196 = ssub.s32 %s23, %s32
    %s197 = sor.u32 %s195, %s196
    %p198 = scmp.eq.s32.totalorder %s197, 0
    %s200 = sadd.s32 %s199, 1
    %s201 = scalar_select %p198, %s199, %s200
    %p204 = pneg %p198
    %p205 = scmp.eq.s32.totalorder %s14, 3
    %p206 = por %p204, %p205
    %p207 = scmp.ne.s32.totalorder %s199, %s202
    %p208 = scmp.eq.s32.totalorder %s14, 0
    %p209 = por %p207, %p208
    %p210 = scmp.ne.s32.totalorder %s199, %s202
    %p211 = scmp.eq.s32.totalorder %s19, 3
    %p212 = por %p210, %p211
    %p213 = scmp.ne.s32.totalorder %s202, %s203
    %p214 = scmp.eq.s32.totalorder %s19, 0
    %p215 = por %p213, %p214
    %p216 = scmp.ne.s32.totalorder %s202, %s203
    %p217 = scmp.eq.s32.totalorder %s20, 3
    %p218 = por %p216, %p217
    %p220 = scmp.ne.s32.totalorder %s203, %s219
    %p221 = scmp.eq.s32.totalorder %s20, 0
    %p222 = por %p220, %p221
    %s223 = smul.u32 %s21, 2
    %s224 = sadd.s32 %s223, %s22
    %s225 = smul.u32 %s40, 2
    %s226 = sadd.s32 %s225, %s36
    %s227 = ssub.s32 %s224, %s226
    %s228 = ssub.s32 %s23, %s32
    %s229 = sor.u32 %s227, %s228
    %p230 = scmp.eq.s32.totalorder %s229, 0
    %s232 = sadd.s32 %s231, 1
    %s233 = scalar_select %p230, %s231, %s232
    %p236 = pneg %p230
    %p237 = scmp.eq.s32.totalorder %s14, 3
    %p238 = por %p236, %p237
    %p239 = scmp.ne.s32.totalorder %s231, %s234
    %p240 = scmp.eq.s32.totalorder %s14, 0
    %p241 = por %p239, %p240
    %p242 = scmp.ne.s32.totalorder %s231, %s234
    %p243 = scmp.eq.s32.totalorder %s19, 3
    %p244 = por %p242, %p243
    %p245 = scmp.ne.s32.totalorder %s234, %s235
    %p246 = scmp.eq.s32.totalorder %s19, 0
    %p247 = por %p245, %p246
    %p248 = scmp.ne.s32.totalorder %s234, %s235
    %p249 = scmp.eq.s32.totalorder %s20, 3
    %p250 = por %p248, %p249
    %p252 = scmp.ne.s32.totalorder %s235, %s251
    %p253 = scmp.eq.s32.totalorder %s20, 0
    %p254 = por %p252, %p253
    %p255 = scmp.le.s32.totalorder 1, %s14
    %p256 = scmp.lt.s32.totalorder %s14, 5
    %p257 = pnand %p255, %p256
    %p258 = pneg %p257
    // Predicated region
    $region9: #{down_pallas.3} parent=5 // pred_check
      _
    $region10: #{down_pallas.3} parent=5 // pred_check_branch
      %260 = sbr.rel (%p257) target = $region12
    $region11: #{down_pallas.3} parent=5 // pred_region
      %s261 = ssub.s32 %s14, 1
      // Predicated region
      $region13: #{down_pallas.3} parent=11 // pred_check
        %p262 = pneg %p112
      $region14: #{down_pallas.3} parent=11 // pred_check_branch
        %264 = sbr.rel (%p262) target = $region16
      $region15: #{down_pallas.3} parent=11 // pred_region
        _
      $region16: #{down_pallas.3} parent=11 // pred_fallthru
        _
      // Predicated region
      $region17: #{down_pallas.3} parent=11 // pred_check
        %p265 = pneg %p133
      $region18: #{down_pallas.3} parent=11 // pred_check_branch
        %267 = sbr.rel (%p265) target = $region20
      $region19: #{down_pallas.3} parent=11 // pred_region
        _
      $region20: #{down_pallas.3} parent=11 // pred_fallthru
        _
      // Predicated region
      $region21: #{down_pallas.3} parent=11 // pred_check
        %p268 = pneg %p159
      $region22: #{down_pallas.3} parent=11 // pred_check_branch
        %270 = sbr.rel (%p268) target = $region24
      $region23: #{down_pallas.3} parent=11 // pred_region
        %p271 = scmp.lt.s32.totalorder %s26, 0
        %s272 = scalar_select %p271, %s26, 0
        %s273 = smul.addr %s272, 4
        %s274 = scalar_lea.vmem %s4, %s273
      $region24: #{down_pallas.3} parent=11 // pred_fallthru
        _
      // Predicated region
      $region25: #{down_pallas.3} parent=11 // pred_check
        %p275 = pneg %p185
      $region26: #{down_pallas.3} parent=11 // pred_check_branch
        %277 = sbr.rel (%p275) target = $region28
      $region27: #{down_pallas.3} parent=11 // pred_region
        %p278 = scmp.lt.s32.totalorder %s26, 0
        %s279 = scalar_select %p278, %s26, 0
        %s280 = scalar_lea.vmem %s5, %s279
      $region28: #{down_pallas.3} parent=11 // pred_fallthru
        _
    $region12: #{down_pallas.3} parent=5 // pred_fallthru
      _
    %p281 = scmp.lt.s32.totalorder %s14, 4
    // Predicated region
    $region29: #{down_pallas.3} parent=5 // pred_check
      %p282 = pneg %p281
    $region30: #{down_pallas.3} parent=5 // pred_check_branch
      %284 = sbr.rel (%p282) target = $region32
    $region31: #{down_pallas.3} parent=5 // pred_region
      // Predicated region
      $region33: #{down_pallas.3} parent=31 // pred_check
        %p285 = pneg %p55
      $region34: #{down_pallas.3} parent=31 // pred_check_branch
        %287 = sbr.rel (%p285) target = $region36
      $region35: #{down_pallas.3} parent=31 // pred_region
        %s288 = smul.u32 4, %s22
        %p289 = scmp.lt.s32.totalorder %s21, 1
        %s290 = scalar_select %p289, %s21, 1
        %p291 = scmp.lt.s32.totalorder %s288, 7
        %s292 = scalar_select %p291, %s288, 7
        %s293 = smul.addr %s290, 8
        %s294 = sadd.s32 %s292, %s293
        %s295 = smul.addr %s294, 4
        %s296 = scalar_lea.vmem %s0, %s295
        %s297 = smul.u32 4, %s22
      $region36: #{down_pallas.3} parent=31 // pred_fallthru
        _
      // Predicated region
      $region37: #{down_pallas.3} parent=31 // pred_check
        %p298 = pneg %p85
      $region38: #{down_pallas.3} parent=31 // pred_check_branch
        %300 = sbr.rel (%p298) target = $region40
      $region39: #{down_pallas.3} parent=31 // pred_region
        %s301 = smul.u32 %s21, 2
        %s302 = sadd.s32 %s301, %s22
        %p303 = scmp.lt.s32.totalorder %s302, 3
        %s304 = scalar_select %p303, %s302, 3
        %s305 = smul.addr %s304, 2
        %s306 = smul.addr %s305, 4
        %s307 = scalar_lea.vmem %s1, %s306
        %s308 = smul.u32 %s21, 2
        %s309 = sadd.s32 %s308, %s22
      $region40: #{down_pallas.3} parent=31 // pred_fallthru
        _
    $region32: #{down_pallas.3} parent=5 // pred_fallthru
      _
    %p310 = scmp.le.s32.totalorder 1, %s14
    %p311 = scmp.lt.s32.totalorder %s14, 5
    %p312 = pnand %p310, %p311
    %p313 = pneg %p312
    // Predicated region
    $region41: #{down_pallas.3} parent=5 // pred_check
      _
    $region42: #{down_pallas.3} parent=5 // pred_check_branch
      %315 = sbr.rel (%p312) target = $region44
    $region43: #{down_pallas.3} parent=5 // pred_region
      %s316 = ssub.s32 %s14, 1
      %s317 = smul.u32 4, %s25
      %p318 = scmp.lt.s32.totalorder %s24, 1
      %s319 = scalar_select %p318, %s24, 1
      %p320 = scmp.lt.s32.totalorder %s317, 7
      %s321 = scalar_select %p320, %s317, 7
      %s322 = smul.addr %s319, 8
      %s323 = sadd.s32 %s321, %s322
      %s324 = smul.addr %s323, 4
      %s325 = scalar_lea.vmem %s0, %s324
      %p326 = pneg %p61
      %p327 = pneg %p58
      %s328 = smul.u32 %s24, 2
      %s329 = sadd.s32 %s328, %s25
      %p330 = scmp.lt.s32.totalorder %s329, 3
      %s331 = scalar_select %p330, %s329, 3
      %s332 = smul.addr %s331, 2
      %s333 = smul.addr %s332, 4
      %s334 = scalar_lea.vmem %s1, %s333
      %p335 = pneg %p91
      %p336 = pneg %p88
      %p337 = pneg %p112
      %p338 = pneg %p109
      %p339 = pneg %p133
      %p340 = pneg %p130
      %p341 = scmp.lt.s32.totalorder %s26, 0
      %s342 = scalar_select %p341, %s26, 0
      %s343 = smul.addr %s342, 4
      %s344 = scalar_lea.vmem %s4, %s343
      %p345 = pneg %p159
      %p346 = pneg %p156
      %p347 = scmp.lt.s32.totalorder %s26, 0
      %s348 = scalar_select %p347, %s26, 0
      %s349 = scalar_lea.vmem %s5, %s348
      %p350 = pneg %p185
      %p351 = pneg %p182
      %p352 = pneg %p215
      %p353 = pneg %p212
      %s354 = smul.u32 4, %s25
      %p355 = scmp.lt.s32.totalorder %s24, 1
      %s356 = scalar_select %p355, %s24, 1
      %p357 = scmp.lt.s32.totalorder %s354, 7
      %s358 = scalar_select %p357, %s354, 7
      %p359 = scmp.lt.s32.totalorder %s26, 0
      %s360 = scalar_select %p359, %s26, 0
      %s361 = sadd.s32 %s360, %s358
      %s362 = smul.addr %s356, 8
      %s363 = sadd.s32 %s361, %s362
      %s364 = smul.addr %s363, 4
      %s365 = scalar_lea.vmem %s6, %s364
      %p366 = pneg %p247
      %p367 = pneg %p244
      %s368 = smul.u32 %s24, 2
      %s369 = sadd.s32 %s368, %s25
      %p370 = scmp.lt.s32.totalorder %s369, 3
      %s371 = scalar_select %p370, %s369, 3
      %p372 = scmp.lt.s32.totalorder %s26, 0
      %s373 = scalar_select %p372, %s26, 0
      %s374 = sadd.s32 %s373, %s371
      %s375 = smul.addr %s374, 2
      %s376 = scalar_lea.vmem %s7, %s375
      %s377 = smul.u32 4, %s25
      %p378 = scmp.lt.s32.totalorder %s24, 1
      %s379 = scalar_select %p378, %s24, 1
      %p380 = scmp.lt.s32.totalorder %s377, 7
      %s381 = scalar_select %p380, %s377, 7
      %s382 = smul.addr %s379, 8
      %s383 = sadd.s32 %s381, %s382
      %s384 = smul.addr %s383, 4
      %s385 = scalar_lea.vmem %s0, %s384
      %s386 = smul.u32 4, %s25
      %s387 = smul.u32 %s24, 2
      %s388 = sadd.s32 %s387, %s25
      %p389 = scmp.lt.s32.totalorder %s388, 3
      %s390 = scalar_select %p389, %s388, 3
      %s391 = smul.addr %s390, 2
      %s392 = smul.addr %s391, 4
      %s393 = scalar_lea.vmem %s1, %s392
      %s394 = smul.u32 %s24, 2
      %s395 = sadd.s32 %s394, %s25
      %p396 = scmp.lt.s32.totalorder %s26, 0
      %s397 = scalar_select %p396, %s26, 0
      %s398 = smul.addr %s397, 4
      %s399 = scalar_lea.vmem %s4, %s398
      %p400 = scmp.lt.s32.totalorder %s26, 0
      %s401 = scalar_select %p400, %s26, 0
      %s402 = scalar_lea.vmem %s5, %s401
      %s403 = smul.u32 4, %s25
      %p404 = scmp.lt.s32.totalorder %s24, 1
      %s405 = scalar_select %p404, %s24, 1
      %p406 = scmp.lt.s32.totalorder %s403, 7
      %s407 = scalar_select %p406, %s403, 7
      %p408 = scmp.lt.s32.totalorder %s26, 0
      %s409 = scalar_select %p408, %s26, 0
      %s410 = sadd.s32 %s409, %s407
      %s411 = smul.addr %s405, 8
      %s412 = sadd.s32 %s410, %s411
      %s413 = smul.addr %s412, 4
      %s414 = scalar_lea.vmem %s6, %s413
      %s415 = smul.u32 4, %s25
      %s416 = smul.u32 %s24, 2
      %s417 = sadd.s32 %s416, %s25
      %p418 = scmp.lt.s32.totalorder %s417, 3
      %s419 = scalar_select %p418, %s417, 3
      %p420 = scmp.lt.s32.totalorder %s26, 0
      %s421 = scalar_select %p420, %s26, 0
      %s422 = sadd.s32 %s421, %s419
      %s423 = smul.addr %s422, 2
      %s424 = scalar_lea.vmem %s7, %s423
      %s425 = smul.u32 %s24, 2
      %s426 = sadd.s32 %s425, %s25
      %p428 = scmp.eq.s32.totalorder %s26, 0
      // Predicated region
      $region45: #{down_pallas.3} parent=43 // pred_check
        %p429 = pneg %p428
      $region46: #{down_pallas.3} parent=43 // pred_check_branch
        %431 = sbr.rel (%p429) target = $region48
      $region47: #{down_pallas.3} parent=43 // pred_region
        %v432 = vld [vmem:[%s385] sm:$0xf]
        %v433 = vld [vmem:[%s385 + $0x4] sm:$0xf]
        %v434 = vld [vmem:[%s385 + $0x8] sm:$0xf]
        %v435 = vld [vmem:[%s385 + $0xc] sm:$0xf]
        %v436 = vunpack.c.l.bf16 %v432
        %v437 = vunpack.c.l.bf16 %v433
        %v438 = vunpack.c.l.bf16 %v434
        %v439 = vunpack.c.l.bf16 %v435
        %v440 = vld [vmem:[%s2] sm:$0x1]
        %v442 = vlaneseq
        %v443 = vshrl.u32 %v442, 7
        %v444 = vsub.s32 0, %v443
        %v445 = vrot.slane %v440, %v444
        %v447 = vmul.f32 %v436, %v445
        %v448 = vmul.f32 %v437, %v445
        %v449 = vmul.f32 %v438, %v445
        %v450 = vmul.f32 %v439, %v445
        %v451 = vld [vmem:[%s3] sm:$0x1]
        %v453 = vlaneseq
        %v454 = vshrl.u32 %v453, 7
        %v455 = vsub.s32 0, %v454
        %v456 = vrot.slane %v451, %v455
        %v458 = vadd.f32 %v447, %v456
        %v459 = vadd.f32 %v448, %v456
        %v460 = vadd.f32 %v449, %v456
        %v461 = vadd.f32 %v450, %v456
        %v462 = vmax.f32 %v458, 0.0
        %v463 = vmax.f32 %v459, 0.0
        %v464 = vmax.f32 %v460, 0.0
        %v465 = vmax.f32 %v461, 0.0
        %v466 = vpack.c.bf16 %v462, %v462
        %v467 = vpack.c.bf16 %v463, %v463
        %v468 = vpack.c.bf16 %v464, %v464
        %v469 = vpack.c.bf16 %v465, %v465
        %v470 = vld [vmem:[%s393] sm:$0xf]
        %v471 = vld [vmem:[%s393 + $0x4] sm:$0xf]
        %v478 = vunpack.c.l.b16 %v470
        %v479 = vunpack.c.l.b16 %v466
        %v480 = vunpack.c.l.b16 %v467
        %v481 = vunpack.c.l.b16 %v468
        %v482 = vunpack.c.l.b16 %v469
        %v483 = vunpack.c.l.b16 %v471
        %v484 = vpack.c.b16 %v478, %v478
        %v485 = vpack.c.b16 %v479, %v479
        %v486 = vpack.c.b16 %v480, %v480
        %v487 = vpack.c.b16 %v481, %v481
        %v488 = vpack.c.b16 %v482, %v482
        %v489 = vpack.c.b16 %v483, %v483
        %v491 = vshrl.u32 %v484, 16
        %v493 = vrot.slane %v491, 7
        %v494 = vshll.u32 %v484, 16
        %v496 = vor.u32 %v493, %v494
        %v498 = vshrl.u32 %v485, 16
        %v500 = vrot.slane %v498, 7
        %v501 = vshll.u32 %v485, 16
        %v503 = vor.u32 %v500, %v501
        %v505 = vshrl.u32 %v486, 16
        %v507 = vrot.slane %v505, 7
        %v508 = vshll.u32 %v486, 16
        %v510 = vor.u32 %v507, %v508
        %v512 = vshrl.u32 %v487, 16
        %v514 = vrot.slane %v512, 7
        %v515 = vshll.u32 %v487, 16
        %v517 = vor.u32 %v514, %v515
        %v519 = vshrl.u32 %v488, 16
        %v521 = vrot.slane %v519, 7
        %v522 = vshll.u32 %v488, 16
        %v524 = vor.u32 %v521, %v522
        %v526 = vshrl.u32 %v489, 16
        %v528 = vrot.slane %v526, 7
        %v529 = vshll.u32 %v489, 16
        %v531 = vor.u32 %v528, %v529
        %vm538 = vcmask 1040384
        %vm539 = vsmask.f32 256
        %vm540 = vmand %vm538, %vm539
        %v541 = vsel %vm540, 0, %v496
        %v542 = vsel %vm540, 0, %v503
        %v543 = vsel %vm540, 0, %v510
        %v544 = vsel %vm540, 0, %v517
        %v545 = vsel %vm540, 0, %v524
        %v546 = vsel %vm540, 0, %v531
        %v547 = vrot.slane %v494, 1
        %v548 = vor.u32 %v491, %v547
        %v549 = vrot.slane %v501, 1
        %v550 = vor.u32 %v498, %v549
        %v551 = vrot.slane %v508, 1
        %v552 = vor.u32 %v505, %v551
        %v553 = vrot.slane %v515, 1
        %v554 = vor.u32 %v512, %v553
        %v555 = vrot.slane %v522, 1
        %v556 = vor.u32 %v519, %v555
        %v557 = vrot.slane %v529, 1
        %v558 = vor.u32 %v526, %v557
        %vm565 = vcmask 1043456
        %vm566 = vsmask.f32 3328
        %vm567 = vmand %vm565, %vm566
        %v568 = vsel %vm567, %v548, 0
        %v569 = vsel %vm567, %v550, 0
        %v570 = vsel %vm567, %v552, 0
        %v571 = vsel %vm567, %v554, 0
        %v572 = vsel %vm567, %v556, 0
        %v573 = vsel %vm567, %v558, 0
        %v586 = vunpack.c.l.b16 %v541
        %v587 = vunpack.c.l.b16 %v568
        %v588 = vunpack.c.l.b16 %v542
        %v589 = vunpack.c.l.b16 %v569
        %v590 = vunpack.c.l.b16 %v543
        %v591 = vunpack.c.l.b16 %v570
        %v592 = vunpack.c.l.b16 %v544
        %v593 = vunpack.c.l.b16 %v571
        %v594 = vunpack.c.l.b16 %v545
        %v595 = vunpack.c.l.b16 %v572
        %v596 = vunpack.c.l.b16 %v546
        %v597 = vunpack.c.l.b16 %v573
        %v598 = vpack.c.b16 %v588, %v586
        %v599 = vpack.c.b16 %v479, %v478
        %v600 = vpack.c.b16 %v589, %v587
        %v601 = vpack.c.b16 %v592, %v590
        %v602 = vpack.c.b16 %v481, %v480
        %v603 = vpack.c.b16 %v593, %v591
        %v604 = vpack.c.b16 %v596, %v594
        %v605 = vpack.c.b16 %v483, %v482
        %v606 = vpack.c.b16 %v597, %v595
        %616 = vst [vmem:[#allocation2] sm:$0xff] %v598
        %617 = vst [vmem:[#allocation2 + $0x8] sm:$0xff] %v599
        %618 = vst [vmem:[#allocation2 + $0x10] sm:$0xff] %v600
        %619 = vst [vmem:[#allocation2 + $0x18] sm:$0xff] %v601
        %620 = vst [vmem:[#allocation2 + $0x20] sm:$0xff] %v602
        %621 = vst [vmem:[#allocation2 + $0x28] sm:$0xff] %v603
        %622 = vst [vmem:[#allocation2 + $0x30] sm:$0xff] %v604
        %623 = vst [vmem:[#allocation2 + $0x38] sm:$0xff] %v605
        %624 = vst [vmem:[#allocation2 + $0x40] sm:$0xff] %v606
      $region48: #{down_pallas.3} parent=43 // pred_fallthru
        _
      %v625 = vld [vmem:[#allocation2] sm:$0xff]
      %v626 = vld [vmem:[#allocation2 + $0x8] sm:$0xff]
      %v627 = vld [vmem:[#allocation2 + $0x10] sm:$0xff]
      %v628 = vld [vmem:[#allocation2 + $0x18] sm:$0xff]
      %v629 = vld [vmem:[#allocation2 + $0x20] sm:$0xff]
      %v630 = vld [vmem:[#allocation2 + $0x28] sm:$0xff]
      %v631 = vld [vmem:[%s399] sm:$0xf]
      %v632 = vld [vmem:[%s399 + $0x4] sm:$0xf]
      %v633 = vld [vmem:[%s399 + $0x8] sm:$0xf]
      %v634 = vld [vmem:[%s399 + $0xc] sm:$0xf]
      %v635 = vld [vmem:[%s399 + $0x10] sm:$0xf]
      %v636 = vld [vmem:[%s399 + $0x14] sm:$0xf]
      %v637 = vld [vmem:[%s399 + $0x18] sm:$0xf]
      %v638 = vld [vmem:[%s399 + $0x1c] sm:$0xf]
      %v639 = vld [vmem:[%s399 + $0x20] sm:$0xf]
      %v640 = vld [vmem:[%s399 + $0x24] sm:$0xf]
      %v641 = vld [vmem:[%s399 + $0x28] sm:$0xf]
      %v642 = vld [vmem:[%s399 + $0x2c] sm:$0xf]
      %v643 = vld [vmem:[%s399 + $0x30] sm:$0xf]
      %v644 = vld [vmem:[%s399 + $0x34] sm:$0xf]
      %v645 = vld [vmem:[%s399 + $0x38] sm:$0xf]
      %v646 = vld [vmem:[%s399 + $0x3c] sm:$0xf]
      %v647 = vld [vmem:[%s399 + $0x40] sm:$0xf]
      %v648 = vld [vmem:[%s399 + $0x44] sm:$0xf]
      %v649 = vld [vmem:[%s399 + $0x48] sm:$0xf]
      %v650 = vld [vmem:[%s399 + $0x4c] sm:$0xf]
      %v651 = vld [vmem:[%s399 + $0x50] sm:$0xf]
      %v652 = vld [vmem:[%s399 + $0x54] sm:$0xf]
      %v653 = vld [vmem:[%s399 + $0x58] sm:$0xf]
      %v654 = vld [vmem:[%s399 + $0x5c] sm:$0xf]
      %v655 = vld [vmem:[%s399 + $0x60] sm:$0xf]
      %v656 = vld [vmem:[%s399 + $0x64] sm:$0xf]
      %v657 = vld [vmem:[%s399 + $0x68] sm:$0xf]
      %v658 = vld [vmem:[%s399 + $0x6c] sm:$0xf]
      %v659 = vld [vmem:[%s399 + $0x70] sm:$0xf]
      %v660 = vld [vmem:[%s399 + $0x74] sm:$0xf]
      %v661 = vld [vmem:[%s399 + $0x78] sm:$0xf]
      %v662 = vld [vmem:[%s399 + $0x7c] sm:$0xf]
      %v663 = vld [vmem:[%s399 + $0x80] sm:$0xf]
      %v664 = vld [vmem:[%s399 + $0x84] sm:$0xf]
      %v665 = vld [vmem:[%s399 + $0x88] sm:$0xf]
      %v666 = vld [vmem:[%s399 + $0x8c] sm:$0xf]
      %v667 = vld [vmem:[%s399 + $0x90] sm:$0xf]
      %v668 = vld [vmem:[%s399 + $0x94] sm:$0xf]
      %v669 = vld [vmem:[%s399 + $0x98] sm:$0xf]
      %v670 = vld [vmem:[%s399 + $0x9c] sm:$0xf]
      %v671 = vld [vmem:[%s399 + $0xa0] sm:$0xf]
      %v672 = vld [vmem:[%s399 + $0xa4] sm:$0xf]
      %v673 = vld [vmem:[%s399 + $0xa8] sm:$0xf]
      %v674 = vld [vmem:[%s399 + $0xac] sm:$0xf]
      %v675 = vld [vmem:[%s399 + $0xb0] sm:$0xf]
      %v676 = vld [vmem:[%s399 + $0xb4] sm:$0xf]
      %v677 = vld [vmem:[%s399 + $0xb8] sm:$0xf]
      %v678 = vld [vmem:[%s399 + $0xbc] sm:$0xf]
      %v679 = vld [vmem:[#allocation2] sm:$0xf0]
      %v680 = vld [vmem:[#allocation2 + $0x8] sm:$0xf0]
      %v681 = vld [vmem:[#allocation2 + $0x10] sm:$0xf0]
      %v682 = vld [vmem:[#allocation2 + $0x18] sm:$0xff]
      %v683 = vld [vmem:[#allocation2 + $0x20] sm:$0xff]
      %v684 = vld [vmem:[#allocation2 + $0x28] sm:$0xff]
      %v685 = vld [vmem:[#allocation2 + $0x30] sm:$0xf]
      %v686 = vld [vmem:[#allocation2 + $0x38] sm:$0xf]
      %v687 = vld [vmem:[#allocation2 + $0x40] sm:$0xf]
      %s688 = scalar_lea.vmem %s399, 192
      %v689 = vld [vmem:[%s688] sm:$0xf]
      %v690 = vld [vmem:[%s688 + $0x4] sm:$0xf]
      %v691 = vld [vmem:[%s688 + $0x8] sm:$0xf]
      %v692 = vld [vmem:[%s688 + $0xc] sm:$0xf]
      %v693 = vld [vmem:[%s688 + $0x10] sm:$0xf]
      %v694 = vld [vmem:[%s688 + $0x14] sm:$0xf]
      %v695 = vld [vmem:[%s688 + $0x18] sm:$0xf]
      %v696 = vld [vmem:[%s688 + $0x1c] sm:$0xf]
      %v697 = vld [vmem:[%s688 + $0x20] sm:$0xf]
      %v698 = vld [vmem:[%s688 + $0x24] sm:$0xf]
      %v699 = vld [vmem:[%s688 + $0x28] sm:$0xf]
      %v700 = vld [vmem:[%s688 + $0x2c] sm:$0xf]
      %v701 = vld [vmem:[%s688 + $0x30] sm:$0xf]
      %v702 = vld [vmem:[%s688 + $0x34] sm:$0xf]
      %v703 = vld [vmem:[%s688 + $0x38] sm:$0xf]
      %v704 = vld [vmem:[%s688 + $0x3c] sm:$0xf]
      %v705 = vld [vmem:[%s688 + $0x40] sm:$0xf]
      %v706 = vld [vmem:[%s688 + $0x44] sm:$0xf]
      %v707 = vld [vmem:[%s688 + $0x48] sm:$0xf]
      %v708 = vld [vmem:[%s688 + $0x4c] sm:$0xf]
      %v709 = vld [vmem:[%s688 + $0x50] sm:$0xf]
      %v710 = vld [vmem:[%s688 + $0x54] sm:$0xf]
      %v711 = vld [vmem:[%s688 + $0x58] sm:$0xf]
      %v712 = vld [vmem:[%s688 + $0x5c] sm:$0xf]
      %v713 = vld [vmem:[%s688 + $0x60] sm:$0xf]
      %v714 = vld [vmem:[%s688 + $0x64] sm:$0xf]
      %v715 = vld [vmem:[%s688 + $0x68] sm:$0xf]
      %v716 = vld [vmem:[%s688 + $0x6c] sm:$0xf]
      %v717 = vld [vmem:[%s688 + $0x70] sm:$0xf]
      %v718 = vld [vmem:[%s688 + $0x74] sm:$0xf]
      %v719 = vld [vmem:[%s688 + $0x78] sm:$0xf]
      %v720 = vld [vmem:[%s688 + $0x7c] sm:$0xf]
      %v721 = vld [vmem:[%s688 + $0x80] sm:$0xf]
      %v722 = vld [vmem:[%s688 + $0x84] sm:$0xf]
      %v723 = vld [vmem:[%s688 + $0x88] sm:$0xf]
      %v724 = vld [vmem:[%s688 + $0x8c] sm:$0xf]
      %v725 = vld [vmem:[%s688 + $0x90] sm:$0xf]
      %v726 = vld [vmem:[%s688 + $0x94] sm:$0xf]
      %v727 = vld [vmem:[%s688 + $0x98] sm:$0xf]
      %v728 = vld [vmem:[%s688 + $0x9c] sm:$0xf]
      %v729 = vld [vmem:[%s688 + $0xa0] sm:$0xf]
      %v730 = vld [vmem:[%s688 + $0xa4] sm:$0xf]
      %v731 = vld [vmem:[%s688 + $0xa8] sm:$0xf]
      %v732 = vld [vmem:[%s688 + $0xac] sm:$0xf]
      %v733 = vld [vmem:[%s688 + $0xb0] sm:$0xf]
      %v734 = vld [vmem:[%s688 + $0xb4] sm:$0xf]
      %v735 = vld [vmem:[%s688 + $0xb8] sm:$0xf]
      %v736 = vld [vmem:[%s688 + $0xbc] sm:$0xf]
      %vm746 = vcmask 1043456
      %v747 = vrot.slane %v679, 4
      %v748 = vrot.slane %v682, 4
      %v749 = vsel %vm746, %v747, %v748
      %v750 = vrot.slane %v680, 4
      %v751 = vrot.slane %v683, 4
      %v752 = vsel %vm746, %v750, %v751
      %v753 = vrot.slane %v681, 4
      %v754 = vrot.slane %v684, 4
      %v755 = vsel %vm746, %v753, %v754
      %v756 = vrot.slane %v685, 4
      %v757 = vsel %vm746, %v748, %v756
      %v758 = vrot.slane %v686, 4
      %v759 = vsel %vm746, %v751, %v758
      %v760 = vrot.slane %v687, 4
      %v761 = vsel %vm746, %v754, %v760
      %v816 = vunpack.c.l.b16 %v689
      %v817 = vunpack.c.l.b16 %v690
      %v818 = vunpack.c.l.b16 %v691
      %v819 = vunpack.c.l.b16 %v692
      %v820 = vunpack.c.l.b16 %v693
      %v821 = vunpack.c.l.b16 %v694
      %v822 = vunpack.c.l.b16 %v695
      %v823 = vunpack.c.l.b16 %v696
      %v824 = vunpack.c.l.b16 %v697
      %v825 = vunpack.c.l.b16 %v698
      %v826 = vunpack.c.l.b16 %v699
      %v827 = vunpack.c.l.b16 %v700
      %v828 = vunpack.c.l.b16 %v701
      %v829 = vunpack.c.l.b16 %v702
      %v830 = vunpack.c.l.b16 %v703
      %v831 = vunpack.c.l.b16 %v704
      %v832 = vunpack.c.l.b16 %v705
      %v833 = vunpack.c.l.b16 %v706
      %v834 = vunpack.c.l.b16 %v707
      %v835 = vunpack.c.l.b16 %v708
      %v836 = vunpack.c.l.b16 %v709
      %v837 = vunpack.c.l.b16 %v710
      %v838 = vunpack.c.l.b16 %v711
      %v839 = vunpack.c.l.b16 %v712
      %v840 = vunpack.c.l.b16 %v713
      %v841 = vunpack.c.l.b16 %v714
      %v842 = vunpack.c.l.b16 %v715
      %v843 = vunpack.c.l.b16 %v716
      %v844 = vunpack.c.l.b16 %v717
      %v845 = vunpack.c.l.b16 %v718
      %v846 = vunpack.c.l.b16 %v719
      %v847 = vunpack.c.l.b16 %v720
      %v848 = vunpack.c.l.b16 %v721
      %v849 = vunpack.c.l.b16 %v722
      %v850 = vunpack.c.l.b16 %v723
      %v851 = vunpack.c.l.b16 %v724
      %v852 = vunpack.c.l.b16 %v725
      %v853 = vunpack.c.l.b16 %v726
      %v854 = vunpack.c.l.b16 %v727
      %v855 = vunpack.c.l.b16 %v728
      %v856 = vunpack.c.l.b16 %v729
      %v857 = vunpack.c.l.b16 %v730
      %v858 = vunpack.c.l.b16 %v731
      %v859 = vunpack.c.l.b16 %v732
      %v860 = vunpack.c.l.b16 %v733
      %v861 = vunpack.c.l.b16 %v734
      %v862 = vunpack.c.l.b16 %v735
      %v863 = vunpack.c.l.b16 %v736
      %v864 = vpack.c.b16 %v817, %v816
      %v865 = vpack.c.b16 %v819, %v818
      %v866 = vpack.c.b16 %v821, %v820
      %v867 = vpack.c.b16 %v823, %v822
      %v868 = vpack.c.b16 %v825, %v824
      %v869 = vpack.c.b16 %v827, %v826
      %v870 = vpack.c.b16 %v829, %v828
      %v871 = vpack.c.b16 %v831, %v830
      %v872 = vpack.c.b16 %v833, %v832
      %v873 = vpack.c.b16 %v835, %v834
      %v874 = vpack.c.b16 %v837, %v836
      %v875 = vpack.c.b16 %v839, %v838
      %v876 = vpack.c.b16 %v841, %v840
      %v877 = vpack.c.b16 %v843, %v842
      %v878 = vpack.c.b16 %v845, %v844
      %v879 = vpack.c.b16 %v847, %v846
      %v880 = vpack.c.b16 %v849, %v848
      %v881 = vpack.c.b16 %v851, %v850
      %v882 = vpack.c.b16 %v853, %v852
      %v883 = vpack.c.b16 %v855, %v854
      %v884 = vpack.c.b16 %v857, %v856
      %v885 = vpack.c.b16 %v859, %v858
      %v886 = vpack.c.b16 %v861, %v860
      %v887 = vpack.c.b16 %v863, %v862
      %912 = vmatprep.subr.bf16.mxu0 0
      %913 = vmatpush1.bf16.msra.mxu0 %v864
      %914 = vmatprep.subr.bf16.mxu0 0
      %915 = vmatpush1.bf16.msra.mxu0 %v865
      %916 = vmatprep.subr.bf16.mxu0 0
      %917 = vmatpush1.bf16.msra.mxu0 %v866
      %918 = vmatprep.subr.bf16.mxu0 0
      %919 = vmatpush1.bf16.msra.mxu0 %v867
      %920 = vmatprep.subr.bf16.mxu0 0
      %921 = vmatpush1.bf16.msra.mxu0 %v868
      %922 = vmatprep.subr.bf16.mxu0 0
      %923 = vmatpush1.bf16.msra.mxu0 %v869
      %924 = vmatprep.subr.bf16.mxu0 0
      %925 = vmatpush1.bf16.msra.mxu0 %v870
      %926 = vmatprep.subr.bf16.mxu0 0
      %927 = vmatpush1.bf16.msra.mxu0 %v871
      %928 = vmatprep.subr.bf16.mxu0 0
      %929 = vmatpush1.bf16.msra.mxu0 %v872
      %930 = vmatprep.subr.bf16.mxu0 0
      %931 = vmatpush1.bf16.msra.mxu0 %v873
      %932 = vmatprep.subr.bf16.mxu0 0
      %933 = vmatpush1.bf16.msra.mxu0 %v874
      %934 = vmatprep.subr.bf16.mxu0 0
      %935 = vmatpush1.bf16.msra.mxu0 %v875
      %936 = vmatprep.subr.bf16.mxu0 0
      %937 = vmatpush1.bf16.msra.mxu0 %v876
      %938 = vmatprep.subr.bf16.mxu0 0
      %939 = vmatpush1.bf16.msra.mxu0 %v877
      %940 = vmatprep.subr.bf16.mxu0 0
      %941 = vmatpush1.bf16.msra.mxu0 %v878
      %942 = vmatprep.subr.bf16.mxu0 0
      %943 = vmatpush1.bf16.msra.mxu0 %v879
      %944 = vmatprep.mubr.bf16.mxu0 %v752
      %945 = vmatmul.mubr.bf16.gmra.mrb[0].mxu0 %v749
      %v946 = vpop.f32.mrb[0].mxu0
      %v947 = vadd.f32 0.0, %v946
      %v948 = vpop.f32.mrb[0].mxu0
      %v949 = vpop.f32.mrb[0].mxu0
      %v950 = vadd.f32 0.0, %v949
      %v951 = vpop.f32.mrb[0].mxu0
      %952 = vmatprep.mubr.bf16.mxu0 %v759
      %953 = vmatmul.mubr.bf16.gmra.mrb[0].mxu0 %v757
      %v954 = vpop.f32.mrb[0].mxu0
      %v955 = vadd.f32 0.0, %v954
      %v956 = vpop.f32.mrb[0].mxu0
      %v957 = vpop.f32.mrb[0].mxu0
      %v958 = vadd.f32 0.0, %v957
      %v959 = vpop.f32.mrb[0].mxu0
      %960 = vdwg.mxu0
      %961 = vmatprep.subr.bf16.mxu0 0
      %962 = vmatpush1.bf16.msra.mxu0 %v880
      %963 = vmatprep.subr.bf16.mxu0 0
      %964 = vmatpush1.bf16.msra.mxu0 %v881
      %965 = vmatprep.subr.bf16.mxu0 0
      %966 = vmatpush1.bf16.msra.mxu0 %v882
      %967 = vmatprep.subr.bf16.mxu0 0
      %968 = vmatpush1.bf16.msra.mxu0 %v883
      %969 = vmatprep.subr.bf16.mxu0 0
      %970 = vmatpush1.bf16.msra.mxu0 %v884
      %971 = vmatprep.subr.bf16.mxu0 0
      %972 = vmatpush1.bf16.msra.mxu0 %v885
      %973 = vmatprep.subr.bf16.mxu0 0
      %974 = vmatpush1.bf16.msra.mxu0 %v886
      %975 = vmatprep.subr.bf16.mxu0 0
      %976 = vmatpush1.bf16.msra.mxu0 %v887
      %977 = vmatprep.subr.bf16.mxu0 0
      %978 = vmatpush1.bf16.msra.mxu0 0
      %979 = vmatprep.subr.bf16.mxu0 0
      %980 = vmatpush1.bf16.msra.mxu0 0
      %981 = vmatprep.subr.bf16.mxu0 0
      %982 = vmatpush1.bf16.msra.mxu0 0
      %983 = vmatprep.subr.bf16.mxu0 0
      %984 = vmatpush1.bf16.msra.mxu0 0
      %985 = vmatprep.subr.bf16.mxu0 0
      %986 = vmatpush1.bf16.msra.mxu0 0
      %987 = vmatprep.subr.bf16.mxu0 0
      %988 = vmatpush1.bf16.msra.mxu0 0
      %989 = vmatprep.subr.bf16.mxu0 0
      %990 = vmatpush1.bf16.msra.mxu0 0
      %991 = vmatprep.subr.bf16.mxu0 0
      %992 = vmatpush1.bf16.msra.mxu0 0
      %993 = vmatprep.mubr.bf16.mxu0 0
      %994 = vmatmul.mubr.bf16.gmra.mrb[0].mxu0 %v755
      %v995 = vpop.f32.mrb[0].mxu0
      %v996 = vadd.f32 %v947, %v995
      %v997 = vpop.f32.mrb[0].mxu0
      %v998 = vpop.f32.mrb[0].mxu0
      %v999 = vadd.f32 %v950, %v998
      %v1000 = vpop.f32.mrb[0].mxu0
      %1001 = vmatprep.mubr.bf16.mxu0 0
      %1002 = vmatmul.mubr.bf16.gmra.mrb[0].mxu0 %v761
      %v1003 = vpop.f32.mrb[0].mxu0
      %v1004 = vadd.f32 %v955, %v1003
      %v1005 = vpop.f32.mrb[0].mxu0
      %v1006 = vpop.f32.mrb[0].mxu0
      %v1007 = vadd.f32 %v958, %v1006
      %v1008 = vpop.f32.mrb[0].mxu0
      %1009 = vdwg.mxu0
      %v1058 = vunpack.c.l.b16 %v631
      %v1059 = vunpack.c.l.b16 %v632
      %v1060 = vunpack.c.l.b16 %v633
      %v1061 = vunpack.c.l.b16 %v634
      %v1062 = vunpack.c.l.b16 %v635
      %v1063 = vunpack.c.l.b16 %v636
      %v1064 = vunpack.c.l.b16 %v637
      %v1065 = vunpack.c.l.b16 %v638
      %v1066 = vunpack.c.l.b16 %v639
      %v1067 = vunpack.c.l.b16 %v640
      %v1068 = vunpack.c.l.b16 %v641
      %v1069 = vunpack.c.l.b16 %v642
      %v1070 = vunpack.c.l.b16 %v643
      %v1071 = vunpack.c.l.b16 %v644
      %v1072 = vunpack.c.l.b16 %v645
      %v1073 = vunpack.c.l.b16 %v646
      %v1074 = vunpack.c.l.b16 %v647
      %v1075 = vunpack.c.l.b16 %v648
      %v1076 = vunpack.c.l.b16 %v649
      %v1077 = vunpack.c.l.b16 %v650
      %v1078 = vunpack.c.l.b16 %v651
      %v1079 = vunpack.c.l.b16 %v652
      %v1080 = vunpack.c.l.b16 %v653
      %v1081 = vunpack.c.l.b16 %v654
      %v1082 = vunpack.c.l.b16 %v655
      %v1083 = vunpack.c.l.b16 %v656
      %v1084 = vunpack.c.l.b16 %v657
      %v1085 = vunpack.c.l.b16 %v658
      %v1086 = vunpack.c.l.b16 %v659
      %v1087 = vunpack.c.l.b16 %v660
      %v1088 = vunpack.c.l.b16 %v661
      %v1089 = vunpack.c.l.b16 %v662
      %v1090 = vunpack.c.l.b16 %v663
      %v1091 = vunpack.c.l.b16 %v664
      %v1092 = vunpack.c.l.b16 %v665
      %v1093 = vunpack.c.l.b16 %v666
      %v1094 = vunpack.c.l.b16 %v667
      %v1095 = vunpack.c.l.b16 %v668
      %v1096 = vunpack.c.l.b16 %v669
      %v1097 = vunpack.c.l.b16 %v670
      %v1098 = vunpack.c.l.b16 %v671
      %v1099 = vunpack.c.l.b16 %v672
      %v1100 = vunpack.c.l.b16 %v673
      %v1101 = vunpack.c.l.b16 %v674
      %v1102 = vunpack.c.l.b16 %v675
      %v1103 = vunpack.c.l.b16 %v676
      %v1104 = vunpack.c.l.b16 %v677
      %v1105 = vunpack.c.l.b16 %v678
      %v1106 = vpack.c.b16 %v1059, %v1058
      %v1107 = vpack.c.b16 %v1061, %v1060
      %v1108 = vpack.c.b16 %v1063, %v1062
      %v1109 = vpack.c.b16 %v1065, %v1064
      %v1110 = vpack.c.b16 %v1067, %v1066
      %v1111 = vpack.c.b16 %v1069, %v1068
      %v1112 = vpack.c.b16 %v1071, %v1070
      %v1113 = vpack.c.b16 %v1073, %v1072
      %v1114 = vpack.c.b16 %v1075, %v1074
      %v1115 = vpack.c.b16 %v1077, %v1076
      %v1116 = vpack.c.b16 %v1079, %v1078
      %v1117 = vpack.c.b16 %v1081, %v1080
      %v1118 = vpack.c.b16 %v1083, %v1082
      %v1119 = vpack.c.b16 %v1085, %v1084
      %v1120 = vpack.c.b16 %v1087, %v1086
      %v1121 = vpack.c.b16 %v1089, %v1088
      %v1122 = vpack.c.b16 %v1091, %v1090
      %v1123 = vpack.c.b16 %v1093, %v1092
      %v1124 = vpack.c.b16 %v1095, %v1094
      %v1125 = vpack.c.b16 %v1097, %v1096
      %v1126 = vpack.c.b16 %v1099, %v1098
      %v1127 = vpack.c.b16 %v1101, %v1100
      %v1128 = vpack.c.b16 %v1103, %v1102
      %v1129 = vpack.c.b16 %v1105, %v1104
      %1154 = vmatprep.subr.bf16.mxu0 0
      %1155 = vmatpush1.bf16.msra.mxu0 %v1106
      %1156 = vmatprep.subr.bf16.mxu0 0
      %1157 = vmatpush1.bf16.msra.mxu0 %v1107
      %1158 = vmatprep.subr.bf16.mxu0 0
      %1159 = vmatpush1.bf16.msra.mxu0 %v1108
      %1160 = vmatprep.subr.bf16.mxu0 0
      %1161 = vmatpush1.bf16.msra.mxu0 %v1109
      %1162 = vmatprep.subr.bf16.mxu0 0
      %1163 = vmatpush1.bf16.msra.mxu0 %v1110
      %1164 = vmatprep.subr.bf16.mxu0 0
      %1165 = vmatpush1.bf16.msra.mxu0 %v1111
      %1166 = vmatprep.subr.bf16.mxu0 0
      %1167 = vmatpush1.bf16.msra.mxu0 %v1112
      %1168 = vmatprep.subr.bf16.mxu0 0
      %1169 = vmatpush1.bf16.msra.mxu0 %v1113
      %1170 = vmatprep.subr.bf16.mxu0 0
      %1171 = vmatpush1.bf16.msra.mxu0 %v1114
      %1172 = vmatprep.subr.bf16.mxu0 0
      %1173 = vmatpush1.bf16.msra.mxu0 %v1115
      %1174 = vmatprep.subr.bf16.mxu0 0
      %1175 = vmatpush1.bf16.msra.mxu0 %v1116
      %1176 = vmatprep.subr.bf16.mxu0 0
      %1177 = vmatpush1.bf16.msra.mxu0 %v1117
      %1178 = vmatprep.subr.bf16.mxu0 0
      %1179 = vmatpush1.bf16.msra.mxu0 %v1118
      %1180 = vmatprep.subr.bf16.mxu0 0
      %1181 = vmatpush1.bf16.msra.mxu0 %v1119
      %1182 = vmatprep.subr.bf16.mxu0 0
      %1183 = vmatpush1.bf16.msra.mxu0 %v1120
      %1184 = vmatprep.subr.bf16.mxu0 0
      %1185 = vmatpush1.bf16.msra.mxu0 %v1121
      %1186 = vmatprep.mubr.bf16.mxu0 %v626
      %1187 = vmatmul.mubr.bf16.gmra.mrb[0].mxu0 %v625
      %v1188 = vpop.f32.mrb[0].mxu0
      %v1189 = vadd.f32 %v996, %v1188
      %v1190 = vpop.f32.mrb[0].mxu0
      %v1191 = vpop.f32.mrb[0].mxu0
      %v1192 = vadd.f32 %v999, %v1191
      %v1193 = vpop.f32.mrb[0].mxu0
      %1194 = vmatprep.mubr.bf16.mxu0 %v629
      %1195 = vmatmul.mubr.bf16.gmra.mrb[0].mxu0 %v628
      %v1196 = vpop.f32.mrb[0].mxu0
      %v1197 = vadd.f32 %v1004, %v1196
      %v1198 = vpop.f32.mrb[0].mxu0
      %v1199 = vpop.f32.mrb[0].mxu0
      %v1200 = vadd.f32 %v1007, %v1199
      %v1201 = vpop.f32.mrb[0].mxu0
      %1202 = vdwg.mxu0
      %1203 = vmatprep.subr.bf16.mxu0 0
      %1204 = vmatpush1.bf16.msra.mxu0 %v1122
      %1205 = vmatprep.subr.bf16.mxu0 0
      %1206 = vmatpush1.bf16.msra.mxu0 %v1123
      %1207 = vmatprep.subr.bf16.mxu0 0
      %1208 = vmatpush1.bf16.msra.mxu0 %v1124
      %1209 = vmatprep.subr.bf16.mxu0 0
      %1210 = vmatpush1.bf16.msra.mxu0 %v1125
      %1211 = vmatprep.subr.bf16.mxu0 0
      %1212 = vmatpush1.bf16.msra.mxu0 %v1126
      %1213 = vmatprep.subr.bf16.mxu0 0
      %1214 = vmatpush1.bf16.msra.mxu0 %v1127
      %1215 = vmatprep.subr.bf16.mxu0 0
      %1216 = vmatpush1.bf16.msra.mxu0 %v1128
      %1217 = vmatprep.subr.bf16.mxu0 0
      %1218 = vmatpush1.bf16.msra.mxu0 %v1129
      %1219 = vmatprep.subr.bf16.mxu0 0
      %1220 = vmatpush1.bf16.msra.mxu0 0
      %1221 = vmatprep.subr.bf16.mxu0 0
      %1222 = vmatpush1.bf16.msra.mxu0 0
      %1223 = vmatprep.subr.bf16.mxu0 0
      %1224 = vmatpush1.bf16.msra.mxu0 0
      %1225 = vmatprep.subr.bf16.mxu0 0
      %1226 = vmatpush1.bf16.msra.mxu0 0
      %1227 = vmatprep.subr.bf16.mxu0 0
      %1228 = vmatpush1.bf16.msra.mxu0 0
      %1229 = vmatprep.subr.bf16.mxu0 0
      %1230 = vmatpush1.bf16.msra.mxu0 0
      %1231 = vmatprep.subr.bf16.mxu0 0
      %1232 = vmatpush1.bf16.msra.mxu0 0
      %1233 = vmatprep.subr.bf16.mxu0 0
      %1234 = vmatpush1.bf16.msra.mxu0 0
      %1235 = vmatprep.mubr.bf16.mxu0 0
      %1236 = vmatmul.mubr.bf16.gmra.mrb[0].mxu0 %v627
      %v1237 = vpop.f32.mrb[0].mxu0
      %v1238 = vadd.f32 %v1189, %v1237
      %v1239 = vpop.f32.mrb[0].mxu0
      %v1240 = vpop.f32.mrb[0].mxu0
      %v1241 = vadd.f32 %v1192, %v1240
      %v1242 = vpop.f32.mrb[0].mxu0
      %1243 = vmatprep.mubr.bf16.mxu0 0
      %1244 = vmatmul.mubr.bf16.gmra.mrb[0].mxu0 %v630
      %v1245 = vpop.f32.mrb[0].mxu0
      %v1246 = vadd.f32 %v1197, %v1245
      %v1247 = vpop.f32.mrb[0].mxu0
      %v1248 = vpop.f32.mrb[0].mxu0
      %v1249 = vadd.f32 %v1200, %v1248
      %v1250 = vpop.f32.mrb[0].mxu0
      %1251 = vdwg.mxu0
      %v1252 = vld [vmem:[#allocation2 + $0x30] sm:$0xff]
      %v1253 = vld [vmem:[#allocation2 + $0x38] sm:$0xff]
      %v1254 = vld [vmem:[#allocation2 + $0x40] sm:$0xff]
      %s1255 = scalar_lea.vmem %s399, 384
      %v1256 = vld [vmem:[%s1255] sm:$0xf]
      %v1257 = vld [vmem:[%s1255 + $0x4] sm:$0xf]
      %v1258 = vld [vmem:[%s1255 + $0x8] sm:$0xf]
      %v1259 = vld [vmem:[%s1255 + $0xc] sm:$0xf]
      %v1260 = vld [vmem:[%s1255 + $0x10] sm:$0xf]
      %v1261 = vld [vmem:[%s1255 + $0x14] sm:$0xf]
      %v1262 = vld [vmem:[%s1255 + $0x18] sm:$0xf]
      %v1263 = vld [vmem:[%s1255 + $0x1c] sm:$0xf]
      %v1264 = vld [vmem:[%s1255 + $0x20] sm:$0xf]
      %v1265 = vld [vmem:[%s1255 + $0x24] sm:$0xf]
      %v1266 = vld [vmem:[%s1255 + $0x28] sm:$0xf]
      %v1267 = vld [vmem:[%s1255 + $0x2c] sm:$0xf]
      %v1268 = vld [vmem:[%s1255 + $0x30] sm:$0xf]
      %v1269 = vld [vmem:[%s1255 + $0x34] sm:$0xf]
      %v1270 = vld [vmem:[%s1255 + $0x38] sm:$0xf]
      %v1271 = vld [vmem:[%s1255 + $0x3c] sm:$0xf]
      %v1272 = vld [vmem:[%s1255 + $0x40] sm:$0xf]
      %v1273 = vld [vmem:[%s1255 + $0x44] sm:$0xf]
      %v1274 = vld [vmem:[%s1255 + $0x48] sm:$0xf]
      %v1275 = vld [vmem:[%s1255 + $0x4c] sm:$0xf]
      %v1276 = vld [vmem:[%s1255 + $0x50] sm:$0xf]
      %v1277 = vld [vmem:[%s1255 + $0x54] sm:$0xf]
      %v1278 = vld [vmem:[%s1255 + $0x58] sm:$0xf]
      %v1279 = vld [vmem:[%s1255 + $0x5c] sm:$0xf]
      %v1280 = vld [vmem:[%s1255 + $0x60] sm:$0xf]
      %v1281 = vld [vmem:[%s1255 + $0x64] sm:$0xf]
      %v1282 = vld [vmem:[%s1255 + $0x68] sm:$0xf]
      %v1283 = vld [vmem:[%s1255 + $0x6c] sm:$0xf]
      %v1284 = vld [vmem:[%s1255 + $0x70] sm:$0xf]
      %v1285 = vld [vmem:[%s1255 + $0x74] sm:$0xf]
      %v1286 = vld [vmem:[%s1255 + $0x78] sm:$0xf]
      %v1287 = vld [vmem:[%s1255 + $0x7c] sm:$0xf]
      %v1288 = vld [vmem:[%s1255 + $0x80] sm:$0xf]
      %v1289 = vld [vmem:[%s1255 + $0x84] sm:$0xf]
      %v1290 = vld [vmem:[%s1255 + $0x88] sm:$0xf]
      %v1291 = vld [vmem:[%s1255 + $0x8c] sm:$0xf]
      %v1292 = vld [vmem:[%s1255 + $0x90] sm:$0xf]
      %v1293 = vld [vmem:[%s1255 + $0x94] sm:$0xf]
      %v1294 = vld [vmem:[%s1255 + $0x98] sm:$0xf]
      %v1295 = vld [vmem:[%s1255 + $0x9c] sm:$0xf]
      %v1296 = vld [vmem:[%s1255 + $0xa0] sm:$0xf]
      %v1297 = vld [vmem:[%s1255 + $0xa4] sm:$0xf]
      %v1298 = vld [vmem:[%s1255 + $0xa8] sm:$0xf]
      %v1299 = vld [vmem:[%s1255 + $0xac] sm:$0xf]
      %v1300 = vld [vmem:[%s1255 + $0xb0] sm:$0xf]
      %v1301 = vld [vmem:[%s1255 + $0xb4] sm:$0xf]
      %v1302 = vld [vmem:[%s1255 + $0xb8] sm:$0xf]
      %v1303 = vld [vmem:[%s1255 + $0xbc] sm:$0xf]
      %v1352 = vunpack.c.l.b16 %v1256
      %v1353 = vunpack.c.l.b16 %v1257
      %v1354 = vunpack.c.l.b16 %v1258
      %v1355 = vunpack.c.l.b16 %v1259
      %v1356 = vunpack.c.l.b16 %v1260
      %v1357 = vunpack.c.l.b16 %v1261
      %v1358 = vunpack.c.l.b16 %v1262
      %v1359 = vunpack.c.l.b16 %v1263
      %v1360 = vunpack.c.l.b16 %v1264
      %v1361 = vunpack.c.l.b16 %v1265
      %v1362 = vunpack.c.l.b16 %v1266
      %v1363 = vunpack.c.l.b16 %v1267
      %v1364 = vunpack.c.l.b16 %v1268
      %v1365 = vunpack.c.l.b16 %v1269
      %v1366 = vunpack.c.l.b16 %v1270
      %v1367 = vunpack.c.l.b16 %v1271
      %v1368 = vunpack.c.l.b16 %v1272
      %v1369 = vunpack.c.l.b16 %v1273
      %v1370 = vunpack.c.l.b16 %v1274
      %v1371 = vunpack.c.l.b16 %v1275
      %v1372 = vunpack.c.l.b16 %v1276
      %v1373 = vunpack.c.l.b16 %v1277
      %v1374 = vunpack.c.l.b16 %v1278
      %v1375 = vunpack.c.l.b16 %v1279
      %v1376 = vunpack.c.l.b16 %v1280
      %v1377 = vunpack.c.l.b16 %v1281
      %v1378 = vunpack.c.l.b16 %v1282
      %v1379 = vunpack.c.l.b16 %v1283
      %v1380 = vunpack.c.l.b16 %v1284
      %v1381 = vunpack.c.l.b16 %v1285
      %v1382 = vunpack.c.l.b16 %v1286
      %v1383 = vunpack.c.l.b16 %v1287
      %v1384 = vunpack.c.l.b16 %v1288
      %v1385 = vunpack.c.l.b16 %v1289
      %v1386 = vunpack.c.l.b16 %v1290
      %v1387 = vunpack.c.l.b16 %v1291
      %v1388 = vunpack.c.l.b16 %v1292
      %v1389 = vunpack.c.l.b16 %v1293
      %v1390 = vunpack.c.l.b16 %v1294
      %v1391 = vunpack.c.l.b16 %v1295
      %v1392 = vunpack.c.l.b16 %v1296
      %v1393 = vunpack.c.l.b16 %v1297
      %v1394 = vunpack.c.l.b16 %v1298
      %v1395 = vunpack.c.l.b16 %v1299
      %v1396 = vunpack.c.l.b16 %v1300
      %v1397 = vunpack.c.l.b16 %v1301
      %v1398 = vunpack.c.l.b16 %v1302
      %v1399 = vunpack.c.l.b16 %v1303
      %v1400 = vpack.c.b16 %v1353, %v1352
      %v1401 = vpack.c.b16 %v1355, %v1354
      %v1402 = vpack.c.b16 %v1357, %v1356
      %v1403 = vpack.c.b16 %v1359, %v1358
      %v1404 = vpack.c.b16 %v1361, %v1360
      %v1405 = vpack.c.b16 %v1363, %v1362
      %v1406 = vpack.c.b16 %v1365, %v1364
      %v1407 = vpack.c.b16 %v1367, %v1366
      %v1408 = vpack.c.b16 %v1369, %v1368
      %v1409 = vpack.c.b16 %v1371, %v1370
      %v1410 = vpack.c.b16 %v1373, %v1372
      %v1411 = vpack.c.b16 %v1375, %v1374
      %v1412 = vpack.c.b16 %v1377, %v1376
      %v1413 = vpack.c.b16 %v1379, %v1378
      %v1414 = vpack.c.b16 %v1381, %v1380
      %v1415 = vpack.c.b16 %v1383, %v1382
      %v1416 = vpack.c.b16 %v1385, %v1384
      %v1417 = vpack.c.b16 %v1387, %v1386
      %v1418 = vpack.c.b16 %v1389, %v1388
      %v1419 = vpack.c.b16 %v1391, %v1390
      %v1420 = vpack.c.b16 %v1393, %v1392
      %v1421 = vpack.c.b16 %v1395, %v1394
      %v1422 = vpack.c.b16 %v1397, %v1396
      %v1423 = vpack.c.b16 %v1399, %v1398
      %1448 = vmatprep.subr.bf16.mxu0 0
      %1449 = vmatpush1.bf16.msra.mxu0 %v1400
      %1450 = vmatprep.subr.bf16.mxu0 0
      %1451 = vmatpush1.bf16.msra.mxu0 %v1401
      %1452 = vmatprep.subr.bf16.mxu0 0
      %1453 = vmatpush1.bf16.msra.mxu0 %v1402
      %1454 = vmatprep.subr.bf16.mxu0 0
      %1455 = vmatpush1.bf16.msra.mxu0 %v1403
      %1456 = vmatprep.subr.bf16.mxu0 0
      %1457 = vmatpush1.bf16.msra.mxu0 %v1404
      %1458 = vmatprep.subr.bf16.mxu0 0
      %1459 = vmatpush1.bf16.msra.mxu0 %v1405
      %1460 = vmatprep.subr.bf16.mxu0 0
      %1461 = vmatpush1.bf16.msra.mxu0 %v1406
      %1462 = vmatprep.subr.bf16.mxu0 0
      %1463 = vmatpush1.bf16.msra.mxu0 %v1407
      %1464 = vmatprep.subr.bf16.mxu0 0
      %1465 = vmatpush1.bf16.msra.mxu0 %v1408
      %1466 = vmatprep.subr.bf16.mxu0 0
      %1467 = vmatpush1.bf16.msra.mxu0 %v1409
      %1468 = vmatprep.subr.bf16.mxu0 0
      %1469 = vmatpush1.bf16.msra.mxu0 %v1410
      %1470 = vmatprep.subr.bf16.mxu0 0
      %1471 = vmatpush1.bf16.msra.mxu0 %v1411
      %1472 = vmatprep.subr.bf16.mxu0 0
      %1473 = vmatpush1.bf16.msra.mxu0 %v1412
      %1474 = vmatprep.subr.bf16.mxu0 0
      %1475 = vmatpush1.bf16.msra.mxu0 %v1413
      %1476 = vmatprep.subr.bf16.mxu0 0
      %1477 = vmatpush1.bf16.msra.mxu0 %v1414
      %1478 = vmatprep.subr.bf16.mxu0 0
      %1479 = vmatpush1.bf16.msra.mxu0 %v1415
      %1480 = vmatprep.mubr.bf16.mxu0 %v683
      %1481 = vmatmul.mubr.bf16.gmra.mrb[0].mxu0 %v682
      %v1482 = vpop.f32.mrb[0].mxu0
      %v1483 = vadd.f32 0.0, %v1482
      %v1484 = vpop.f32.mrb[0].mxu0
      %v1485 = vpop.f32.mrb[0].mxu0
      %v1486 = vadd.f32 0.0, %v1485
      %v1487 = vpop.f32.mrb[0].mxu0
      %1488 = vmatprep.mubr.bf16.mxu0 %v1253
      %1489 = vmatmul.mubr.bf16.gmra.mrb[0].mxu0 %v1252
      %v1490 = vpop.f32.mrb[0].mxu0
      %v1491 = vadd.f32 0.0, %v1490
      %v1492 = vpop.f32.mrb[0].mxu0
      %v1493 = vpop.f32.mrb[0].mxu0
      %v1494 = vadd.f32 0.0, %v1493
      %v1495 = vpop.f32.mrb[0].mxu0
      %1496 = vdwg.mxu0
      %1497 = vmatprep.subr.bf16.mxu0 0
      %1498 = vmatpush1.bf16.msra.mxu0 %v1416
      %1499 = vmatprep.subr.bf16.mxu0 0
      %1500 = vmatpush1.bf16.msra.mxu0 %v1417
      %1501 = vmatprep.subr.bf16.mxu0 0
      %1502 = vmatpush1.bf16.msra.mxu0 %v1418
      %1503 = vmatprep.subr.bf16.mxu0 0
      %1504 = vmatpush1.bf16.msra.mxu0 %v1419
      %1505 = vmatprep.subr.bf16.mxu0 0
      %1506 = vmatpush1.bf16.msra.mxu0 %v1420
      %1507 = vmatprep.subr.bf16.mxu0 0
      %1508 = vmatpush1.bf16.msra.mxu0 %v1421
      %1509 = vmatprep.subr.bf16.mxu0 0
      %1510 = vmatpush1.bf16.msra.mxu0 %v1422
      %1511 = vmatprep.subr.bf16.mxu0 0
      %1512 = vmatpush1.bf16.msra.mxu0 %v1423
      %1513 = vmatprep.subr.bf16.mxu0 0
      %1514 = vmatpush1.bf16.msra.mxu0 0
      %1515 = vmatprep.subr.bf16.mxu0 0
      %1516 = vmatpush1.bf16.msra.mxu0 0
      %1517 = vmatprep.subr.bf16.mxu0 0
      %1518 = vmatpush1.bf16.msra.mxu0 0
      %1519 = vmatprep.subr.bf16.mxu0 0
      %1520 = vmatpush1.bf16.msra.mxu0 0
      %1521 = vmatprep.subr.bf16.mxu0 0
      %1522 = vmatpush1.bf16.msra.mxu0 0
      %1523 = vmatprep.subr.bf16.mxu0 0
      %1524 = vmatpush1.bf16.msra.mxu0 0
      %1525 = vmatprep.subr.bf16.mxu0 0
      %1526 = vmatpush1.bf16.msra.mxu0 0
      %1527 = vmatprep.subr.bf16.mxu0 0
      %1528 = vmatpush1.bf16.msra.mxu0 0
      %1529 = vmatprep.mubr.bf16.mxu0 0
      %1530 = vmatmul.mubr.bf16.gmra.mrb[0].mxu0 %v684
      %v1531 = vpop.f32.mrb[0].mxu0
      %v1532 = vadd.f32 %v1483, %v1531
      %v1533 = vpop.f32.mrb[0].mxu0
      %v1534 = vpop.f32.mrb[0].mxu0
      %v1535 = vadd.f32 %v1486, %v1534
      %v1536 = vpop.f32.mrb[0].mxu0
      %1537 = vmatprep.mubr.bf16.mxu0 0
      %1538 = vmatmul.mubr.bf16.gmra.mrb[0].mxu0 %v1254
      %v1539 = vpop.f32.mrb[0].mxu0
      %v1540 = vadd.f32 %v1491, %v1539
      %v1541 = vpop.f32.mrb[0].mxu0
      %v1542 = vpop.f32.mrb[0].mxu0
      %v1543 = vadd.f32 %v1494, %v1542
      %v1544 = vpop.f32.mrb[0].mxu0
      %1545 = vdwg.mxu0
      %v1546 = vadd.f32 %v1238, %v1532
      %v1547 = vadd.f32 %v1241, %v1535
      %v1548 = vadd.f32 %v1246, %v1540
      %v1549 = vadd.f32 %v1249, %v1543
      %v1550 = vld [vmem:[%s402] sm:$0x1]
      %v1552 = vlaneseq
      %v1553 = vshrl.u32 %v1552, 7
      %v1554 = vsub.s32 0, %v1553
      %v1555 = vrot.slane %v1550, %v1554
      %v1557 = vadd.f32 %v1546, %v1555
      %v1558 = vadd.f32 %v1547, %v1555
      %v1559 = vadd.f32 %v1548, %v1555
      %v1560 = vadd.f32 %v1549, %v1555
      %v1561 = vadd.f32 %v1557, %v1558
      %v1562 = vadd.f32 %v1561, %v1559
      %v1563 = vadd.f32 %v1562, %v1560
      %v1564 = vrot.slane %v1563, 4
      %v1565 = vadd.f32 %v1563, %v1564
      %v1566 = vrot.slane %v1565, 2
      %v1567 = vadd.f32 %v1565, %v1566
      %v1568 = vrot.slane %v1567, 1
      %v1569 = vadd.f32 %v1567, %v1568
      %1570 = vst [vmem:[%s424] sm:$0x1] %v1569
      %v1571 = vmul.f32 %v1557, %v1557
      %v1572 = vmul.f32 %v1558, %v1558
      %v1573 = vmul.f32 %v1559, %v1559
      %v1574 = vmul.f32 %v1560, %v1560
      %v1575 = vadd.f32 %v1571, %v1572
      %v1576 = vadd.f32 %v1575, %v1573
      %v1577 = vadd.f32 %v1576, %v1574
      %v1578 = vrot.slane %v1577, 4
      %v1579 = vadd.f32 %v1577, %v1578
      %v1580 = vrot.slane %v1579, 2
      %v1581 = vadd.f32 %v1579, %v1580
      %v1582 = vrot.slane %v1581, 1
      %v1583 = vadd.f32 %v1581, %v1582
      %1584 = vst [vmem:[%s424 + $0x1] sm:$0x1] %v1583
      %v1585 = vpack.c.bf16 %v1557, %v1557
      %v1586 = vpack.c.bf16 %v1558, %v1558
      %v1587 = vpack.c.bf16 %v1559, %v1559
      %v1588 = vpack.c.bf16 %v1560, %v1560
      %1589 = vst [vmem:[%s414] sm:$0xf] %v1585
      %1590 = vst [vmem:[%s414 + $0x4] sm:$0xf] %v1586
      %1591 = vst [vmem:[%s414 + $0x8] sm:$0xf] %v1587
      %1592 = vst [vmem:[%s414 + $0xc] sm:$0xf] %v1588
      %s1593 = smul.u32 4, %s25
      %p1594 = scmp.lt.s32.totalorder %s24, 1
      %s1595 = scalar_select %p1594, %s24, 1
      %p1596 = scmp.lt.s32.totalorder %s1593, 7
      %s1597 = scalar_select %p1596, %s1593, 7
      %p1598 = scmp.lt.s32.totalorder %s26, 0
      %s1599 = scalar_select %p1598, %s26, 0
      %s1600 = sadd.s32 %s1599, %s1597
      %s1601 = smul.addr %s1595, 8
      %s1602 = sadd.s32 %s1600, %s1601
      %s1603 = smul.addr %s1602, 4
      %s1604 = scalar_lea.vmem %s6, %s1603
      %s1605 = smul.u32 %s24, 2
      %s1606 = sadd.s32 %s1605, %s25
      %p1607 = scmp.lt.s32.totalorder %s1606, 3
      %s1608 = scalar_select %p1607, %s1606, 3
      %p1609 = scmp.lt.s32.totalorder %s26, 0
      %s1610 = scalar_select %p1609, %s26, 0
      %s1611 = sadd.s32 %s1610, %s1608
      %s1612 = smul.addr %s1611, 2
      %s1613 = scalar_lea.vmem %s7, %s1612
      // Predicated region
      $region49: #{down_pallas.3} parent=43 // pred_check
        %p1614 = pneg %p212
      $region50: #{down_pallas.3} parent=43 // pred_check_branch
        %1616 = sbr.rel (%p1614) target = $region52
      $region51: #{down_pallas.3} parent=43 // pred_region
        %s1617 = smul.u32 4, %s25
      $region52: #{down_pallas.3} parent=43 // pred_fallthru
        _
      // Predicated region
      $region53: #{down_pallas.3} parent=43 // pred_check
        %p1618 = pneg %p244
      $region54: #{down_pallas.3} parent=43 // pred_check_branch
        %1620 = sbr.rel (%p1618) target = $region56
      $region55: #{down_pallas.3} parent=43 // pred_region
        %s1621 = smul.u32 %s24, 2
        %s1622 = sadd.s32 %s1621, %s25
      $region56: #{down_pallas.3} parent=43 // pred_fallthru
        _
    $region44: #{down_pallas.3} parent=5 // pred_fallthru
      _
    %p1623 = scmp.le.s32.totalorder 2, %s14
    // Predicated region
    $region57: #{down_pallas.3} parent=5 // pred_check
      %p1624 = pneg %p1623
    $region58: #{down_pallas.3} parent=5 // pred_check_branch
      %1626 = sbr.rel (%p1624) target = $region60
    $region59: #{down_pallas.3} parent=5 // pred_region
      %s1627 = ssub.s32 %s14, 2
      // Predicated region
      $region61: #{down_pallas.3} parent=59 // pred_check
        %p1628 = pneg %p218
      $region62: #{down_pallas.3} parent=59 // pred_check_branch
        %1630 = sbr.rel (%p1628) target = $region64
      $region63: #{down_pallas.3} parent=59 // pred_region
        %s1631 = smul.u32 4, %s28
        %p1632 = scmp.lt.s32.totalorder %s27, 1
        %s1633 = scalar_select %p1632, %s27, 1
        %p1634 = scmp.lt.s32.totalorder %s1631, 7
        %s1635 = scalar_select %p1634, %s1631, 7
        %p1636 = scmp.lt.s32.totalorder %s29, 0
        %s1637 = scalar_select %p1636, %s29, 0
        %s1638 = sadd.s32 %s1637, %s1635
        %s1639 = smul.addr %s1633, 8
        %s1640 = sadd.s32 %s1638, %s1639
        %s1641 = smul.addr %s1640, 4
        %s1642 = scalar_lea.vmem %s6, %s1641
      $region64: #{down_pallas.3} parent=59 // pred_fallthru
        _
      // Predicated region
      $region65: #{down_pallas.3} parent=59 // pred_check
        %p1643 = pneg %p250
      $region66: #{down_pallas.3} parent=59 // pred_check_branch
        %1645 = sbr.rel (%p1643) target = $region68
      $region67: #{down_pallas.3} parent=59 // pred_region
        %s1646 = smul.u32 %s27, 2
        %s1647 = sadd.s32 %s1646, %s28
        %p1648 = scmp.lt.s32.totalorder %s1647, 3
        %s1649 = scalar_select %p1648, %s1647, 3
        %p1650 = scmp.lt.s32.totalorder %s29, 0
        %s1651 = scalar_select %p1650, %s29, 0
        %s1652 = sadd.s32 %s1651, %s1649
        %s1653 = smul.addr %s1652, 2
        %s1654 = scalar_lea.vmem %s7, %s1653
      $region68: #{down_pallas.3} parent=59 // pred_fallthru
        _
    $region60: #{down_pallas.3} parent=5 // pred_fallthru
      _
  $region6: #{down_pallas.3} parent=0 // loop_footer
    %s18 = sadd.s32 1, %s14
  $region7: #{down_pallas.3} parent=0 // loop_footer_branch
    %13 = sbr.rel target = $region3
  $region8: #{down_pallas.3} parent=0 // loop_exit
    _

</llo_original>
